<compile_context>
chip_gen: v5e
topology: v5e:2x2
jax: 0.10.0
libtpu: 0.0.40
codegen_flags: <defaults>
</compile_context>

<pallas_src>
import jax
import jax.numpy as jnp
from jax import lax
from jax.experimental import pallas as pl
from jax.experimental.pallas import tpu as pltpu


def _make_kernel(num_layers):
    """Fused kernel: Hadamard -> bf16 MLP (f32 accum, ReLU) -> sigmoid head."""

    def kernel(*refs):
        # refs = [xi, xj, w0, b0, ..., w_{L-1}, b_{L-1}, out]
        xi_ref, xj_ref = refs[0], refs[1]
        o_ref = refs[-1]

        # Hadamard product in the storage dtype, rounded to bf16 as the MXU
        # operand (no-op if the inputs are already bf16).
        x = (xi_ref[...] * xj_ref[...]).astype(jnp.bfloat16)

        # Hidden layers: bf16 x @ bf16 W (f32 accumulate) + f32 bias, ReLU.
        # Dropout is identity in eval mode.
        idx = 2
        for _ in range(num_layers - 1):
            w_ref, b_ref = refs[idx], refs[idx + 1]
            idx += 2
            h = jnp.dot(x, w_ref[...], preferred_element_type=jnp.float32)
            h = jnp.maximum(h + b_ref[...], 0.0)
            x = h.astype(jnp.bfloat16)

        # Final layer in natural MXU orientation -> (tile_n, out_channels),
        # then transpose only the tiny logits so the store is the lane-dense
        # (out_channels, tile_n) tile (batch dim on lanes).
        w_ref, b_ref = refs[idx], refs[idx + 1]
        logits = jnp.dot(x, w_ref[...], preferred_element_type=jnp.float32)
        logits = logits + b_ref[...]                  # (tile_n, out_channels)
        logits_t = jnp.transpose(logits, (1, 0))      # (out_channels, tile_n)
        o_ref[...] = (1.0 / (1.0 + jnp.exp(-logits_t))).astype(o_ref.dtype)

    return kernel


def link_predictor_forward(x_i, x_j, params, *, tile_n=2048):
    """Fused LinkPredictor forward.

    x_i, x_j: (N, in_channels); bf16 storage recommended (f32 also supported).
    params:   list of (W, b) with W shaped (in_f, out_f) (transposed vs torch)
              and b shaped (1, out_f), all float32.
    Returns (N, out_channels) float32, matching the PyTorch module (eval mode).
    """
    N, in_channels = x_i.shape
    assert x_j.shape == x_i.shape
    num_layers = len(params)
    out_channels = params[-1][0].shape[1]

    # ---- Row-tile selection -------------------------------------------------
    tile_n = min(tile_n, N)
    # v7x megacore: ensure >= 2 grid steps so both TensorCores get work
    # (no-op on v5e/v6e which have a single TC).
    if N >= 256 and tile_n > (N + 1) // 2:
        tile_n = (N + 1) // 2
    if tile_n != N:
        tile_n = max(128, (tile_n // 128) * 128)   # lane-dense output block
    tile_n = min(tile_n, 8192)                      # VMEM cap (v7x: 64 MiB/TC)
    grid = (pl.cdiv(N, tile_n),)

    # ---- Weights resident in VMEM; MXU operands in bf16 ---------------------
    kernel = _make_kernel(num_layers)
    in_specs = [
        pl.BlockSpec((tile_n, in_channels), lambda i: (i, 0)),
        pl.BlockSpec((tile_n, in_channels), lambda i: (i, 0)),
    ]
    flat_params = []
    for (w, b) in params:
        in_specs.append(pl.BlockSpec(memory_space=pltpu.MemorySpace.VMEM))
        in_specs.append(pl.BlockSpec(memory_space=pltpu.MemorySpace.VMEM))
        flat_params.append(w.astype(jnp.bfloat16))   # MXU operand dtype
        flat_params.append(b.astype(jnp.float32))    # added to f32 accumulator

    out_specs = pl.BlockSpec((out_channels, tile_n), lambda i: (0, i))

    # ---- VMEM budget (explicit, generation-aware) ----------------------------
    padded_in = -(-in_channels // 128) * 128
    widest = max([in_channels] + [w.shape[1] for (w, _) in params[:-1]])
    padded_h = -(-widest // 128) * 128
    padded_oc = -(-out_channels // 8) * 8
    in_itemsize = jnp.dtype(x_i.dtype).itemsize
    est = (2 * 2 * tile_n * padded_in * in_itemsize        # x_i/x_j, double-buffered
           + 2 * padded_oc * tile_n * 4                    # output, double-buffered
           + 6 * tile_n * padded_h * 4                     # live activations
           + sum(int(a.size) * a.dtype.itemsize for a in flat_params)
           + (2 << 20))                                    # headroom
    vmem_limit = int(min(max(2 * est, 32 << 20), 56 << 20))

    # ---- Advisory cost hint for XLA's scheduler ------------------------------
    flops = N * in_channels                                # Hadamard
    d_in = in_channels
    for (_, b) in params:
        d_out = int(b.size)
        flops += 2 * N * d_in * d_out + N * d_out
        d_in = d_out
    bytes_accessed = (
        x_i.size * in_itemsize + x_j.size * in_itemsize
        + sum(int(a.size) * a.dtype.itemsize for a in flat_params)
        + N * out_channels * 4
    )
    cost = pl.CostEstimate(
        flops=int(flops),
        transcendentals=int(N * out_channels),
        bytes_accessed=int(bytes_accessed),
    )

    out_t = pl.pallas_call(
        kernel,
        out_shape=jax.ShapeDtypeStruct((out_channels, N), jnp.float32),
        grid=grid,
        in_specs=in_specs,
        out_specs=out_specs,
        compiler_params=pltpu.CompilerParams(
            dimension_semantics=("parallel",),
            vmem_limit_bytes=vmem_limit,
        ),
        cost_estimate=cost,
    )(x_i, x_j, *flat_params)

    # Back to the module's (N, out_channels) layout (tiny; handled by XLA).
    return out_t.T


def init_params(key, in_channels, hidden_channels, out_channels, num_layers):
    """torch.nn.Linear-style init; W stored (in_f, out_f), b stored (1, out_f)."""
    dims = [in_channels] + [hidden_channels] * (num_layers - 1) + [out_channels]
    params = []
    for l in range(num_layers):
        key, kw, kb = jax.random.split(key, 3)
        fan_in, fan_out = dims[l], dims[l + 1]
        bound = 1.0 / float(fan_in) ** 0.5
        w = jax.random.uniform(kw, (fan_in, fan_out), jnp.float32, -bound, bound)
        b = jax.random.uniform(kb, (1, fan_out), jnp.float32, -bound, bound)
        params.append((w, b))
    return params


def reference_forward(x_i, x_j, params):
    """Pure-JAX reference mirroring the kernel's bf16-operand numerics."""
    x = (x_i * x_j).astype(jnp.bfloat16).astype(jnp.float32)
    for li, (w, b) in enumerate(params):
        wq = w.astype(jnp.bfloat16).astype(jnp.float32)
        h = jnp.dot(x, wq, precision=lax.Precision.HIGHEST) + b
        if li < len(params) - 1:
            x = jnp.maximum(h, 0.0).astype(jnp.bfloat16).astype(jnp.float32)
        else:
            return 1.0 / (1.0 + jnp.exp(-h))


if __name__ == "__main__":
    # Small, module-consistent shapes: N candidate links, 64-d node embeddings.
    N = 2048
    in_channels = 64
    hidden_channels = 64
    out_channels = 1
    num_layers = 3
    # dropout = 0.5  # inference mode -> identity

    key = jax.random.PRNGKey(0)
    key, k_i, k_j, k_p = jax.random.split(key, 4)
    # bf16 input storage is the default fast path (inputs dominate HBM bytes).
    x_i = jax.random.normal(k_i, (N, in_channels), jnp.float32).astype(jnp.bfloat16)
    x_j = jax.random.normal(k_j, (N, in_channels), jnp.float32).astype(jnp.bfloat16)
    params = init_params(k_p, in_channels, hidden_channels, out_channels, num_layers)

    fwd = jax.jit(lambda a, b, p: link_predictor_forward(a, b, p))

    out = jax.block_until_ready(fwd(x_i, x_j, params))
    assert out.shape == (N, out_channels), out.shape
    ref = reference_forward(x_i, x_j, params)
    err = float(jnp.max(jnp.abs(out - ref)))
    assert jnp.allclose(out, ref, atol=2e-3, rtol=2e-3), f"bf16 max abs err {err}"

    # f32-stored inputs also supported (kernel rounds the Hadamard to bf16).
    x_i32 = x_i.astype(jnp.float32)
    x_j32 = x_j.astype(jnp.float32)
    out32 = jax.block_until_ready(fwd(x_i32, x_j32, params))
    ref32 = reference_forward(x_i32, x_j32, params)
    err32 = float(jnp.max(jnp.abs(out32 - ref32)))
    assert jnp.allclose(out32, ref32, atol=2e-3, rtol=2e-3), f"f32 max abs err {err32}"

    print("KERNEL_OK")
</pallas_src>

<mosaic_0001>
module attributes {stable_mosaic.version = 11 : i64} {
  func.func @kernel(%arg0: i32, %arg1: memref<1024x64xbf16, #tpu.memory_space<vmem>>, %arg2: memref<1024x64xbf16, #tpu.memory_space<vmem>>, %arg3: memref<64x64xbf16, #tpu.memory_space<vmem>>, %arg4: memref<1x64xf32, #tpu.memory_space<vmem>>, %arg5: memref<64x64xbf16, #tpu.memory_space<vmem>>, %arg6: memref<1x64xf32, #tpu.memory_space<vmem>>, %arg7: memref<64x1xbf16, #tpu.memory_space<vmem>>, %arg8: memref<1x1xf32, #tpu.memory_space<vmem>>, %arg9: memref<1x1024xf32, #tpu.memory_space<vmem>>) attributes {dimension_semantics = [#tpu.dimension_semantics<parallel>], iteration_bounds = array<i64: 2>, scalar_prefetch = 0 : i64, scratch_operands = 0 : i64, tpu.core_type = #tpu.core_type<tc>, window_params = [{transform_indices = @transform_0, window_bounds = array<i64: 1024, 64>}, {transform_indices = @transform_1, window_bounds = array<i64: 1024, 64>}, {pipeline_mode = #tpu.pipeline_mode<synchronous>, transform_indices = @transform_2, window_bounds = array<i64: 64, 64>}, {pipeline_mode = #tpu.pipeline_mode<synchronous>, transform_indices = @transform_3, window_bounds = array<i64: 1, 64>}, {pipeline_mode = #tpu.pipeline_mode<synchronous>, transform_indices = @transform_4, window_bounds = array<i64: 64, 64>}, {pipeline_mode = #tpu.pipeline_mode<synchronous>, transform_indices = @transform_5, window_bounds = array<i64: 1, 64>}, {pipeline_mode = #tpu.pipeline_mode<synchronous>, transform_indices = @transform_6, window_bounds = array<i64: 64, 1>}, {pipeline_mode = #tpu.pipeline_mode<synchronous>, transform_indices = @transform_7, window_bounds = array<i64: 1, 1>}, {transform_indices = @transform_8, window_bounds = array<i64: 1, 1024>}]} {
    %c0 = arith.constant 0 : index
    %c0_0 = arith.constant 0 : index
    %0 = vector.load %arg1[%c0, %c0_0] : memref<1024x64xbf16, #tpu.memory_space<vmem>>, vector<1024x64xbf16>
    %c0_1 = arith.constant 0 : index
    %c0_2 = arith.constant 0 : index
    %1 = vector.load %arg2[%c0_1, %c0_2] : memref<1024x64xbf16, #tpu.memory_space<vmem>>, vector<1024x64xbf16>
    %2 = arith.mulf %0, %1 : vector<1024x64xbf16>
    %c0_3 = arith.constant 0 : index
    %c0_4 = arith.constant 0 : index
    %3 = vector.load %arg3[%c0_3, %c0_4] : memref<64x64xbf16, #tpu.memory_space<vmem>>, vector<64x64xbf16>
    %cst = arith.constant dense<0.000000e+00> : vector<1024x64xf32>
    %4 = tpu.matmul %2, %3, %cst {dimension_numbers = #tpu.dot_dimension_numbers<[1], [0], [0], [1], [0, 0, 1, 1], [], []>} : vector<1024x64xbf16>, vector<64x64xbf16>, vector<1024x64xf32> -> vector<1024x64xf32>
    %c0_5 = arith.constant 0 : index
    %c0_6 = arith.constant 0 : index
    %5 = vector.load %arg4[%c0_5, %c0_6] : memref<1x64xf32, #tpu.memory_space<vmem>>, vector<1x64xf32>
    %6 = vector.broadcast %5 : vector<1x64xf32> to vector<1024x64xf32>
    %7 = arith.addf %4, %6 : vector<1024x64xf32>
    %cst_7 = arith.constant 0.000000e+00 : f32
    %8 = vector.broadcast %cst_7 : f32 to vector<1024x64xf32>
    %9 = arith.maximumf %7, %8 : vector<1024x64xf32>
    %10 = arith.truncf %9 : vector<1024x64xf32> to vector<1024x64xbf16>
    %c0_8 = arith.constant 0 : index
    %c0_9 = arith.constant 0 : index
    %11 = vector.load %arg5[%c0_8, %c0_9] : memref<64x64xbf16, #tpu.memory_space<vmem>>, vector<64x64xbf16>
    %cst_10 = arith.constant dense<0.000000e+00> : vector<1024x64xf32>
    %12 = tpu.matmul %10, %11, %cst_10 {dimension_numbers = #tpu.dot_dimension_numbers<[1], [0], [0], [1], [0, 0, 1, 1], [], []>} : vector<1024x64xbf16>, vector<64x64xbf16>, vector<1024x64xf32> -> vector<1024x64xf32>
    %c0_11 = arith.constant 0 : index
    %c0_12 = arith.constant 0 : index
    %13 = vector.load %arg6[%c0_11, %c0_12] : memref<1x64xf32, #tpu.memory_space<vmem>>, vector<1x64xf32>
    %14 = vector.broadcast %13 : vector<1x64xf32> to vector<1024x64xf32>
    %15 = arith.addf %12, %14 : vector<1024x64xf32>
    %cst_13 = arith.constant 0.000000e+00 : f32
    %16 = vector.broadcast %cst_13 : f32 to vector<1024x64xf32>
    %17 = arith.maximumf %15, %16 : vector<1024x64xf32>
    %18 = arith.truncf %17 : vector<1024x64xf32> to vector<1024x64xbf16>
    %c0_14 = arith.constant 0 : index
    %c0_15 = arith.constant 0 : index
    %19 = vector.load %arg7[%c0_14, %c0_15] : memref<64x1xbf16, #tpu.memory_space<vmem>>, vector<64x1xbf16>
    %cst_16 = arith.constant dense<0.000000e+00> : vector<1024x1xf32>
    %20 = tpu.matmul %18, %19, %cst_16 {dimension_numbers = #tpu.dot_dimension_numbers<[1], [0], [0], [1], [0, 0, 1, 1], [], []>} : vector<1024x64xbf16>, vector<64x1xbf16>, vector<1024x1xf32> -> vector<1024x1xf32>
    %c0_17 = arith.constant 0 : index
    %c0_18 = arith.constant 0 : index
    %21 = vector.load %arg8[%c0_17, %c0_18] : memref<1x1xf32, #tpu.memory_space<vmem>>, vector<1x1xf32>
    %22 = vector.broadcast %21 : vector<1x1xf32> to vector<1024x1xf32>
    %23 = arith.addf %20, %22 : vector<1024x1xf32>
    %24 = tpu.transpose %23, [1, 0] : vector<1024x1xf32> -> vector<1x1024xf32>
    %cst_19 = arith.constant 0.000000e+00 : f32
    %25 = vector.broadcast %cst_19 : f32 to vector<1x1024xf32>
    %26 = arith.subf %25, %24 : vector<1x1024xf32>
    %27 = math.exp %26 : vector<1x1024xf32>
    %cst_20 = arith.constant 1.000000e+00 : f32
    %28 = vector.broadcast %cst_20 : f32 to vector<1x1024xf32>
    %29 = arith.addf %28, %27 : vector<1x1024xf32>
    %cst_21 = arith.constant 1.000000e+00 : f32
    %30 = vector.broadcast %cst_21 : f32 to vector<1x1024xf32>
    %31 = arith.divf %30, %29 : vector<1x1024xf32>
    %c0_22 = arith.constant 0 : index
    %c0_23 = arith.constant 0 : index
    %32 = vector.load %arg9[%c0_22, %c0_23] : memref<1x1024xf32, #tpu.memory_space<vmem>>, vector<1x1024xf32>
    tpu.vector_store %arg9[%c0_22, %c0_23], %31 {strides = array<i32>} : memref<1x1024xf32, #tpu.memory_space<vmem>>, vector<1x1024xf32>,
    return
  }
  func.func @transform_0(%arg0: i32) -> (i32, i32) {
    %c0_i32 = arith.constant 0 : i32
    %c0_i32_0 = arith.constant 0 : i32
    return %arg0, %c0_i32 : i32, i32
  }
  func.func @transform_1(%arg0: i32) -> (i32, i32) {
    %c0_i32 = arith.constant 0 : i32
    %c0_i32_0 = arith.constant 0 : i32
    return %arg0, %c0_i32 : i32, i32
  }
  func.func @transform_2(%arg0: i32) -> (i32, i32) {
    %c0_i32 = arith.constant 0 : i32
    %c0_i32_0 = arith.constant 0 : i32
    %c0_i32_1 = arith.constant 0 : i32
    return %c0_i32, %c0_i32_0 : i32, i32
  }
  func.func @transform_3(%arg0: i32) -> (i32, i32) {
    %c0_i32 = arith.constant 0 : i32
    %c0_i32_0 = arith.constant 0 : i32
    %c0_i32_1 = arith.constant 0 : i32
    return %c0_i32, %c0_i32_0 : i32, i32
  }
  func.func @transform_4(%arg0: i32) -> (i32, i32) {
    %c0_i32 = arith.constant 0 : i32
    %c0_i32_0 = arith.constant 0 : i32
    %c0_i32_1 = arith.constant 0 : i32
    return %c0_i32, %c0_i32_0 : i32, i32
  }
  func.func @transform_5(%arg0: i32) -> (i32, i32) {
    %c0_i32 = arith.constant 0 : i32
    %c0_i32_0 = arith.constant 0 : i32
    %c0_i32_1 = arith.constant 0 : i32
    return %c0_i32, %c0_i32_0 : i32, i32
  }
  func.func @transform_6(%arg0: i32) -> (i32, i32) {
    %c0_i32 = arith.constant 0 : i32
    %c0_i32_0 = arith.constant 0 : i32
    %c0_i32_1 = arith.constant 0 : i32
    return %c0_i32, %c0_i32_0 : i32, i32
  }
  func.func @transform_7(%arg0: i32) -> (i32, i32) {
    %c0_i32 = arith.constant 0 : i32
    %c0_i32_0 = arith.constant 0 : i32
    %c0_i32_1 = arith.constant 0 : i32
    return %c0_i32, %c0_i32_0 : i32, i32
  }
  func.func @transform_8(%arg0: i32) -> (i32, i32) {
    %c0_i32 = arith.constant 0 : i32
    %c0_i32_0 = arith.constant 0 : i32
    return %c0_i32, %arg0 : i32, i32
  }
}

</mosaic_0001>

<llo_original>
// kernel: _lambda_.1
$region0: #{_lambda_.1}
  #allocation0 [shape = 'u32[]', space=smem, size = 0x4, offset = 0x4, fixed_abs, tag = 'smem constant byte address 0x4 - core index']
  #allocation1 [shape = 'u32[72,128]{1,0:T(1,128)}', space=vmem, size = 0x9000, scoped, tag = 'internal scratch']
  #allocation2 [shape = 'f32[1,1]{1,0:T(1,128)S(1)}', space=vmem, size = 0x200, scoped, tag = 'scoped memory for _lambda_.1']
  %s0 = inlined_call_operand.vmem [shape: bf16[2048,64], index: 0, kind: input, shape index: {}]
  %s1 = inlined_call_operand.vmem [shape: bf16[2048,64], index: 1, kind: input, shape index: {}]
  %s2 = inlined_call_operand.vmem [shape: bf16[64,64], index: 2, kind: input, shape index: {}]
  %s3 = inlined_call_operand.vmem [shape: f32[1,64], index: 3, kind: input, shape index: {}]
  %s4 = inlined_call_operand.vmem [shape: bf16[64,64], index: 4, kind: input, shape index: {}]
  %s5 = inlined_call_operand.vmem [shape: f32[1,64], index: 5, kind: input, shape index: {}]
  %s6 = inlined_call_operand.vmem [shape: bf16[64,1], index: 6, kind: input, shape index: {}]
  %s7 = inlined_call_operand.<no memory space> [shape: f32[1,1], index: 7, kind: input, shape index: {}]
  %s8 = inlined_call_operand.hbm [shape: f32[1,2048], index: 8, kind: output, shape index: {}]
  %s9 = sld [smem:[#allocation0]]
  $region65: #{_lambda_.1} parent=0
    _
  %s11 = ssub.s32 1, %s9
  %s12 = scalar_select 0, %s11, %s9
  %v13 = vstv %s7
  %14 = vst [vmem:[#allocation2] sm:$0x1] %v13
  $region1: #{_lambda_.1} parent=0
    #allocation3 [shape = 'u8[8192]{0}', space=vmem, size = 0x2000, scoped, tag = 'output window, operand 0']
    #allocation4 [shape = 's32[2]{0}', space=sflag, size = 0x8, scoped, tag = 'scoped memory for _lambda_.1']
    %15 = vsyncpa [#allocation4], 0
    %s16 = scalar_lea.sflag [#allocation4], 1
    %17 = vsyncpa %s16, 0
    loop: start=0, step=1, limit=4
    $region2: #{_lambda_.1} parent=1 // loop_pre_header
      _
    $region3: #{_lambda_.1} parent=1 // loop_header
      %s19 = sphi 0, %s23
      %p20 = scmp.ge.s32.totalorder %s19, 4
      %s29 = sphi 0, %s31
      %s32 = sphi 0, %s29
      %s33 = sphi 0, %s32
      %s49 = sphi 0, %s33
      %s55 = sphi 0, %s57
      %s58 = sphi 0, %s55
      %s59 = sphi 0, %s58
      %s75 = sphi 0, %s59
      %s79 = sphi 0, %s79
      %s81 = sphi 0, %s79
      %s82 = sphi 0, %s81
      %s96 = sphi 0, %s82
      %s100 = sphi 0, %s100
      %s102 = sphi 0, %s100
      %s103 = sphi 0, %s102
      %s117 = sphi 0, %s103
      %s121 = sphi 0, %s121
      %s123 = sphi 0, %s121
      %s124 = sphi 0, %s123
      %s138 = sphi 0, %s124
      %s142 = sphi 0, %s142
      %s144 = sphi 0, %s142
      %s145 = sphi 0, %s144
      %s159 = sphi 0, %s145
      %s163 = sphi 0, %s163
      %s165 = sphi 0, %s163
      %s166 = sphi 0, %s165
      %s180 = sphi 0, %s166
      %s184 = sphi 0, %s184
      %s186 = sphi 0, %s184
      %s187 = sphi 0, %s186
      %s201 = sphi 0, %s187
      %s207 = sphi 0, %s209
      %s210 = sphi 0, %s207
      %s211 = sphi 0, %s210
      %s227 = sphi 0, %s211
    $region4: #{_lambda_.1} parent=1 // loop_header_branch
      %22 = sbr.rel (%p20) target = $region8
    $region5: #{_lambda_.1} parent=1 // loop_body
      %s24 = ssub.s32 %s19, 1
      %s25 = ssub.s32 %s19, 2
      %s26 = sadd.s32 %s19, 1
      %s27 = ssub.s32 %s19, %s26
      %p28 = scmp.eq.s32.totalorder %s27, 0
      %s30 = sadd.s32 %s29, 1
      %s31 = scalar_select %p28, %s29, %s30
      %p34 = pneg %p28
      %p35 = scmp.eq.s32.totalorder %s19, 1
      %p36 = por %p34, %p35
      %p37 = scmp.ne.s32.totalorder %s29, %s32
      %p38 = scmp.eq.s32.totalorder %s19, 0
      %p39 = por %p37, %p38
      %p40 = scmp.ne.s32.totalorder %s29, %s32
      %p41 = scmp.eq.s32.totalorder %s24, 1
      %p42 = por %p40, %p41
      %p43 = scmp.ne.s32.totalorder %s32, %s33
      %p44 = scmp.eq.s32.totalorder %s24, 0
      %p45 = por %p43, %p44
      %p46 = scmp.ne.s32.totalorder %s32, %s33
      %p47 = scmp.eq.s32.totalorder %s25, 1
      %p48 = por %p46, %p47
      %p50 = scmp.ne.s32.totalorder %s33, %s49
      %p51 = scmp.eq.s32.totalorder %s25, 0
      %p52 = por %p50, %p51
      %s53 = ssub.s32 %s19, %s26
      %p54 = scmp.eq.s32.totalorder %s53, 0
      %s56 = sadd.s32 %s55, 1
      %s57 = scalar_select %p54, %s55, %s56
      %p60 = pneg %p54
      %p61 = scmp.eq.s32.totalorder %s19, 1
      %p62 = por %p60, %p61
      %p63 = scmp.ne.s32.totalorder %s55, %s58
      %p64 = scmp.eq.s32.totalorder %s19, 0
      %p65 = por %p63, %p64
      %p66 = scmp.ne.s32.totalorder %s55, %s58
      %p67 = scmp.eq.s32.totalorder %s24, 1
      %p68 = por %p66, %p67
      %p69 = scmp.ne.s32.totalorder %s58, %s59
      %p70 = scmp.eq.s32.totalorder %s24, 0
      %p71 = por %p69, %p70
      %p72 = scmp.ne.s32.totalorder %s58, %s59
      %p73 = scmp.eq.s32.totalorder %s25, 1
      %p74 = por %p72, %p73
      %p76 = scmp.ne.s32.totalorder %s59, %s75
      %p77 = scmp.eq.s32.totalorder %s25, 0
      %p78 = por %p76, %p77
      %s80 = sadd.s32 %s79, 1
      %p83 = scmp.eq.s32.totalorder %s19, 1
      %p84 = scmp.ne.s32.totalorder %s79, %s81
      %p85 = scmp.eq.s32.totalorder %s19, 0
      %p86 = por %p84, %p85
      %p87 = scmp.ne.s32.totalorder %s79, %s81
      %p88 = scmp.eq.s32.totalorder %s24, 1
      %p89 = por %p87, %p88
      %p90 = scmp.ne.s32.totalorder %s81, %s82
      %p91 = scmp.eq.s32.totalorder %s24, 0
      %p92 = por %p90, %p91
      %p93 = scmp.ne.s32.totalorder %s81, %s82
      %p94 = scmp.eq.s32.totalorder %s25, 1
      %p95 = por %p93, %p94
      %p97 = scmp.ne.s32.totalorder %s82, %s96
      %p98 = scmp.eq.s32.totalorder %s25, 0
      %p99 = por %p97, %p98
      %s101 = sadd.s32 %s100, 1
      %p104 = scmp.eq.s32.totalorder %s19, 1
      %p105 = scmp.ne.s32.totalorder %s100, %s102
      %p106 = scmp.eq.s32.totalorder %s19, 0
      %p107 = por %p105, %p106
      %p108 = scmp.ne.s32.totalorder %s100, %s102
      %p109 = scmp.eq.s32.totalorder %s24, 1
      %p110 = por %p108, %p109
      %p111 = scmp.ne.s32.totalorder %s102, %s103
      %p112 = scmp.eq.s32.totalorder %s24, 0
      %p113 = por %p111, %p112
      %p114 = scmp.ne.s32.totalorder %s102, %s103
      %p115 = scmp.eq.s32.totalorder %s25, 1
      %p116 = por %p114, %p115
      %p118 = scmp.ne.s32.totalorder %s103, %s117
      %p119 = scmp.eq.s32.totalorder %s25, 0
      %p120 = por %p118, %p119
      %s122 = sadd.s32 %s121, 1
      %p125 = scmp.eq.s32.totalorder %s19, 1
      %p126 = scmp.ne.s32.totalorder %s121, %s123
      %p127 = scmp.eq.s32.totalorder %s19, 0
      %p128 = por %p126, %p127
      %p129 = scmp.ne.s32.totalorder %s121, %s123
      %p130 = scmp.eq.s32.totalorder %s24, 1
      %p131 = por %p129, %p130
      %p132 = scmp.ne.s32.totalorder %s123, %s124
      %p133 = scmp.eq.s32.totalorder %s24, 0
      %p134 = por %p132, %p133
      %p135 = scmp.ne.s32.totalorder %s123, %s124
      %p136 = scmp.eq.s32.totalorder %s25, 1
      %p137 = por %p135, %p136
      %p139 = scmp.ne.s32.totalorder %s124, %s138
      %p140 = scmp.eq.s32.totalorder %s25, 0
      %p141 = por %p139, %p140
      %s143 = sadd.s32 %s142, 1
      %p146 = scmp.eq.s32.totalorder %s19, 1
      %p147 = scmp.ne.s32.totalorder %s142, %s144
      %p148 = scmp.eq.s32.totalorder %s19, 0
      %p149 = por %p147, %p148
      %p150 = scmp.ne.s32.totalorder %s142, %s144
      %p151 = scmp.eq.s32.totalorder %s24, 1
      %p152 = por %p150, %p151
      %p153 = scmp.ne.s32.totalorder %s144, %s145
      %p154 = scmp.eq.s32.totalorder %s24, 0
      %p155 = por %p153, %p154
      %p156 = scmp.ne.s32.totalorder %s144, %s145
      %p157 = scmp.eq.s32.totalorder %s25, 1
      %p158 = por %p156, %p157
      %p160 = scmp.ne.s32.totalorder %s145, %s159
      %p161 = scmp.eq.s32.totalorder %s25, 0
      %p162 = por %p160, %p161
      %s164 = sadd.s32 %s163, 1
      %p167 = scmp.eq.s32.totalorder %s19, 1
      %p168 = scmp.ne.s32.totalorder %s163, %s165
      %p169 = scmp.eq.s32.totalorder %s19, 0
      %p170 = por %p168, %p169
      %p171 = scmp.ne.s32.totalorder %s163, %s165
      %p172 = scmp.eq.s32.totalorder %s24, 1
      %p173 = por %p171, %p172
      %p174 = scmp.ne.s32.totalorder %s165, %s166
      %p175 = scmp.eq.s32.totalorder %s24, 0
      %p176 = por %p174, %p175
      %p177 = scmp.ne.s32.totalorder %s165, %s166
      %p178 = scmp.eq.s32.totalorder %s25, 1
      %p179 = por %p177, %p178
      %p181 = scmp.ne.s32.totalorder %s166, %s180
      %p182 = scmp.eq.s32.totalorder %s25, 0
      %p183 = por %p181, %p182
      %s185 = sadd.s32 %s184, 1
      %p188 = scmp.eq.s32.totalorder %s19, 1
      %p189 = scmp.ne.s32.totalorder %s184, %s186
      %p190 = scmp.eq.s32.totalorder %s19, 0
      %p191 = por %p189, %p190
      %p192 = scmp.ne.s32.totalorder %s184, %s186
      %p193 = scmp.eq.s32.totalorder %s24, 1
      %p194 = por %p192, %p193
      %p195 = scmp.ne.s32.totalorder %s186, %s187
      %p196 = scmp.eq.s32.totalorder %s24, 0
      %p197 = por %p195, %p196
      %p198 = scmp.ne.s32.totalorder %s186, %s187
      %p199 = scmp.eq.s32.totalorder %s25, 1
      %p200 = por %p198, %p199
      %p202 = scmp.ne.s32.totalorder %s187, %s201
      %p203 = scmp.eq.s32.totalorder %s25, 0
      %p204 = por %p202, %p203
      %s205 = ssub.s32 %s19, %s26
      %p206 = scmp.eq.s32.totalorder %s205, 0
      %s208 = sadd.s32 %s207, 1
      %s209 = scalar_select %p206, %s207, %s208
      %p212 = pneg %p206
      %p213 = scmp.eq.s32.totalorder %s19, 1
      %p214 = por %p212, %p213
      %p215 = scmp.ne.s32.totalorder %s207, %s210
      %p216 = scmp.eq.s32.totalorder %s19, 0
      %p217 = por %p215, %p216
      %p218 = scmp.ne.s32.totalorder %s207, %s210
      %p219 = scmp.eq.s32.totalorder %s24, 1
      %p220 = por %p218, %p219
      %p221 = scmp.ne.s32.totalorder %s210, %s211
      %p222 = scmp.eq.s32.totalorder %s24, 0
      %p223 = por %p221, %p222
      %p224 = scmp.ne.s32.totalorder %s210, %s211
      %p225 = scmp.eq.s32.totalorder %s25, 1
      %p226 = por %p224, %p225
      %p228 = scmp.ne.s32.totalorder %s211, %s227
      %p229 = scmp.eq.s32.totalorder %s25, 0
      %p230 = por %p228, %p229
      %p231 = scmp.le.s32.totalorder 1, %s19
      %p232 = scmp.lt.s32.totalorder %s19, 3
      %p233 = pnand %p231, %p232
      %p234 = pneg %p233
      // Predicated region
      $region9: #{_lambda_.1} parent=5 // pred_check
        _
      $region10: #{_lambda_.1} parent=5 // pred_check_branch
        %236 = sbr.rel (%p233) target = $region12
      $region11: #{_lambda_.1} parent=5 // pred_region
        %s237 = ssub.s32 %s19, 1
        // Predicated region
        $region13: #{_lambda_.1} parent=11 // pred_check
          %p238 = pneg %p92
        $region14: #{_lambda_.1} parent=11 // pred_check_branch
          %240 = sbr.rel (%p238) target = $region16
        $region15: #{_lambda_.1} parent=11 // pred_region
          _
        $region16: #{_lambda_.1} parent=11 // pred_fallthru
          _
        // Predicated region
        $region17: #{_lambda_.1} parent=11 // pred_check
          %p241 = pneg %p113
        $region18: #{_lambda_.1} parent=11 // pred_check_branch
          %243 = sbr.rel (%p241) target = $region20
        $region19: #{_lambda_.1} parent=11 // pred_region
          _
        $region20: #{_lambda_.1} parent=11 // pred_fallthru
          _
        // Predicated region
        $region21: #{_lambda_.1} parent=11 // pred_check
          %p244 = pneg %p134
        $region22: #{_lambda_.1} parent=11 // pred_check_branch
          %246 = sbr.rel (%p244) target = $region24
        $region23: #{_lambda_.1} parent=11 // pred_region
          _
        $region24: #{_lambda_.1} parent=11 // pred_fallthru
          _
        // Predicated region
        $region25: #{_lambda_.1} parent=11 // pred_check
          %p247 = pneg %p155
        $region26: #{_lambda_.1} parent=11 // pred_check_branch
          %249 = sbr.rel (%p247) target = $region28
        $region27: #{_lambda_.1} parent=11 // pred_region
          _
        $region28: #{_lambda_.1} parent=11 // pred_fallthru
          _
        // Predicated region
        $region29: #{_lambda_.1} parent=11 // pred_check
          %p250 = pneg %p176
        $region30: #{_lambda_.1} parent=11 // pred_check_branch
          %252 = sbr.rel (%p250) target = $region32
        $region31: #{_lambda_.1} parent=11 // pred_region
          _
        $region32: #{_lambda_.1} parent=11 // pred_fallthru
          _
        // Predicated region
        $region33: #{_lambda_.1} parent=11 // pred_check
          %p253 = pneg %p197
        $region34: #{_lambda_.1} parent=11 // pred_check_branch
          %255 = sbr.rel (%p253) target = $region36
        $region35: #{_lambda_.1} parent=11 // pred_region
          _
        $region36: #{_lambda_.1} parent=11 // pred_fallthru
          _
      $region12: #{_lambda_.1} parent=5 // pred_fallthru
        _
      %p256 = scmp.lt.s32.totalorder %s19, 2
      // Predicated region
      $region37: #{_lambda_.1} parent=5 // pred_check
        %p257 = pneg %p256
      $region38: #{_lambda_.1} parent=5 // pred_check_branch
        %259 = sbr.rel (%p257) target = $region40
      $region39: #{_lambda_.1} parent=5 // pred_region
        // Predicated region
        $region41: #{_lambda_.1} parent=39 // pred_check
          %p260 = pneg %p39
        $region42: #{_lambda_.1} parent=39 // pred_check_branch
          %262 = sbr.rel (%p260) target = $region44
        $region43: #{_lambda_.1} parent=39 // pred_region
          %s263 = smul.u32 128, %s19
          %p264 = scmp.lt.s32.totalorder %s263, 255
          %s265 = scalar_select %p264, %s263, 255
          %s266 = smul.addr %s265, 4
          %s267 = scalar_lea.vmem %s0, %s266
          %s268 = smul.u32 128, %s19
        $region44: #{_lambda_.1} parent=39 // pred_fallthru
          _
        // Predicated region
        $region45: #{_lambda_.1} parent=39 // pred_check
          %p269 = pneg %p65
        $region46: #{_lambda_.1} parent=39 // pred_check_branch
          %271 = sbr.rel (%p269) target = $region48
        $region47: #{_lambda_.1} parent=39 // pred_region
          %s272 = smul.u32 128, %s19
          %p273 = scmp.lt.s32.totalorder %s272, 255
          %s274 = scalar_select %p273, %s272, 255
          %s275 = smul.addr %s274, 4
          %s276 = scalar_lea.vmem %s1, %s275
          %s277 = smul.u32 128, %s19
        $region48: #{_lambda_.1} parent=39 // pred_fallthru
          _
      $region40: #{_lambda_.1} parent=5 // pred_fallthru
        _
      %p278 = scmp.le.s32.totalorder 1, %s19
      %p279 = scmp.lt.s32.totalorder %s19, 3
      %p280 = pnand %p278, %p279
      %p281 = pneg %p280
      // Predicated region
      $region49: #{_lambda_.1} parent=5 // pred_check
        _
      $region50: #{_lambda_.1} parent=5 // pred_check_branch
        %283 = sbr.rel (%p280) target = $region52
      $region51: #{_lambda_.1} parent=5 // pred_region
        %s284 = ssub.s32 %s19, 1
        %s285 = smul.u32 128, %s24
        %p286 = scmp.lt.s32.totalorder %s285, 255
        %s287 = scalar_select %p286, %s285, 255
        %s288 = smul.addr %s287, 4
        %s289 = scalar_lea.vmem %s0, %s288
        %p290 = pneg %p45
        %p291 = pneg %p42
        %s292 = smul.u32 128, %s24
        %p293 = scmp.lt.s32.totalorder %s292, 255
        %s294 = scalar_select %p293, %s292, 255
        %s295 = smul.addr %s294, 4
        %s296 = scalar_lea.vmem %s1, %s295
        %p297 = pneg %p71
        %p298 = pneg %p68
        %p299 = pneg %p92
        %p300 = pneg %p89
        %p301 = pneg %p113
        %p302 = pneg %p110
        %p303 = pneg %p134
        %p304 = pneg %p131
        %p305 = pneg %p155
        %p306 = pneg %p152
        %p307 = pneg %p176
        %p308 = pneg %p173
        %p309 = pneg %p197
        %p310 = pneg %p194
        %p311 = pneg %p223
        %p312 = pneg %p220
        %s313 = sand.u32 %s210, 1
        %s314 = scalar_lea.sflag [#allocation4], %s313
        %s315 = sand.u32 %s210, 1
        %s316 = smul.addr %s315, 8
        %s317 = scalar_lea.vmem [#allocation3], %s316
        %s318 = smul.u32 128, %s24
        %p319 = scmp.lt.s32.totalorder %s318, 255
        %s320 = scalar_select %p319, %s318, 255
        %s321 = smul.addr %s320, 4
        %s322 = scalar_lea.vmem %s0, %s321
        %s323 = smul.u32 128, %s24
        %s324 = smul.u32 128, %s24
        %p325 = scmp.lt.s32.totalorder %s324, 255
        %s326 = scalar_select %p325, %s324, 255
        %s327 = smul.addr %s326, 4
        %s328 = scalar_lea.vmem %s1, %s327
        %s329 = smul.u32 128, %s24
        %s330 = smul.u32 8, %s24
        %v332 = vld [vmem:[%s322] sm:$0xf]
        %v333 = vld [vmem:[%s322 + $0x4] sm:$0xf]
        %v334 = vld [vmem:[%s322 + $0x8] sm:$0xf]
        %v335 = vld [vmem:[%s322 + $0xc] sm:$0xf]
        %v336 = vld [vmem:[%s322 + $0x10] sm:$0xf]
        %v337 = vld [vmem:[%s322 + $0x14] sm:$0xf]
        %v338 = vld [vmem:[%s322 + $0x18] sm:$0xf]
        %v339 = vld [vmem:[%s322 + $0x1c] sm:$0xf]
        %v340 = vld [vmem:[%s322 + $0x20] sm:$0xf]
        %v341 = vld [vmem:[%s322 + $0x24] sm:$0xf]
        %v342 = vld [vmem:[%s322 + $0x28] sm:$0xf]
        %v343 = vld [vmem:[%s322 + $0x2c] sm:$0xf]
        %v344 = vld [vmem:[%s322 + $0x30] sm:$0xf]
        %v345 = vld [vmem:[%s322 + $0x34] sm:$0xf]
        %v346 = vld [vmem:[%s322 + $0x38] sm:$0xf]
        %v347 = vld [vmem:[%s322 + $0x3c] sm:$0xf]
        %v348 = vld [vmem:[%s322 + $0x40] sm:$0xf]
        %v349 = vld [vmem:[%s322 + $0x44] sm:$0xf]
        %v350 = vld [vmem:[%s322 + $0x48] sm:$0xf]
        %v351 = vld [vmem:[%s322 + $0x4c] sm:$0xf]
        %v352 = vld [vmem:[%s322 + $0x50] sm:$0xf]
        %v353 = vld [vmem:[%s322 + $0x54] sm:$0xf]
        %v354 = vld [vmem:[%s322 + $0x58] sm:$0xf]
        %v355 = vld [vmem:[%s322 + $0x5c] sm:$0xf]
        %v356 = vld [vmem:[%s322 + $0x60] sm:$0xf]
        %v357 = vld [vmem:[%s322 + $0x64] sm:$0xf]
        %v358 = vld [vmem:[%s322 + $0x68] sm:$0xf]
        %v359 = vld [vmem:[%s322 + $0x6c] sm:$0xf]
        %v360 = vld [vmem:[%s322 + $0x70] sm:$0xf]
        %v361 = vld [vmem:[%s322 + $0x74] sm:$0xf]
        %v362 = vld [vmem:[%s322 + $0x78] sm:$0xf]
        %v363 = vld [vmem:[%s322 + $0x7c] sm:$0xf]
        %v364 = vld [vmem:[%s322 + $0x80] sm:$0xf]
        %v365 = vld [vmem:[%s322 + $0x84] sm:$0xf]
        %v366 = vld [vmem:[%s322 + $0x88] sm:$0xf]
        %v367 = vld [vmem:[%s322 + $0x8c] sm:$0xf]
        %v368 = vld [vmem:[%s322 + $0x90] sm:$0xf]
        %v369 = vld [vmem:[%s322 + $0x94] sm:$0xf]
        %v370 = vld [vmem:[%s322 + $0x98] sm:$0xf]
        %v371 = vld [vmem:[%s322 + $0x9c] sm:$0xf]
        %v372 = vld [vmem:[%s322 + $0xa0] sm:$0xf]
        %v373 = vld [vmem:[%s322 + $0xa4] sm:$0xf]
        %v374 = vld [vmem:[%s322 + $0xa8] sm:$0xf]
        %v375 = vld [vmem:[%s322 + $0xac] sm:$0xf]
        %v376 = vld [vmem:[%s322 + $0xb0] sm:$0xf]
        %v377 = vld [vmem:[%s322 + $0xb4] sm:$0xf]
        %v378 = vld [vmem:[%s322 + $0xb8] sm:$0xf]
        %v379 = vld [vmem:[%s322 + $0xbc] sm:$0xf]
        %v380 = vld [vmem:[%s322 + $0xc0] sm:$0xf]
        %v381 = vld [vmem:[%s322 + $0xc4] sm:$0xf]
        %v382 = vld [vmem:[%s322 + $0xc8] sm:$0xf]
        %v383 = vld [vmem:[%s322 + $0xcc] sm:$0xf]
        %v384 = vld [vmem:[%s322 + $0xd0] sm:$0xf]
        %v385 = vld [vmem:[%s322 + $0xd4] sm:$0xf]
        %v386 = vld [vmem:[%s322 + $0xd8] sm:$0xf]
        %v387 = vld [vmem:[%s322 + $0xdc] sm:$0xf]
        %v388 = vld [vmem:[%s322 + $0xe0] sm:$0xf]
        %v389 = vld [vmem:[%s322 + $0xe4] sm:$0xf]
        %v390 = vld [vmem:[%s322 + $0xe8] sm:$0xf]
        %v391 = vld [vmem:[%s322 + $0xec] sm:$0xf]
        %v392 = vld [vmem:[%s322 + $0xf0] sm:$0xf]
        %v393 = vld [vmem:[%s322 + $0xf4] sm:$0xf]
        %v394 = vld [vmem:[%s322 + $0xf8] sm:$0xf]
        %v395 = vld [vmem:[%s322 + $0xfc] sm:$0xf]
        %v396 = vld [vmem:[%s322 + $0x100] sm:$0xf]
        %v397 = vld [vmem:[%s322 + $0x104] sm:$0xf]
        %v398 = vld [vmem:[%s322 + $0x108] sm:$0xf]
        %v399 = vld [vmem:[%s322 + $0x10c] sm:$0xf]
        %v400 = vld [vmem:[%s322 + $0x110] sm:$0xf]
        %v401 = vld [vmem:[%s322 + $0x114] sm:$0xf]
        %v402 = vld [vmem:[%s322 + $0x118] sm:$0xf]
        %v403 = vld [vmem:[%s322 + $0x11c] sm:$0xf]
        %v404 = vld [vmem:[%s322 + $0x120] sm:$0xf]
        %v405 = vld [vmem:[%s322 + $0x124] sm:$0xf]
        %v406 = vld [vmem:[%s322 + $0x128] sm:$0xf]
        %v407 = vld [vmem:[%s322 + $0x12c] sm:$0xf]
        %v408 = vld [vmem:[%s322 + $0x130] sm:$0xf]
        %v409 = vld [vmem:[%s322 + $0x134] sm:$0xf]
        %v410 = vld [vmem:[%s322 + $0x138] sm:$0xf]
        %v411 = vld [vmem:[%s322 + $0x13c] sm:$0xf]
        %v412 = vld [vmem:[%s322 + $0x140] sm:$0xf]
        %v413 = vld [vmem:[%s322 + $0x144] sm:$0xf]
        %v414 = vld [vmem:[%s322 + $0x148] sm:$0xf]
        %v415 = vld [vmem:[%s322 + $0x14c] sm:$0xf]
        %v416 = vld [vmem:[%s322 + $0x150] sm:$0xf]
        %v417 = vld [vmem:[%s322 + $0x154] sm:$0xf]
        %v418 = vld [vmem:[%s322 + $0x158] sm:$0xf]
        %v419 = vld [vmem:[%s322 + $0x15c] sm:$0xf]
        %v420 = vld [vmem:[%s322 + $0x160] sm:$0xf]
        %v421 = vld [vmem:[%s322 + $0x164] sm:$0xf]
        %v422 = vld [vmem:[%s322 + $0x168] sm:$0xf]
        %v423 = vld [vmem:[%s322 + $0x16c] sm:$0xf]
        %v424 = vld [vmem:[%s322 + $0x170] sm:$0xf]
        %v425 = vld [vmem:[%s322 + $0x174] sm:$0xf]
        %v426 = vld [vmem:[%s322 + $0x178] sm:$0xf]
        %v427 = vld [vmem:[%s322 + $0x17c] sm:$0xf]
        %v428 = vld [vmem:[%s322 + $0x180] sm:$0xf]
        %v429 = vld [vmem:[%s322 + $0x184] sm:$0xf]
        %v430 = vld [vmem:[%s322 + $0x188] sm:$0xf]
        %v431 = vld [vmem:[%s322 + $0x18c] sm:$0xf]
        %v432 = vld [vmem:[%s322 + $0x190] sm:$0xf]
        %v433 = vld [vmem:[%s322 + $0x194] sm:$0xf]
        %v434 = vld [vmem:[%s322 + $0x198] sm:$0xf]
        %v435 = vld [vmem:[%s322 + $0x19c] sm:$0xf]
        %v436 = vld [vmem:[%s322 + $0x1a0] sm:$0xf]
        %v437 = vld [vmem:[%s322 + $0x1a4] sm:$0xf]
        %v438 = vld [vmem:[%s322 + $0x1a8] sm:$0xf]
        %v439 = vld [vmem:[%s322 + $0x1ac] sm:$0xf]
        %v440 = vld [vmem:[%s322 + $0x1b0] sm:$0xf]
        %v441 = vld [vmem:[%s322 + $0x1b4] sm:$0xf]
        %v442 = vld [vmem:[%s322 + $0x1b8] sm:$0xf]
        %v443 = vld [vmem:[%s322 + $0x1bc] sm:$0xf]
        %v444 = vld [vmem:[%s322 + $0x1c0] sm:$0xf]
        %v445 = vld [vmem:[%s322 + $0x1c4] sm:$0xf]
        %v446 = vld [vmem:[%s322 + $0x1c8] sm:$0xf]
        %v447 = vld [vmem:[%s322 + $0x1cc] sm:$0xf]
        %v448 = vld [vmem:[%s322 + $0x1d0] sm:$0xf]
        %v449 = vld [vmem:[%s322 + $0x1d4] sm:$0xf]
        %v450 = vld [vmem:[%s322 + $0x1d8] sm:$0xf]
        %v451 = vld [vmem:[%s322 + $0x1dc] sm:$0xf]
        %v452 = vld [vmem:[%s322 + $0x1e0] sm:$0xf]
        %v453 = vld [vmem:[%s322 + $0x1e4] sm:$0xf]
        %v454 = vld [vmem:[%s322 + $0x1e8] sm:$0xf]
        %v455 = vld [vmem:[%s322 + $0x1ec] sm:$0xf]
        %v456 = vld [vmem:[%s322 + $0x1f0] sm:$0xf]
        %v457 = vld [vmem:[%s322 + $0x1f4] sm:$0xf]
        %v458 = vld [vmem:[%s322 + $0x1f8] sm:$0xf]
        %v459 = vld [vmem:[%s322 + $0x1fc] sm:$0xf]
        %v460 = vld [vmem:[%s328] sm:$0xf]
        %v461 = vld [vmem:[%s328 + $0x4] sm:$0xf]
        %v462 = vld [vmem:[%s328 + $0x8] sm:$0xf]
        %v463 = vld [vmem:[%s328 + $0xc] sm:$0xf]
        %v464 = vld [vmem:[%s328 + $0x10] sm:$0xf]
        %v465 = vld [vmem:[%s328 + $0x14] sm:$0xf]
        %v466 = vld [vmem:[%s328 + $0x18] sm:$0xf]
        %v467 = vld [vmem:[%s328 + $0x1c] sm:$0xf]
        %v468 = vld [vmem:[%s328 + $0x20] sm:$0xf]
        %v469 = vld [vmem:[%s328 + $0x24] sm:$0xf]
        %v470 = vld [vmem:[%s328 + $0x28] sm:$0xf]
        %v471 = vld [vmem:[%s328 + $0x2c] sm:$0xf]
        %v472 = vld [vmem:[%s328 + $0x30] sm:$0xf]
        %v473 = vld [vmem:[%s328 + $0x34] sm:$0xf]
        %v474 = vld [vmem:[%s328 + $0x38] sm:$0xf]
        %v475 = vld [vmem:[%s328 + $0x3c] sm:$0xf]
        %v476 = vld [vmem:[%s328 + $0x40] sm:$0xf]
        %v477 = vld [vmem:[%s328 + $0x44] sm:$0xf]
        %v478 = vld [vmem:[%s328 + $0x48] sm:$0xf]
        %v479 = vld [vmem:[%s328 + $0x4c] sm:$0xf]
        %v480 = vld [vmem:[%s328 + $0x50] sm:$0xf]
        %v481 = vld [vmem:[%s328 + $0x54] sm:$0xf]
        %v482 = vld [vmem:[%s328 + $0x58] sm:$0xf]
        %v483 = vld [vmem:[%s328 + $0x5c] sm:$0xf]
        %v484 = vld [vmem:[%s328 + $0x60] sm:$0xf]
        %v485 = vld [vmem:[%s328 + $0x64] sm:$0xf]
        %v486 = vld [vmem:[%s328 + $0x68] sm:$0xf]
        %v487 = vld [vmem:[%s328 + $0x6c] sm:$0xf]
        %v488 = vld [vmem:[%s328 + $0x70] sm:$0xf]
        %v489 = vld [vmem:[%s328 + $0x74] sm:$0xf]
        %v490 = vld [vmem:[%s328 + $0x78] sm:$0xf]
        %v491 = vld [vmem:[%s328 + $0x7c] sm:$0xf]
        %v492 = vld [vmem:[%s328 + $0x80] sm:$0xf]
        %v493 = vld [vmem:[%s328 + $0x84] sm:$0xf]
        %v494 = vld [vmem:[%s328 + $0x88] sm:$0xf]
        %v495 = vld [vmem:[%s328 + $0x8c] sm:$0xf]
        %v496 = vld [vmem:[%s328 + $0x90] sm:$0xf]
        %v497 = vld [vmem:[%s328 + $0x94] sm:$0xf]
        %v498 = vld [vmem:[%s328 + $0x98] sm:$0xf]
        %v499 = vld [vmem:[%s328 + $0x9c] sm:$0xf]
        %v500 = vld [vmem:[%s328 + $0xa0] sm:$0xf]
        %v501 = vld [vmem:[%s328 + $0xa4] sm:$0xf]
        %v502 = vld [vmem:[%s328 + $0xa8] sm:$0xf]
        %v503 = vld [vmem:[%s328 + $0xac] sm:$0xf]
        %v504 = vld [vmem:[%s328 + $0xb0] sm:$0xf]
        %v505 = vld [vmem:[%s328 + $0xb4] sm:$0xf]
        %v506 = vld [vmem:[%s328 + $0xb8] sm:$0xf]
        %v507 = vld [vmem:[%s328 + $0xbc] sm:$0xf]
        %v508 = vld [vmem:[%s328 + $0xc0] sm:$0xf]
        %v509 = vld [vmem:[%s328 + $0xc4] sm:$0xf]
        %v510 = vld [vmem:[%s328 + $0xc8] sm:$0xf]
        %v511 = vld [vmem:[%s328 + $0xcc] sm:$0xf]
        %v512 = vld [vmem:[%s328 + $0xd0] sm:$0xf]
        %v513 = vld [vmem:[%s328 + $0xd4] sm:$0xf]
        %v514 = vld [vmem:[%s328 + $0xd8] sm:$0xf]
        %v515 = vld [vmem:[%s328 + $0xdc] sm:$0xf]
        %v516 = vld [vmem:[%s328 + $0xe0] sm:$0xf]
        %v517 = vld [vmem:[%s328 + $0xe4] sm:$0xf]
        %v518 = vld [vmem:[%s328 + $0xe8] sm:$0xf]
        %v519 = vld [vmem:[%s328 + $0xec] sm:$0xf]
        %v520 = vld [vmem:[%s328 + $0xf0] sm:$0xf]
        %v521 = vld [vmem:[%s328 + $0xf4] sm:$0xf]
        %v522 = vld [vmem:[%s328 + $0xf8] sm:$0xf]
        %v523 = vld [vmem:[%s328 + $0xfc] sm:$0xf]
        %v524 = vld [vmem:[%s328 + $0x100] sm:$0xf]
        %v525 = vld [vmem:[%s328 + $0x104] sm:$0xf]
        %v526 = vld [vmem:[%s328 + $0x108] sm:$0xf]
        %v527 = vld [vmem:[%s328 + $0x10c] sm:$0xf]
        %v528 = vld [vmem:[%s328 + $0x110] sm:$0xf]
        %v529 = vld [vmem:[%s328 + $0x114] sm:$0xf]
        %v530 = vld [vmem:[%s328 + $0x118] sm:$0xf]
        %v531 = vld [vmem:[%s328 + $0x11c] sm:$0xf]
        %v532 = vld [vmem:[%s328 + $0x120] sm:$0xf]
        %v533 = vld [vmem:[%s328 + $0x124] sm:$0xf]
        %v534 = vld [vmem:[%s328 + $0x128] sm:$0xf]
        %v535 = vld [vmem:[%s328 + $0x12c] sm:$0xf]
        %v536 = vld [vmem:[%s328 + $0x130] sm:$0xf]
        %v537 = vld [vmem:[%s328 + $0x134] sm:$0xf]
        %v538 = vld [vmem:[%s328 + $0x138] sm:$0xf]
        %v539 = vld [vmem:[%s328 + $0x13c] sm:$0xf]
        %v540 = vld [vmem:[%s328 + $0x140] sm:$0xf]
        %v541 = vld [vmem:[%s328 + $0x144] sm:$0xf]
        %v542 = vld [vmem:[%s328 + $0x148] sm:$0xf]
        %v543 = vld [vmem:[%s328 + $0x14c] sm:$0xf]
        %v544 = vld [vmem:[%s328 + $0x150] sm:$0xf]
        %v545 = vld [vmem:[%s328 + $0x154] sm:$0xf]
        %v546 = vld [vmem:[%s328 + $0x158] sm:$0xf]
        %v547 = vld [vmem:[%s328 + $0x15c] sm:$0xf]
        %v548 = vld [vmem:[%s328 + $0x160] sm:$0xf]
        %v549 = vld [vmem:[%s328 + $0x164] sm:$0xf]
        %v550 = vld [vmem:[%s328 + $0x168] sm:$0xf]
        %v551 = vld [vmem:[%s328 + $0x16c] sm:$0xf]
        %v552 = vld [vmem:[%s328 + $0x170] sm:$0xf]
        %v553 = vld [vmem:[%s328 + $0x174] sm:$0xf]
        %v554 = vld [vmem:[%s328 + $0x178] sm:$0xf]
        %v555 = vld [vmem:[%s328 + $0x17c] sm:$0xf]
        %v556 = vld [vmem:[%s328 + $0x180] sm:$0xf]
        %v557 = vld [vmem:[%s328 + $0x184] sm:$0xf]
        %v558 = vld [vmem:[%s328 + $0x188] sm:$0xf]
        %v559 = vld [vmem:[%s328 + $0x18c] sm:$0xf]
        %v560 = vld [vmem:[%s328 + $0x190] sm:$0xf]
        %v561 = vld [vmem:[%s328 + $0x194] sm:$0xf]
        %v562 = vld [vmem:[%s328 + $0x198] sm:$0xf]
        %v563 = vld [vmem:[%s328 + $0x19c] sm:$0xf]
        %v564 = vld [vmem:[%s328 + $0x1a0] sm:$0xf]
        %v565 = vld [vmem:[%s328 + $0x1a4] sm:$0xf]
        %v566 = vld [vmem:[%s328 + $0x1a8] sm:$0xf]
        %v567 = vld [vmem:[%s328 + $0x1ac] sm:$0xf]
        %v568 = vld [vmem:[%s328 + $0x1b0] sm:$0xf]
        %v569 = vld [vmem:[%s328 + $0x1b4] sm:$0xf]
        %v570 = vld [vmem:[%s328 + $0x1b8] sm:$0xf]
        %v571 = vld [vmem:[%s328 + $0x1bc] sm:$0xf]
        %v572 = vld [vmem:[%s328 + $0x1c0] sm:$0xf]
        %v573 = vld [vmem:[%s328 + $0x1c4] sm:$0xf]
        %v574 = vld [vmem:[%s328 + $0x1c8] sm:$0xf]
        %v575 = vld [vmem:[%s328 + $0x1cc] sm:$0xf]
        %v576 = vld [vmem:[%s328 + $0x1d0] sm:$0xf]
        %v577 = vld [vmem:[%s328 + $0x1d4] sm:$0xf]
        %v578 = vld [vmem:[%s328 + $0x1d8] sm:$0xf]
        %v579 = vld [vmem:[%s328 + $0x1dc] sm:$0xf]
        %v580 = vld [vmem:[%s328 + $0x1e0] sm:$0xf]
        %v581 = vld [vmem:[%s328 + $0x1e4] sm:$0xf]
        %v582 = vld [vmem:[%s328 + $0x1e8] sm:$0xf]
        %v583 = vld [vmem:[%s328 + $0x1ec] sm:$0xf]
        %v584 = vld [vmem:[%s328 + $0x1f0] sm:$0xf]
        %v585 = vld [vmem:[%s328 + $0x1f4] sm:$0xf]
        %v586 = vld [vmem:[%s328 + $0x1f8] sm:$0xf]
        %v587 = vld [vmem:[%s328 + $0x1fc] sm:$0xf]
        %v588 = vunpack.c.l.bf16 %v332
        %v589 = vunpack.c.l.bf16 %v333
        %v590 = vunpack.c.l.bf16 %v334
        %v591 = vunpack.c.l.bf16 %v335
        %v592 = vunpack.c.l.bf16 %v336
        %v593 = vunpack.c.l.bf16 %v337
        %v594 = vunpack.c.l.bf16 %v338
        %v595 = vunpack.c.l.bf16 %v339
        %v596 = vunpack.c.l.bf16 %v340
        %v597 = vunpack.c.l.bf16 %v341
        %v598 = vunpack.c.l.bf16 %v342
        %v599 = vunpack.c.l.bf16 %v343
        %v600 = vunpack.c.l.bf16 %v344
        %v601 = vunpack.c.l.bf16 %v345
        %v602 = vunpack.c.l.bf16 %v346
        %v603 = vunpack.c.l.bf16 %v347
        %v604 = vunpack.c.l.bf16 %v348
        %v605 = vunpack.c.l.bf16 %v349
        %v606 = vunpack.c.l.bf16 %v350
        %v607 = vunpack.c.l.bf16 %v351
        %v608 = vunpack.c.l.bf16 %v352
        %v609 = vunpack.c.l.bf16 %v353
        %v610 = vunpack.c.l.bf16 %v354
        %v611 = vunpack.c.l.bf16 %v355
        %v612 = vunpack.c.l.bf16 %v356
        %v613 = vunpack.c.l.bf16 %v357
        %v614 = vunpack.c.l.bf16 %v358
        %v615 = vunpack.c.l.bf16 %v359
        %v616 = vunpack.c.l.bf16 %v360
        %v617 = vunpack.c.l.bf16 %v361
        %v618 = vunpack.c.l.bf16 %v362
        %v619 = vunpack.c.l.bf16 %v363
        %v620 = vunpack.c.l.bf16 %v364
        %v621 = vunpack.c.l.bf16 %v365
        %v622 = vunpack.c.l.bf16 %v366
        %v623 = vunpack.c.l.bf16 %v367
        %v624 = vunpack.c.l.bf16 %v368
        %v625 = vunpack.c.l.bf16 %v369
        %v626 = vunpack.c.l.bf16 %v370
        %v627 = vunpack.c.l.bf16 %v371
        %v628 = vunpack.c.l.bf16 %v372
        %v629 = vunpack.c.l.bf16 %v373
        %v630 = vunpack.c.l.bf16 %v374
        %v631 = vunpack.c.l.bf16 %v375
        %v632 = vunpack.c.l.bf16 %v376
        %v633 = vunpack.c.l.bf16 %v377
        %v634 = vunpack.c.l.bf16 %v378
        %v635 = vunpack.c.l.bf16 %v379
        %v636 = vunpack.c.l.bf16 %v380
        %v637 = vunpack.c.l.bf16 %v381
        %v638 = vunpack.c.l.bf16 %v382
        %v639 = vunpack.c.l.bf16 %v383
        %v640 = vunpack.c.l.bf16 %v384
        %v641 = vunpack.c.l.bf16 %v385
        %v642 = vunpack.c.l.bf16 %v386
        %v643 = vunpack.c.l.bf16 %v387
        %v644 = vunpack.c.l.bf16 %v388
        %v645 = vunpack.c.l.bf16 %v389
        %v646 = vunpack.c.l.bf16 %v390
        %v647 = vunpack.c.l.bf16 %v391
        %v648 = vunpack.c.l.bf16 %v392
        %v649 = vunpack.c.l.bf16 %v393
        %v650 = vunpack.c.l.bf16 %v394
        %v651 = vunpack.c.l.bf16 %v395
        %v652 = vunpack.c.l.bf16 %v396
        %v653 = vunpack.c.l.bf16 %v397
        %v654 = vunpack.c.l.bf16 %v398
        %v655 = vunpack.c.l.bf16 %v399
        %v656 = vunpack.c.l.bf16 %v400
        %v657 = vunpack.c.l.bf16 %v401
        %v658 = vunpack.c.l.bf16 %v402
        %v659 = vunpack.c.l.bf16 %v403
        %v660 = vunpack.c.l.bf16 %v404
        %v661 = vunpack.c.l.bf16 %v405
        %v662 = vunpack.c.l.bf16 %v406
        %v663 = vunpack.c.l.bf16 %v407
        %v664 = vunpack.c.l.bf16 %v408
        %v665 = vunpack.c.l.bf16 %v409
        %v666 = vunpack.c.l.bf16 %v410
        %v667 = vunpack.c.l.bf16 %v411
        %v668 = vunpack.c.l.bf16 %v412
        %v669 = vunpack.c.l.bf16 %v413
        %v670 = vunpack.c.l.bf16 %v414
        %v671 = vunpack.c.l.bf16 %v415
        %v672 = vunpack.c.l.bf16 %v416
        %v673 = vunpack.c.l.bf16 %v417
        %v674 = vunpack.c.l.bf16 %v418
        %v675 = vunpack.c.l.bf16 %v419
        %v676 = vunpack.c.l.bf16 %v420
        %v677 = vunpack.c.l.bf16 %v421
        %v678 = vunpack.c.l.bf16 %v422
        %v679 = vunpack.c.l.bf16 %v423
        %v680 = vunpack.c.l.bf16 %v424
        %v681 = vunpack.c.l.bf16 %v425
        %v682 = vunpack.c.l.bf16 %v426
        %v683 = vunpack.c.l.bf16 %v427
        %v684 = vunpack.c.l.bf16 %v428
        %v685 = vunpack.c.l.bf16 %v429
        %v686 = vunpack.c.l.bf16 %v430
        %v687 = vunpack.c.l.bf16 %v431
        %v688 = vunpack.c.l.bf16 %v432
        %v689 = vunpack.c.l.bf16 %v433
        %v690 = vunpack.c.l.bf16 %v434
        %v691 = vunpack.c.l.bf16 %v435
        %v692 = vunpack.c.l.bf16 %v436
        %v693 = vunpack.c.l.bf16 %v437
        %v694 = vunpack.c.l.bf16 %v438
        %v695 = vunpack.c.l.bf16 %v439
        %v696 = vunpack.c.l.bf16 %v440
        %v697 = vunpack.c.l.bf16 %v441
        %v698 = vunpack.c.l.bf16 %v442
        %v699 = vunpack.c.l.bf16 %v443
        %v700 = vunpack.c.l.bf16 %v444
        %v701 = vunpack.c.l.bf16 %v445
        %v702 = vunpack.c.l.bf16 %v446
        %v703 = vunpack.c.l.bf16 %v447
        %v704 = vunpack.c.l.bf16 %v448
        %v705 = vunpack.c.l.bf16 %v449
        %v706 = vunpack.c.l.bf16 %v450
        %v707 = vunpack.c.l.bf16 %v451
        %v708 = vunpack.c.l.bf16 %v452
        %v709 = vunpack.c.l.bf16 %v453
        %v710 = vunpack.c.l.bf16 %v454
        %v711 = vunpack.c.l.bf16 %v455
        %v712 = vunpack.c.l.bf16 %v456
        %v713 = vunpack.c.l.bf16 %v457
        %v714 = vunpack.c.l.bf16 %v458
        %v715 = vunpack.c.l.bf16 %v459
        %v716 = vunpack.c.l.bf16 %v460
        %v717 = vunpack.c.l.bf16 %v461
        %v718 = vunpack.c.l.bf16 %v462
        %v719 = vunpack.c.l.bf16 %v463
        %v720 = vunpack.c.l.bf16 %v464
        %v721 = vunpack.c.l.bf16 %v465
        %v722 = vunpack.c.l.bf16 %v466
        %v723 = vunpack.c.l.bf16 %v467
        %v724 = vunpack.c.l.bf16 %v468
        %v725 = vunpack.c.l.bf16 %v469
        %v726 = vunpack.c.l.bf16 %v470
        %v727 = vunpack.c.l.bf16 %v471
        %v728 = vunpack.c.l.bf16 %v472
        %v729 = vunpack.c.l.bf16 %v473
        %v730 = vunpack.c.l.bf16 %v474
        %v731 = vunpack.c.l.bf16 %v475
        %v732 = vunpack.c.l.bf16 %v476
        %v733 = vunpack.c.l.bf16 %v477
        %v734 = vunpack.c.l.bf16 %v478
        %v735 = vunpack.c.l.bf16 %v479
        %v736 = vunpack.c.l.bf16 %v480
        %v737 = vunpack.c.l.bf16 %v481
        %v738 = vunpack.c.l.bf16 %v482
        %v739 = vunpack.c.l.bf16 %v483
        %v740 = vunpack.c.l.bf16 %v484
        %v741 = vunpack.c.l.bf16 %v485
        %v742 = vunpack.c.l.bf16 %v486
        %v743 = vunpack.c.l.bf16 %v487
        %v744 = vunpack.c.l.bf16 %v488
        %v745 = vunpack.c.l.bf16 %v489
        %v746 = vunpack.c.l.bf16 %v490
        %v747 = vunpack.c.l.bf16 %v491
        %v748 = vunpack.c.l.bf16 %v492
        %v749 = vunpack.c.l.bf16 %v493
        %v750 = vunpack.c.l.bf16 %v494
        %v751 = vunpack.c.l.bf16 %v495
        %v752 = vunpack.c.l.bf16 %v496
        %v753 = vunpack.c.l.bf16 %v497
        %v754 = vunpack.c.l.bf16 %v498
        %v755 = vunpack.c.l.bf16 %v499
        %v756 = vunpack.c.l.bf16 %v500
        %v757 = vunpack.c.l.bf16 %v501
        %v758 = vunpack.c.l.bf16 %v502
        %v759 = vunpack.c.l.bf16 %v503
        %v760 = vunpack.c.l.bf16 %v504
        %v761 = vunpack.c.l.bf16 %v505
        %v762 = vunpack.c.l.bf16 %v506
        %v763 = vunpack.c.l.bf16 %v507
        %v764 = vunpack.c.l.bf16 %v508
        %v765 = vunpack.c.l.bf16 %v509
        %v766 = vunpack.c.l.bf16 %v510
        %v767 = vunpack.c.l.bf16 %v511
        %v768 = vunpack.c.l.bf16 %v512
        %v769 = vunpack.c.l.bf16 %v513
        %v770 = vunpack.c.l.bf16 %v514
        %v771 = vunpack.c.l.bf16 %v515
        %v772 = vunpack.c.l.bf16 %v516
        %v773 = vunpack.c.l.bf16 %v517
        %v774 = vunpack.c.l.bf16 %v518
        %v775 = vunpack.c.l.bf16 %v519
        %v776 = vunpack.c.l.bf16 %v520
        %v777 = vunpack.c.l.bf16 %v521
        %v778 = vunpack.c.l.bf16 %v522
        %v779 = vunpack.c.l.bf16 %v523
        %v780 = vunpack.c.l.bf16 %v524
        %v781 = vunpack.c.l.bf16 %v525
        %v782 = vunpack.c.l.bf16 %v526
        %v783 = vunpack.c.l.bf16 %v527
        %v784 = vunpack.c.l.bf16 %v528
        %v785 = vunpack.c.l.bf16 %v529
        %v786 = vunpack.c.l.bf16 %v530
        %v787 = vunpack.c.l.bf16 %v531
        %v788 = vunpack.c.l.bf16 %v532
        %v789 = vunpack.c.l.bf16 %v533
        %v790 = vunpack.c.l.bf16 %v534
        %v791 = vunpack.c.l.bf16 %v535
        %v792 = vunpack.c.l.bf16 %v536
        %v793 = vunpack.c.l.bf16 %v537
        %v794 = vunpack.c.l.bf16 %v538
        %v795 = vunpack.c.l.bf16 %v539
        %v796 = vunpack.c.l.bf16 %v540
        %v797 = vunpack.c.l.bf16 %v541
        %v798 = vunpack.c.l.bf16 %v542
        %v799 = vunpack.c.l.bf16 %v543
        %v800 = vunpack.c.l.bf16 %v544
        %v801 = vunpack.c.l.bf16 %v545
        %v802 = vunpack.c.l.bf16 %v546
        %v803 = vunpack.c.l.bf16 %v547
        %v804 = vunpack.c.l.bf16 %v548
        %v805 = vunpack.c.l.bf16 %v549
        %v806 = vunpack.c.l.bf16 %v550
        %v807 = vunpack.c.l.bf16 %v551
        %v808 = vunpack.c.l.bf16 %v552
        %v809 = vunpack.c.l.bf16 %v553
        %v810 = vunpack.c.l.bf16 %v554
        %v811 = vunpack.c.l.bf16 %v555
        %v812 = vunpack.c.l.bf16 %v556
        %v813 = vunpack.c.l.bf16 %v557
        %v814 = vunpack.c.l.bf16 %v558
        %v815 = vunpack.c.l.bf16 %v559
        %v816 = vunpack.c.l.bf16 %v560
        %v817 = vunpack.c.l.bf16 %v561
        %v818 = vunpack.c.l.bf16 %v562
        %v819 = vunpack.c.l.bf16 %v563
        %v820 = vunpack.c.l.bf16 %v564
        %v821 = vunpack.c.l.bf16 %v565
        %v822 = vunpack.c.l.bf16 %v566
        %v823 = vunpack.c.l.bf16 %v567
        %v824 = vunpack.c.l.bf16 %v568
        %v825 = vunpack.c.l.bf16 %v569
        %v826 = vunpack.c.l.bf16 %v570
        %v827 = vunpack.c.l.bf16 %v571
        %v828 = vunpack.c.l.bf16 %v572
        %v829 = vunpack.c.l.bf16 %v573
        %v830 = vunpack.c.l.bf16 %v574
        %v831 = vunpack.c.l.bf16 %v575
        %v832 = vunpack.c.l.bf16 %v576
        %v833 = vunpack.c.l.bf16 %v577
        %v834 = vunpack.c.l.bf16 %v578
        %v835 = vunpack.c.l.bf16 %v579
        %v836 = vunpack.c.l.bf16 %v580
        %v837 = vunpack.c.l.bf16 %v581
        %v838 = vunpack.c.l.bf16 %v582
        %v839 = vunpack.c.l.bf16 %v583
        %v840 = vunpack.c.l.bf16 %v584
        %v841 = vunpack.c.l.bf16 %v585
        %v842 = vunpack.c.l.bf16 %v586
        %v843 = vunpack.c.l.bf16 %v587
        %v844 = vmul.f32 %v588, %v716
        %v845 = vmul.f32 %v589, %v717
        %v846 = vmul.f32 %v590, %v718
        %v847 = vmul.f32 %v591, %v719
        %v848 = vmul.f32 %v592, %v720
        %v849 = vmul.f32 %v593, %v721
        %v850 = vmul.f32 %v594, %v722
        %v851 = vmul.f32 %v595, %v723
        %v852 = vmul.f32 %v596, %v724
        %v853 = vmul.f32 %v597, %v725
        %v854 = vmul.f32 %v598, %v726
        %v855 = vmul.f32 %v599, %v727
        %v856 = vmul.f32 %v600, %v728
        %v857 = vmul.f32 %v601, %v729
        %v858 = vmul.f32 %v602, %v730
        %v859 = vmul.f32 %v603, %v731
        %v860 = vmul.f32 %v604, %v732
        %v861 = vmul.f32 %v605, %v733
        %v862 = vmul.f32 %v606, %v734
        %v863 = vmul.f32 %v607, %v735
        %v864 = vmul.f32 %v608, %v736
        %v865 = vmul.f32 %v609, %v737
        %v866 = vmul.f32 %v610, %v738
        %v867 = vmul.f32 %v611, %v739
        %v868 = vmul.f32 %v612, %v740
        %v869 = vmul.f32 %v613, %v741
        %v870 = vmul.f32 %v614, %v742
        %v871 = vmul.f32 %v615, %v743
        %v872 = vmul.f32 %v616, %v744
        %v873 = vmul.f32 %v617, %v745
        %v874 = vmul.f32 %v618, %v746
        %v875 = vmul.f32 %v619, %v747
        %v876 = vmul.f32 %v620, %v748
        %v877 = vmul.f32 %v621, %v749
        %v878 = vmul.f32 %v622, %v750
        %v879 = vmul.f32 %v623, %v751
        %v880 = vmul.f32 %v624, %v752
        %v881 = vmul.f32 %v625, %v753
        %v882 = vmul.f32 %v626, %v754
        %v883 = vmul.f32 %v627, %v755
        %v884 = vmul.f32 %v628, %v756
        %v885 = vmul.f32 %v629, %v757
        %v886 = vmul.f32 %v630, %v758
        %v887 = vmul.f32 %v631, %v759
        %v888 = vmul.f32 %v632, %v760
        %v889 = vmul.f32 %v633, %v761
        %v890 = vmul.f32 %v634, %v762
        %v891 = vmul.f32 %v635, %v763
        %v892 = vmul.f32 %v636, %v764
        %v893 = vmul.f32 %v637, %v765
        %v894 = vmul.f32 %v638, %v766
        %v895 = vmul.f32 %v639, %v767
        %v896 = vmul.f32 %v640, %v768
        %v897 = vmul.f32 %v641, %v769
        %v898 = vmul.f32 %v642, %v770
        %v899 = vmul.f32 %v643, %v771
        %v900 = vmul.f32 %v644, %v772
        %v901 = vmul.f32 %v645, %v773
        %v902 = vmul.f32 %v646, %v774
        %v903 = vmul.f32 %v647, %v775
        %v904 = vmul.f32 %v648, %v776
        %v905 = vmul.f32 %v649, %v777
        %v906 = vmul.f32 %v650, %v778
        %v907 = vmul.f32 %v651, %v779
        %v908 = vmul.f32 %v652, %v780
        %v909 = vmul.f32 %v653, %v781
        %v910 = vmul.f32 %v654, %v782
        %v911 = vmul.f32 %v655, %v783
        %v912 = vmul.f32 %v656, %v784
        %v913 = vmul.f32 %v657, %v785
        %v914 = vmul.f32 %v658, %v786
        %v915 = vmul.f32 %v659, %v787
        %v916 = vmul.f32 %v660, %v788
        %v917 = vmul.f32 %v661, %v789
        %v918 = vmul.f32 %v662, %v790
        %v919 = vmul.f32 %v663, %v791
        %v920 = vmul.f32 %v664, %v792
        %v921 = vmul.f32 %v665, %v793
        %v922 = vmul.f32 %v666, %v794
        %v923 = vmul.f32 %v667, %v795
        %v924 = vmul.f32 %v668, %v796
        %v925 = vmul.f32 %v669, %v797
        %v926 = vmul.f32 %v670, %v798
        %v927 = vmul.f32 %v671, %v799
        %v928 = vmul.f32 %v672, %v800
        %v929 = vmul.f32 %v673, %v801
        %v930 = vmul.f32 %v674, %v802
        %v931 = vmul.f32 %v675, %v803
        %v932 = vmul.f32 %v676, %v804
        %v933 = vmul.f32 %v677, %v805
        %v934 = vmul.f32 %v678, %v806
        %v935 = vmul.f32 %v679, %v807
        %v936 = vmul.f32 %v680, %v808
        %v937 = vmul.f32 %v681, %v809
        %v938 = vmul.f32 %v682, %v810
        %v939 = vmul.f32 %v683, %v811
        %v940 = vmul.f32 %v684, %v812
        %v941 = vmul.f32 %v685, %v813
        %v942 = vmul.f32 %v686, %v814
        %v943 = vmul.f32 %v687, %v815
        %v944 = vmul.f32 %v688, %v816
        %v945 = vmul.f32 %v689, %v817
        %v946 = vmul.f32 %v690, %v818
        %v947 = vmul.f32 %v691, %v819
        %v948 = vmul.f32 %v692, %v820
        %v949 = vmul.f32 %v693, %v821
        %v950 = vmul.f32 %v694, %v822
        %v951 = vmul.f32 %v695, %v823
        %v952 = vmul.f32 %v696, %v824
        %v953 = vmul.f32 %v697, %v825
        %v954 = vmul.f32 %v698, %v826
        %v955 = vmul.f32 %v699, %v827
        %v956 = vmul.f32 %v700, %v828
        %v957 = vmul.f32 %v701, %v829
        %v958 = vmul.f32 %v702, %v830
        %v959 = vmul.f32 %v703, %v831
        %v960 = vmul.f32 %v704, %v832
        %v961 = vmul.f32 %v705, %v833
        %v962 = vmul.f32 %v706, %v834
        %v963 = vmul.f32 %v707, %v835
        %v964 = vmul.f32 %v708, %v836
        %v965 = vmul.f32 %v709, %v837
        %v966 = vmul.f32 %v710, %v838
        %v967 = vmul.f32 %v711, %v839
        %v968 = vmul.f32 %v712, %v840
        %v969 = vmul.f32 %v713, %v841
        %v970 = vmul.f32 %v714, %v842
        %v971 = vmul.f32 %v715, %v843
        %v972 = vpack.c.bf16 %v845, %v844
        %v973 = vpack.c.bf16 %v847, %v846
        %v974 = vpack.c.bf16 %v849, %v848
        %v975 = vpack.c.bf16 %v851, %v850
        %v976 = vpack.c.bf16 %v853, %v852
        %v977 = vpack.c.bf16 %v855, %v854
        %v978 = vpack.c.bf16 %v857, %v856
        %v979 = vpack.c.bf16 %v859, %v858
        %v980 = vpack.c.bf16 %v861, %v860
        %v981 = vpack.c.bf16 %v863, %v862
        %v982 = vpack.c.bf16 %v865, %v864
        %v983 = vpack.c.bf16 %v867, %v866
        %v984 = vpack.c.bf16 %v869, %v868
        %v985 = vpack.c.bf16 %v871, %v870
        %v986 = vpack.c.bf16 %v873, %v872
        %v987 = vpack.c.bf16 %v875, %v874
        %v988 = vpack.c.bf16 %v877, %v876
        %v989 = vpack.c.bf16 %v879, %v878
        %v990 = vpack.c.bf16 %v881, %v880
        %v991 = vpack.c.bf16 %v883, %v882
        %v992 = vpack.c.bf16 %v885, %v884
        %v993 = vpack.c.bf16 %v887, %v886
        %v994 = vpack.c.bf16 %v889, %v888
        %v995 = vpack.c.bf16 %v891, %v890
        %v996 = vpack.c.bf16 %v893, %v892
        %v997 = vpack.c.bf16 %v895, %v894
        %v998 = vpack.c.bf16 %v897, %v896
        %v999 = vpack.c.bf16 %v899, %v898
        %v1000 = vpack.c.bf16 %v901, %v900
        %v1001 = vpack.c.bf16 %v903, %v902
        %v1002 = vpack.c.bf16 %v905, %v904
        %v1003 = vpack.c.bf16 %v907, %v906
        %v1004 = vpack.c.bf16 %v909, %v908
        %v1005 = vpack.c.bf16 %v911, %v910
        %v1006 = vpack.c.bf16 %v913, %v912
        %v1007 = vpack.c.bf16 %v915, %v914
        %v1008 = vpack.c.bf16 %v917, %v916
        %v1009 = vpack.c.bf16 %v919, %v918
        %v1010 = vpack.c.bf16 %v921, %v920
        %v1011 = vpack.c.bf16 %v923, %v922
        %v1012 = vpack.c.bf16 %v925, %v924
        %v1013 = vpack.c.bf16 %v927, %v926
        %v1014 = vpack.c.bf16 %v929, %v928
        %v1015 = vpack.c.bf16 %v931, %v930
        %v1016 = vpack.c.bf16 %v933, %v932
        %v1017 = vpack.c.bf16 %v935, %v934
        %v1018 = vpack.c.bf16 %v937, %v936
        %v1019 = vpack.c.bf16 %v939, %v938
        %v1020 = vpack.c.bf16 %v941, %v940
        %v1021 = vpack.c.bf16 %v943, %v942
        %v1022 = vpack.c.bf16 %v945, %v944
        %v1023 = vpack.c.bf16 %v947, %v946
        %v1024 = vpack.c.bf16 %v949, %v948
        %v1025 = vpack.c.bf16 %v951, %v950
        %v1026 = vpack.c.bf16 %v953, %v952
        %v1027 = vpack.c.bf16 %v955, %v954
        %v1028 = vpack.c.bf16 %v957, %v956
        %v1029 = vpack.c.bf16 %v959, %v958
        %v1030 = vpack.c.bf16 %v961, %v960
        %v1031 = vpack.c.bf16 %v963, %v962
        %v1032 = vpack.c.bf16 %v965, %v964
        %v1033 = vpack.c.bf16 %v967, %v966
        %v1034 = vpack.c.bf16 %v969, %v968
        %v1035 = vpack.c.bf16 %v971, %v970
        %v1036 = vld [vmem:[%s2] sm:$0xf]
        %v1037 = vld [vmem:[%s2 + $0x4] sm:$0xf]
        %v1038 = vld [vmem:[%s2 + $0x8] sm:$0xf]
        %v1039 = vld [vmem:[%s2 + $0xc] sm:$0xf]
        %v1040 = vld [vmem:[%s2 + $0x10] sm:$0xf]
        %v1041 = vld [vmem:[%s2 + $0x14] sm:$0xf]
        %v1042 = vld [vmem:[%s2 + $0x18] sm:$0xf]
        %v1043 = vld [vmem:[%s2 + $0x1c] sm:$0xf]
        %v1044 = vld [vmem:[%s3] sm:$0x1]
        %v1046 = vperm.slane %v1044, 0
        %v1056 = vunpack.c.l.b16 %v1036
        %v1057 = vunpack.c.l.b16 %v1037
        %v1058 = vunpack.c.l.b16 %v1038
        %v1059 = vunpack.c.l.b16 %v1039
        %v1060 = vunpack.c.l.b16 %v1040
        %v1061 = vunpack.c.l.b16 %v1041
        %v1062 = vunpack.c.l.b16 %v1042
        %v1063 = vunpack.c.l.b16 %v1043
        %v1064 = vpack.c.b16 %v1057, %v1056
        %v1065 = vpack.c.b16 %v1059, %v1058
        %v1066 = vpack.c.b16 %v1061, %v1060
        %v1067 = vpack.c.b16 %v1063, %v1062
        %vm1072 = vcmask 523264
        %v1074 = vsel %vm1072, %v972, 0
        %v1077 = vsel %vm1072, %v973, 0
        %v1080 = vsel %vm1072, %v974, 0
        %v1083 = vsel %vm1072, %v975, 0
        %v1086 = vsel %vm1072, %v976, 0
        %v1089 = vsel %vm1072, %v977, 0
        %v1092 = vsel %vm1072, %v978, 0
        %v1095 = vsel %vm1072, %v979, 0
        %v1098 = vsel %vm1072, %v980, 0
        %v1101 = vsel %vm1072, %v981, 0
        %v1104 = vsel %vm1072, %v982, 0
        %v1107 = vsel %vm1072, %v983, 0
        %v1110 = vsel %vm1072, %v984, 0
        %v1113 = vsel %vm1072, %v985, 0
        %v1116 = vsel %vm1072, %v986, 0
        %v1119 = vsel %vm1072, %v987, 0
        %v1122 = vsel %vm1072, %v988, 0
        %v1125 = vsel %vm1072, %v989, 0
        %v1128 = vsel %vm1072, %v990, 0
        %v1131 = vsel %vm1072, %v991, 0
        %v1134 = vsel %vm1072, %v992, 0
        %v1137 = vsel %vm1072, %v993, 0
        %v1140 = vsel %vm1072, %v994, 0
        %v1143 = vsel %vm1072, %v995, 0
        %v1146 = vsel %vm1072, %v996, 0
        %v1149 = vsel %vm1072, %v997, 0
        %v1152 = vsel %vm1072, %v998, 0
        %v1155 = vsel %vm1072, %v999, 0
        %v1158 = vsel %vm1072, %v1000, 0
        %v1161 = vsel %vm1072, %v1001, 0
        %v1164 = vsel %vm1072, %v1002, 0
        %v1167 = vsel %vm1072, %v1003, 0
        %v1170 = vsel %vm1072, %v1004, 0
        %v1173 = vsel %vm1072, %v1005, 0
        %v1176 = vsel %vm1072, %v1006, 0
        %v1179 = vsel %vm1072, %v1007, 0
        %v1182 = vsel %vm1072, %v1008, 0
        %v1185 = vsel %vm1072, %v1009, 0
        %v1188 = vsel %vm1072, %v1010, 0
        %v1191 = vsel %vm1072, %v1011, 0
        %v1194 = vsel %vm1072, %v1012, 0
        %v1197 = vsel %vm1072, %v1013, 0
        %v1200 = vsel %vm1072, %v1014, 0
        %v1203 = vsel %vm1072, %v1015, 0
        %v1206 = vsel %vm1072, %v1016, 0
        %v1209 = vsel %vm1072, %v1017, 0
        %v1212 = vsel %vm1072, %v1018, 0
        %v1215 = vsel %vm1072, %v1019, 0
        %v1218 = vsel %vm1072, %v1020, 0
        %v1221 = vsel %vm1072, %v1021, 0
        %v1224 = vsel %vm1072, %v1022, 0
        %v1227 = vsel %vm1072, %v1023, 0
        %v1230 = vsel %vm1072, %v1024, 0
        %v1233 = vsel %vm1072, %v1025, 0
        %v1236 = vsel %vm1072, %v1026, 0
        %v1239 = vsel %vm1072, %v1027, 0
        %v1242 = vsel %vm1072, %v1028, 0
        %v1245 = vsel %vm1072, %v1029, 0
        %v1248 = vsel %vm1072, %v1030, 0
        %v1251 = vsel %vm1072, %v1031, 0
        %v1254 = vsel %vm1072, %v1032, 0
        %v1257 = vsel %vm1072, %v1033, 0
        %v1260 = vsel %vm1072, %v1034, 0
        %v1263 = vsel %vm1072, %v1035, 0
        %1265 = vmatpush.bf16.msra.mxu0 0
        %1266 = vmatpush.bf16.msra.mxu0 0
        %1267 = vmatpush.bf16.msra.mxu0 0
        %1268 = vmatpush.bf16.msra.mxu0 0
        %1269 = vmatpush.bf16.msra.mxu0 %v1067
        %1270 = vmatpush.bf16.msra.mxu0 %v1066
        %1271 = vmatpush.bf16.msra.mxu0 %v1065
        %1272 = vmatpush.bf16.msra.mxu0 %v1064
        %1273 = vmatmul.bf16.gmra.mxu0 %v1074
        %v1274 = vpop.f32.mrf.mxu0
        %v1275 = vadd.f32 %v1046, %v1274
        %v1276 = vpop.f32.mrf.mxu0
        %v1277 = vadd.f32 %v1046, %v1276
        %1278 = vmatmul.bf16.gmra.mxu0 %v1077
        %v1279 = vpop.f32.mrf.mxu0
        %v1280 = vadd.f32 %v1046, %v1279
        %v1281 = vpop.f32.mrf.mxu0
        %v1282 = vadd.f32 %v1046, %v1281
        %1283 = vmatmul.bf16.gmra.mxu0 %v1080
        %v1284 = vpop.f32.mrf.mxu0
        %v1285 = vadd.f32 %v1046, %v1284
        %v1286 = vpop.f32.mrf.mxu0
        %v1287 = vadd.f32 %v1046, %v1286
        %1288 = vmatmul.bf16.gmra.mxu0 %v1083
        %v1289 = vpop.f32.mrf.mxu0
        %v1290 = vadd.f32 %v1046, %v1289
        %v1291 = vpop.f32.mrf.mxu0
        %v1292 = vadd.f32 %v1046, %v1291
        %1293 = vmatmul.bf16.gmra.mxu0 %v1086
        %v1294 = vpop.f32.mrf.mxu0
        %v1295 = vadd.f32 %v1046, %v1294
        %v1296 = vpop.f32.mrf.mxu0
        %v1297 = vadd.f32 %v1046, %v1296
        %1298 = vmatmul.bf16.gmra.mxu0 %v1089
        %v1299 = vpop.f32.mrf.mxu0
        %v1300 = vadd.f32 %v1046, %v1299
        %v1301 = vpop.f32.mrf.mxu0
        %v1302 = vadd.f32 %v1046, %v1301
        %1303 = vmatmul.bf16.gmra.mxu0 %v1092
        %v1304 = vpop.f32.mrf.mxu0
        %v1305 = vadd.f32 %v1046, %v1304
        %v1306 = vpop.f32.mrf.mxu0
        %v1307 = vadd.f32 %v1046, %v1306
        %1308 = vmatmul.bf16.gmra.mxu0 %v1095
        %v1309 = vpop.f32.mrf.mxu0
        %v1310 = vadd.f32 %v1046, %v1309
        %v1311 = vpop.f32.mrf.mxu0
        %v1312 = vadd.f32 %v1046, %v1311
        %1313 = vmatmul.bf16.gmra.mxu0 %v1098
        %v1314 = vpop.f32.mrf.mxu0
        %v1315 = vadd.f32 %v1046, %v1314
        %v1316 = vpop.f32.mrf.mxu0
        %v1317 = vadd.f32 %v1046, %v1316
        %1318 = vmatmul.bf16.gmra.mxu0 %v1101
        %v1319 = vpop.f32.mrf.mxu0
        %v1320 = vadd.f32 %v1046, %v1319
        %v1321 = vpop.f32.mrf.mxu0
        %v1322 = vadd.f32 %v1046, %v1321
        %1323 = vmatmul.bf16.gmra.mxu0 %v1104
        %v1324 = vpop.f32.mrf.mxu0
        %v1325 = vadd.f32 %v1046, %v1324
        %v1326 = vpop.f32.mrf.mxu0
        %v1327 = vadd.f32 %v1046, %v1326
        %1328 = vmatmul.bf16.gmra.mxu0 %v1107
        %v1329 = vpop.f32.mrf.mxu0
        %v1330 = vadd.f32 %v1046, %v1329
        %v1331 = vpop.f32.mrf.mxu0
        %v1332 = vadd.f32 %v1046, %v1331
        %1333 = vmatmul.bf16.gmra.mxu0 %v1110
        %v1334 = vpop.f32.mrf.mxu0
        %v1335 = vadd.f32 %v1046, %v1334
        %v1336 = vpop.f32.mrf.mxu0
        %v1337 = vadd.f32 %v1046, %v1336
        %1338 = vmatmul.bf16.gmra.mxu0 %v1113
        %v1339 = vpop.f32.mrf.mxu0
        %v1340 = vadd.f32 %v1046, %v1339
        %v1341 = vpop.f32.mrf.mxu0
        %v1342 = vadd.f32 %v1046, %v1341
        %1343 = vmatmul.bf16.gmra.mxu0 %v1116
        %v1344 = vpop.f32.mrf.mxu0
        %v1345 = vadd.f32 %v1046, %v1344
        %v1346 = vpop.f32.mrf.mxu0
        %v1347 = vadd.f32 %v1046, %v1346
        %1348 = vmatmul.bf16.gmra.mxu0 %v1119
        %v1349 = vpop.f32.mrf.mxu0
        %v1350 = vadd.f32 %v1046, %v1349
        %v1351 = vpop.f32.mrf.mxu0
        %v1352 = vadd.f32 %v1046, %v1351
        %1353 = vmatmul.bf16.gmra.mxu0 %v1122
        %v1354 = vpop.f32.mrf.mxu0
        %v1355 = vadd.f32 %v1046, %v1354
        %v1356 = vpop.f32.mrf.mxu0
        %v1357 = vadd.f32 %v1046, %v1356
        %1358 = vmatmul.bf16.gmra.mxu0 %v1125
        %v1359 = vpop.f32.mrf.mxu0
        %v1360 = vadd.f32 %v1046, %v1359
        %v1361 = vpop.f32.mrf.mxu0
        %v1362 = vadd.f32 %v1046, %v1361
        %1363 = vmatmul.bf16.gmra.mxu0 %v1128
        %v1364 = vpop.f32.mrf.mxu0
        %v1365 = vadd.f32 %v1046, %v1364
        %v1366 = vpop.f32.mrf.mxu0
        %v1367 = vadd.f32 %v1046, %v1366
        %1368 = vmatmul.bf16.gmra.mxu0 %v1131
        %v1369 = vpop.f32.mrf.mxu0
        %v1370 = vadd.f32 %v1046, %v1369
        %v1371 = vpop.f32.mrf.mxu0
        %v1372 = vadd.f32 %v1046, %v1371
        %1373 = vmatmul.bf16.gmra.mxu0 %v1134
        %v1374 = vpop.f32.mrf.mxu0
        %v1375 = vadd.f32 %v1046, %v1374
        %v1376 = vpop.f32.mrf.mxu0
        %v1377 = vadd.f32 %v1046, %v1376
        %1378 = vmatmul.bf16.gmra.mxu0 %v1137
        %v1379 = vpop.f32.mrf.mxu0
        %v1380 = vadd.f32 %v1046, %v1379
        %v1381 = vpop.f32.mrf.mxu0
        %v1382 = vadd.f32 %v1046, %v1381
        %1383 = vmatmul.bf16.gmra.mxu0 %v1140
        %v1384 = vpop.f32.mrf.mxu0
        %v1385 = vadd.f32 %v1046, %v1384
        %v1386 = vpop.f32.mrf.mxu0
        %v1387 = vadd.f32 %v1046, %v1386
        %1388 = vmatmul.bf16.gmra.mxu0 %v1143
        %v1389 = vpop.f32.mrf.mxu0
        %v1390 = vadd.f32 %v1046, %v1389
        %v1391 = vpop.f32.mrf.mxu0
        %v1392 = vadd.f32 %v1046, %v1391
        %1393 = vmatmul.bf16.gmra.mxu0 %v1146
        %v1394 = vpop.f32.mrf.mxu0
        %v1395 = vadd.f32 %v1046, %v1394
        %v1396 = vpop.f32.mrf.mxu0
        %v1397 = vadd.f32 %v1046, %v1396
        %1398 = vmatmul.bf16.gmra.mxu0 %v1149
        %v1399 = vpop.f32.mrf.mxu0
        %v1400 = vadd.f32 %v1046, %v1399
        %v1401 = vpop.f32.mrf.mxu0
        %v1402 = vadd.f32 %v1046, %v1401
        %1403 = vmatmul.bf16.gmra.mxu0 %v1152
        %v1404 = vpop.f32.mrf.mxu0
        %v1405 = vadd.f32 %v1046, %v1404
        %v1406 = vpop.f32.mrf.mxu0
        %v1407 = vadd.f32 %v1046, %v1406
        %1408 = vmatmul.bf16.gmra.mxu0 %v1155
        %v1409 = vpop.f32.mrf.mxu0
        %v1410 = vadd.f32 %v1046, %v1409
        %v1411 = vpop.f32.mrf.mxu0
        %v1412 = vadd.f32 %v1046, %v1411
        %1413 = vmatmul.bf16.gmra.mxu0 %v1158
        %v1414 = vpop.f32.mrf.mxu0
        %v1415 = vadd.f32 %v1046, %v1414
        %v1416 = vpop.f32.mrf.mxu0
        %v1417 = vadd.f32 %v1046, %v1416
        %1418 = vmatmul.bf16.gmra.mxu0 %v1161
        %v1419 = vpop.f32.mrf.mxu0
        %v1420 = vadd.f32 %v1046, %v1419
        %v1421 = vpop.f32.mrf.mxu0
        %v1422 = vadd.f32 %v1046, %v1421
        %1423 = vmatmul.bf16.gmra.mxu0 %v1164
        %v1424 = vpop.f32.mrf.mxu0
        %v1425 = vadd.f32 %v1046, %v1424
        %v1426 = vpop.f32.mrf.mxu0
        %v1427 = vadd.f32 %v1046, %v1426
        %1428 = vmatmul.bf16.gmra.mxu0 %v1167
        %v1429 = vpop.f32.mrf.mxu0
        %v1430 = vadd.f32 %v1046, %v1429
        %v1431 = vpop.f32.mrf.mxu0
        %v1432 = vadd.f32 %v1046, %v1431
        %1433 = vmatmul.bf16.gmra.mxu0 %v1170
        %v1434 = vpop.f32.mrf.mxu0
        %v1435 = vadd.f32 %v1046, %v1434
        %v1436 = vpop.f32.mrf.mxu0
        %v1437 = vadd.f32 %v1046, %v1436
        %1438 = vmatmul.bf16.gmra.mxu0 %v1173
        %v1439 = vpop.f32.mrf.mxu0
        %v1440 = vadd.f32 %v1046, %v1439
        %v1441 = vpop.f32.mrf.mxu0
        %v1442 = vadd.f32 %v1046, %v1441
        %1443 = vmatmul.bf16.gmra.mxu0 %v1176
        %v1444 = vpop.f32.mrf.mxu0
        %v1445 = vadd.f32 %v1046, %v1444
        %v1446 = vpop.f32.mrf.mxu0
        %v1447 = vadd.f32 %v1046, %v1446
        %1448 = vmatmul.bf16.gmra.mxu0 %v1179
        %v1449 = vpop.f32.mrf.mxu0
        %v1450 = vadd.f32 %v1046, %v1449
        %v1451 = vpop.f32.mrf.mxu0
        %v1452 = vadd.f32 %v1046, %v1451
        %1453 = vmatmul.bf16.gmra.mxu0 %v1182
        %v1454 = vpop.f32.mrf.mxu0
        %v1455 = vadd.f32 %v1046, %v1454
        %v1456 = vpop.f32.mrf.mxu0
        %v1457 = vadd.f32 %v1046, %v1456
        %1458 = vmatmul.bf16.gmra.mxu0 %v1185
        %v1459 = vpop.f32.mrf.mxu0
        %v1460 = vadd.f32 %v1046, %v1459
        %v1461 = vpop.f32.mrf.mxu0
        %v1462 = vadd.f32 %v1046, %v1461
        %1463 = vmatmul.bf16.gmra.mxu0 %v1188
        %v1464 = vpop.f32.mrf.mxu0
        %v1465 = vadd.f32 %v1046, %v1464
        %v1466 = vpop.f32.mrf.mxu0
        %v1467 = vadd.f32 %v1046, %v1466
        %1468 = vmatmul.bf16.gmra.mxu0 %v1191
        %v1469 = vpop.f32.mrf.mxu0
        %v1470 = vadd.f32 %v1046, %v1469
        %v1471 = vpop.f32.mrf.mxu0
        %v1472 = vadd.f32 %v1046, %v1471
        %1473 = vmatmul.bf16.gmra.mxu0 %v1194
        %v1474 = vpop.f32.mrf.mxu0
        %v1475 = vadd.f32 %v1046, %v1474
        %v1476 = vpop.f32.mrf.mxu0
        %v1477 = vadd.f32 %v1046, %v1476
        %1478 = vmatmul.bf16.gmra.mxu0 %v1197
        %v1479 = vpop.f32.mrf.mxu0
        %v1480 = vadd.f32 %v1046, %v1479
        %v1481 = vpop.f32.mrf.mxu0
        %v1482 = vadd.f32 %v1046, %v1481
        %1483 = vmatmul.bf16.gmra.mxu0 %v1200
        %v1484 = vpop.f32.mrf.mxu0
        %v1485 = vadd.f32 %v1046, %v1484
        %v1486 = vpop.f32.mrf.mxu0
        %v1487 = vadd.f32 %v1046, %v1486
        %1488 = vmatmul.bf16.gmra.mxu0 %v1203
        %v1489 = vpop.f32.mrf.mxu0
        %v1490 = vadd.f32 %v1046, %v1489
        %v1491 = vpop.f32.mrf.mxu0
        %v1492 = vadd.f32 %v1046, %v1491
        %1493 = vmatmul.bf16.gmra.mxu0 %v1206
        %v1494 = vpop.f32.mrf.mxu0
        %v1495 = vadd.f32 %v1046, %v1494
        %v1496 = vpop.f32.mrf.mxu0
        %v1497 = vadd.f32 %v1046, %v1496
        %1498 = vmatmul.bf16.gmra.mxu0 %v1209
        %v1499 = vpop.f32.mrf.mxu0
        %v1500 = vadd.f32 %v1046, %v1499
        %v1501 = vpop.f32.mrf.mxu0
        %v1502 = vadd.f32 %v1046, %v1501
        %1503 = vmatmul.bf16.gmra.mxu0 %v1212
        %v1504 = vpop.f32.mrf.mxu0
        %v1505 = vadd.f32 %v1046, %v1504
        %v1506 = vpop.f32.mrf.mxu0
        %v1507 = vadd.f32 %v1046, %v1506
        %1508 = vmatmul.bf16.gmra.mxu0 %v1215
        %v1509 = vpop.f32.mrf.mxu0
        %v1510 = vadd.f32 %v1046, %v1509
        %v1511 = vpop.f32.mrf.mxu0
        %v1512 = vadd.f32 %v1046, %v1511
        %1513 = vmatmul.bf16.gmra.mxu0 %v1218
        %v1514 = vpop.f32.mrf.mxu0
        %v1515 = vadd.f32 %v1046, %v1514
        %v1516 = vpop.f32.mrf.mxu0
        %v1517 = vadd.f32 %v1046, %v1516
        %1518 = vmatmul.bf16.gmra.mxu0 %v1221
        %v1519 = vpop.f32.mrf.mxu0
        %v1520 = vadd.f32 %v1046, %v1519
        %v1521 = vpop.f32.mrf.mxu0
        %v1522 = vadd.f32 %v1046, %v1521
        %1523 = vmatmul.bf16.gmra.mxu0 %v1224
        %v1524 = vpop.f32.mrf.mxu0
        %v1525 = vadd.f32 %v1046, %v1524
        %v1526 = vpop.f32.mrf.mxu0
        %v1527 = vadd.f32 %v1046, %v1526
        %1528 = vmatmul.bf16.gmra.mxu0 %v1227
        %v1529 = vpop.f32.mrf.mxu0
        %v1530 = vadd.f32 %v1046, %v1529
        %v1531 = vpop.f32.mrf.mxu0
        %v1532 = vadd.f32 %v1046, %v1531
        %1533 = vmatmul.bf16.gmra.mxu0 %v1230
        %v1534 = vpop.f32.mrf.mxu0
        %v1535 = vadd.f32 %v1046, %v1534
        %v1536 = vpop.f32.mrf.mxu0
        %v1537 = vadd.f32 %v1046, %v1536
        %1538 = vmatmul.bf16.gmra.mxu0 %v1233
        %v1539 = vpop.f32.mrf.mxu0
        %v1540 = vadd.f32 %v1046, %v1539
        %v1541 = vpop.f32.mrf.mxu0
        %v1542 = vadd.f32 %v1046, %v1541
        %1543 = vmatmul.bf16.gmra.mxu0 %v1236
        %v1544 = vpop.f32.mrf.mxu0
        %v1545 = vadd.f32 %v1046, %v1544
        %v1546 = vpop.f32.mrf.mxu0
        %v1547 = vadd.f32 %v1046, %v1546
        %1548 = vmatmul.bf16.gmra.mxu0 %v1239
        %v1549 = vpop.f32.mrf.mxu0
        %v1550 = vadd.f32 %v1046, %v1549
        %v1551 = vpop.f32.mrf.mxu0
        %v1552 = vadd.f32 %v1046, %v1551
        %1553 = vmatmul.bf16.gmra.mxu0 %v1242
        %v1554 = vpop.f32.mrf.mxu0
        %v1555 = vadd.f32 %v1046, %v1554
        %v1556 = vpop.f32.mrf.mxu0
        %v1557 = vadd.f32 %v1046, %v1556
        %1558 = vmatmul.bf16.gmra.mxu0 %v1245
        %v1559 = vpop.f32.mrf.mxu0
        %v1560 = vadd.f32 %v1046, %v1559
        %v1561 = vpop.f32.mrf.mxu0
        %v1562 = vadd.f32 %v1046, %v1561
        %1563 = vmatmul.bf16.gmra.mxu0 %v1248
        %v1564 = vpop.f32.mrf.mxu0
        %v1565 = vadd.f32 %v1046, %v1564
        %v1566 = vpop.f32.mrf.mxu0
        %v1567 = vadd.f32 %v1046, %v1566
        %1568 = vmatmul.bf16.gmra.mxu0 %v1251
        %v1569 = vpop.f32.mrf.mxu0
        %v1570 = vadd.f32 %v1046, %v1569
        %v1571 = vpop.f32.mrf.mxu0
        %v1572 = vadd.f32 %v1046, %v1571
        %1573 = vmatmul.bf16.gmra.mxu0 %v1254
        %v1574 = vpop.f32.mrf.mxu0
        %v1575 = vadd.f32 %v1046, %v1574
        %v1576 = vpop.f32.mrf.mxu0
        %v1577 = vadd.f32 %v1046, %v1576
        %1578 = vmatmul.bf16.gmra.mxu0 %v1257
        %v1579 = vpop.f32.mrf.mxu0
        %v1580 = vadd.f32 %v1046, %v1579
        %v1581 = vpop.f32.mrf.mxu0
        %v1582 = vadd.f32 %v1046, %v1581
        %1583 = vmatmul.bf16.gmra.mxu0 %v1260
        %v1584 = vpop.f32.mrf.mxu0
        %v1585 = vadd.f32 %v1046, %v1584
        %v1586 = vpop.f32.mrf.mxu0
        %v1587 = vadd.f32 %v1046, %v1586
        %1588 = vmatmul.bf16.gmra.mxu0 %v1263
        %v1589 = vpop.f32.mrf.mxu0
        %v1590 = vadd.f32 %v1046, %v1589
        %v1591 = vpop.f32.mrf.mxu0
        %v1592 = vadd.f32 %v1046, %v1591
        %1593 = vdwg.mxu0
        %v1594 = vmax.f32 %v1275, 0.0
        %v1595 = vmax.f32 %v1277, 0.0
        %v1596 = vmax.f32 %v1280, 0.0
        %v1597 = vmax.f32 %v1282, 0.0
        %v1598 = vmax.f32 %v1285, 0.0
        %v1599 = vmax.f32 %v1287, 0.0
        %v1600 = vmax.f32 %v1290, 0.0
        %v1601 = vmax.f32 %v1292, 0.0
        %v1602 = vmax.f32 %v1295, 0.0
        %v1603 = vmax.f32 %v1297, 0.0
        %v1604 = vmax.f32 %v1300, 0.0
        %v1605 = vmax.f32 %v1302, 0.0
        %v1606 = vmax.f32 %v1305, 0.0
        %v1607 = vmax.f32 %v1307, 0.0
        %v1608 = vmax.f32 %v1310, 0.0
        %v1609 = vmax.f32 %v1312, 0.0
        %v1610 = vmax.f32 %v1315, 0.0
        %v1611 = vmax.f32 %v1317, 0.0
        %v1612 = vmax.f32 %v1320, 0.0
        %v1613 = vmax.f32 %v1322, 0.0
        %v1614 = vmax.f32 %v1325, 0.0
        %v1615 = vmax.f32 %v1327, 0.0
        %v1616 = vmax.f32 %v1330, 0.0
        %v1617 = vmax.f32 %v1332, 0.0
        %v1618 = vmax.f32 %v1335, 0.0
        %v1619 = vmax.f32 %v1337, 0.0
        %v1620 = vmax.f32 %v1340, 0.0
        %v1621 = vmax.f32 %v1342, 0.0
        %v1622 = vmax.f32 %v1345, 0.0
        %v1623 = vmax.f32 %v1347, 0.0
        %v1624 = vmax.f32 %v1350, 0.0
        %v1625 = vmax.f32 %v1352, 0.0
        %v1626 = vmax.f32 %v1355, 0.0
        %v1627 = vmax.f32 %v1357, 0.0
        %v1628 = vmax.f32 %v1360, 0.0
        %v1629 = vmax.f32 %v1362, 0.0
        %v1630 = vmax.f32 %v1365, 0.0
        %v1631 = vmax.f32 %v1367, 0.0
        %v1632 = vmax.f32 %v1370, 0.0
        %v1633 = vmax.f32 %v1372, 0.0
        %v1634 = vmax.f32 %v1375, 0.0
        %v1635 = vmax.f32 %v1377, 0.0
        %v1636 = vmax.f32 %v1380, 0.0
        %v1637 = vmax.f32 %v1382, 0.0
        %v1638 = vmax.f32 %v1385, 0.0
        %v1639 = vmax.f32 %v1387, 0.0
        %v1640 = vmax.f32 %v1390, 0.0
        %v1641 = vmax.f32 %v1392, 0.0
        %v1642 = vmax.f32 %v1395, 0.0
        %v1643 = vmax.f32 %v1397, 0.0
        %v1644 = vmax.f32 %v1400, 0.0
        %v1645 = vmax.f32 %v1402, 0.0
        %v1646 = vmax.f32 %v1405, 0.0
        %v1647 = vmax.f32 %v1407, 0.0
        %v1648 = vmax.f32 %v1410, 0.0
        %v1649 = vmax.f32 %v1412, 0.0
        %v1650 = vmax.f32 %v1415, 0.0
        %v1651 = vmax.f32 %v1417, 0.0
        %v1652 = vmax.f32 %v1420, 0.0
        %v1653 = vmax.f32 %v1422, 0.0
        %v1654 = vmax.f32 %v1425, 0.0
        %v1655 = vmax.f32 %v1427, 0.0
        %v1656 = vmax.f32 %v1430, 0.0
        %v1657 = vmax.f32 %v1432, 0.0
        %v1658 = vmax.f32 %v1435, 0.0
        %v1659 = vmax.f32 %v1437, 0.0
        %v1660 = vmax.f32 %v1440, 0.0
        %v1661 = vmax.f32 %v1442, 0.0
        %v1662 = vmax.f32 %v1445, 0.0
        %v1663 = vmax.f32 %v1447, 0.0
        %v1664 = vmax.f32 %v1450, 0.0
        %v1665 = vmax.f32 %v1452, 0.0
        %v1666 = vmax.f32 %v1455, 0.0
        %v1667 = vmax.f32 %v1457, 0.0
        %v1668 = vmax.f32 %v1460, 0.0
        %v1669 = vmax.f32 %v1462, 0.0
        %v1670 = vmax.f32 %v1465, 0.0
        %v1671 = vmax.f32 %v1467, 0.0
        %v1672 = vmax.f32 %v1470, 0.0
        %v1673 = vmax.f32 %v1472, 0.0
        %v1674 = vmax.f32 %v1475, 0.0
        %v1675 = vmax.f32 %v1477, 0.0
        %v1676 = vmax.f32 %v1480, 0.0
        %v1677 = vmax.f32 %v1482, 0.0
        %v1678 = vmax.f32 %v1485, 0.0
        %v1679 = vmax.f32 %v1487, 0.0
        %v1680 = vmax.f32 %v1490, 0.0
        %v1681 = vmax.f32 %v1492, 0.0
        %v1682 = vmax.f32 %v1495, 0.0
        %v1683 = vmax.f32 %v1497, 0.0
        %v1684 = vmax.f32 %v1500, 0.0
        %v1685 = vmax.f32 %v1502, 0.0
        %v1686 = vmax.f32 %v1505, 0.0
        %v1687 = vmax.f32 %v1507, 0.0
        %v1688 = vmax.f32 %v1510, 0.0
        %v1689 = vmax.f32 %v1512, 0.0
        %v1690 = vmax.f32 %v1515, 0.0
        %v1691 = vmax.f32 %v1517, 0.0
        %v1692 = vmax.f32 %v1520, 0.0
        %v1693 = vmax.f32 %v1522, 0.0
        %v1694 = vmax.f32 %v1525, 0.0
        %v1695 = vmax.f32 %v1527, 0.0
        %v1696 = vmax.f32 %v1530, 0.0
        %v1697 = vmax.f32 %v1532, 0.0
        %v1698 = vmax.f32 %v1535, 0.0
        %v1699 = vmax.f32 %v1537, 0.0
        %v1700 = vmax.f32 %v1540, 0.0
        %v1701 = vmax.f32 %v1542, 0.0
        %v1702 = vmax.f32 %v1545, 0.0
        %v1703 = vmax.f32 %v1547, 0.0
        %v1704 = vmax.f32 %v1550, 0.0
        %v1705 = vmax.f32 %v1552, 0.0
        %v1706 = vmax.f32 %v1555, 0.0
        %v1707 = vmax.f32 %v1557, 0.0
        %v1708 = vmax.f32 %v1560, 0.0
        %v1709 = vmax.f32 %v1562, 0.0
        %v1710 = vmax.f32 %v1565, 0.0
        %v1711 = vmax.f32 %v1567, 0.0
        %v1712 = vmax.f32 %v1570, 0.0
        %v1713 = vmax.f32 %v1572, 0.0
        %v1714 = vmax.f32 %v1575, 0.0
        %v1715 = vmax.f32 %v1577, 0.0
        %v1716 = vmax.f32 %v1580, 0.0
        %v1717 = vmax.f32 %v1582, 0.0
        %v1718 = vmax.f32 %v1585, 0.0
        %v1719 = vmax.f32 %v1587, 0.0
        %v1720 = vmax.f32 %v1590, 0.0
        %v1721 = vmax.f32 %v1592, 0.0
        %v1722 = vpack.c.bf16 %v1595, %v1594
        %v1723 = vpack.c.bf16 %v1597, %v1596
        %v1724 = vpack.c.bf16 %v1599, %v1598
        %v1725 = vpack.c.bf16 %v1601, %v1600
        %v1726 = vpack.c.bf16 %v1603, %v1602
        %v1727 = vpack.c.bf16 %v1605, %v1604
        %v1728 = vpack.c.bf16 %v1607, %v1606
        %v1729 = vpack.c.bf16 %v1609, %v1608
        %v1730 = vpack.c.bf16 %v1611, %v1610
        %v1731 = vpack.c.bf16 %v1613, %v1612
        %v1732 = vpack.c.bf16 %v1615, %v1614
        %v1733 = vpack.c.bf16 %v1617, %v1616
        %v1734 = vpack.c.bf16 %v1619, %v1618
        %v1735 = vpack.c.bf16 %v1621, %v1620
        %v1736 = vpack.c.bf16 %v1623, %v1622
        %v1737 = vpack.c.bf16 %v1625, %v1624
        %v1738 = vpack.c.bf16 %v1627, %v1626
        %v1739 = vpack.c.bf16 %v1629, %v1628
        %v1740 = vpack.c.bf16 %v1631, %v1630
        %v1741 = vpack.c.bf16 %v1633, %v1632
        %v1742 = vpack.c.bf16 %v1635, %v1634
        %v1743 = vpack.c.bf16 %v1637, %v1636
        %v1744 = vpack.c.bf16 %v1639, %v1638
        %v1745 = vpack.c.bf16 %v1641, %v1640
        %v1746 = vpack.c.bf16 %v1643, %v1642
        %v1747 = vpack.c.bf16 %v1645, %v1644
        %v1748 = vpack.c.bf16 %v1647, %v1646
        %v1749 = vpack.c.bf16 %v1649, %v1648
        %v1750 = vpack.c.bf16 %v1651, %v1650
        %v1751 = vpack.c.bf16 %v1653, %v1652
        %v1752 = vpack.c.bf16 %v1655, %v1654
        %v1753 = vpack.c.bf16 %v1657, %v1656
        %v1754 = vpack.c.bf16 %v1659, %v1658
        %v1755 = vpack.c.bf16 %v1661, %v1660
        %v1756 = vpack.c.bf16 %v1663, %v1662
        %v1757 = vpack.c.bf16 %v1665, %v1664
        %v1758 = vpack.c.bf16 %v1667, %v1666
        %v1759 = vpack.c.bf16 %v1669, %v1668
        %v1760 = vpack.c.bf16 %v1671, %v1670
        %v1761 = vpack.c.bf16 %v1673, %v1672
        %v1762 = vpack.c.bf16 %v1675, %v1674
        %v1763 = vpack.c.bf16 %v1677, %v1676
        %v1764 = vpack.c.bf16 %v1679, %v1678
        %v1765 = vpack.c.bf16 %v1681, %v1680
        %v1766 = vpack.c.bf16 %v1683, %v1682
        %v1767 = vpack.c.bf16 %v1685, %v1684
        %v1768 = vpack.c.bf16 %v1687, %v1686
        %v1769 = vpack.c.bf16 %v1689, %v1688
        %v1770 = vpack.c.bf16 %v1691, %v1690
        %v1771 = vpack.c.bf16 %v1693, %v1692
        %v1772 = vpack.c.bf16 %v1695, %v1694
        %v1773 = vpack.c.bf16 %v1697, %v1696
        %v1774 = vpack.c.bf16 %v1699, %v1698
        %v1775 = vpack.c.bf16 %v1701, %v1700
        %v1776 = vpack.c.bf16 %v1703, %v1702
        %v1777 = vpack.c.bf16 %v1705, %v1704
        %v1778 = vpack.c.bf16 %v1707, %v1706
        %v1779 = vpack.c.bf16 %v1709, %v1708
        %v1780 = vpack.c.bf16 %v1711, %v1710
        %v1781 = vpack.c.bf16 %v1713, %v1712
        %v1782 = vpack.c.bf16 %v1715, %v1714
        %v1783 = vpack.c.bf16 %v1717, %v1716
        %v1784 = vpack.c.bf16 %v1719, %v1718
        %v1785 = vpack.c.bf16 %v1721, %v1720
        %v1786 = vld [vmem:[%s4] sm:$0xf]
        %v1787 = vld [vmem:[%s4 + $0x4] sm:$0xf]
        %v1788 = vld [vmem:[%s4 + $0x8] sm:$0xf]
        %v1789 = vld [vmem:[%s4 + $0xc] sm:$0xf]
        %v1790 = vld [vmem:[%s4 + $0x10] sm:$0xf]
        %v1791 = vld [vmem:[%s4 + $0x14] sm:$0xf]
        %v1792 = vld [vmem:[%s4 + $0x18] sm:$0xf]
        %v1793 = vld [vmem:[%s4 + $0x1c] sm:$0xf]
        %v1794 = vld [vmem:[%s5] sm:$0x1]
        %v1796 = vperm.slane %v1794, 0
        %v1806 = vunpack.c.l.b16 %v1786
        %v1807 = vunpack.c.l.b16 %v1787
        %v1808 = vunpack.c.l.b16 %v1788
        %v1809 = vunpack.c.l.b16 %v1789
        %v1810 = vunpack.c.l.b16 %v1790
        %v1811 = vunpack.c.l.b16 %v1791
        %v1812 = vunpack.c.l.b16 %v1792
        %v1813 = vunpack.c.l.b16 %v1793
        %v1814 = vpack.c.b16 %v1807, %v1806
        %v1815 = vpack.c.b16 %v1809, %v1808
        %v1816 = vpack.c.b16 %v1811, %v1810
        %v1817 = vpack.c.b16 %v1813, %v1812
        %v1823 = vsel %vm1072, %v1722, 0
        %v1826 = vsel %vm1072, %v1723, 0
        %v1829 = vsel %vm1072, %v1724, 0
        %v1832 = vsel %vm1072, %v1725, 0
        %v1835 = vsel %vm1072, %v1726, 0
        %v1838 = vsel %vm1072, %v1727, 0
        %v1841 = vsel %vm1072, %v1728, 0
        %v1844 = vsel %vm1072, %v1729, 0
        %v1847 = vsel %vm1072, %v1730, 0
        %v1850 = vsel %vm1072, %v1731, 0
        %v1853 = vsel %vm1072, %v1732, 0
        %v1856 = vsel %vm1072, %v1733, 0
        %v1859 = vsel %vm1072, %v1734, 0
        %v1862 = vsel %vm1072, %v1735, 0
        %v1865 = vsel %vm1072, %v1736, 0
        %v1868 = vsel %vm1072, %v1737, 0
        %v1871 = vsel %vm1072, %v1738, 0
        %v1874 = vsel %vm1072, %v1739, 0
        %v1877 = vsel %vm1072, %v1740, 0
        %v1880 = vsel %vm1072, %v1741, 0
        %v1883 = vsel %vm1072, %v1742, 0
        %v1886 = vsel %vm1072, %v1743, 0
        %v1889 = vsel %vm1072, %v1744, 0
        %v1892 = vsel %vm1072, %v1745, 0
        %v1895 = vsel %vm1072, %v1746, 0
        %v1898 = vsel %vm1072, %v1747, 0
        %v1901 = vsel %vm1072, %v1748, 0
        %v1904 = vsel %vm1072, %v1749, 0
        %v1907 = vsel %vm1072, %v1750, 0
        %v1910 = vsel %vm1072, %v1751, 0
        %v1913 = vsel %vm1072, %v1752, 0
        %v1916 = vsel %vm1072, %v1753, 0
        %v1919 = vsel %vm1072, %v1754, 0
        %v1922 = vsel %vm1072, %v1755, 0
        %v1925 = vsel %vm1072, %v1756, 0
        %v1928 = vsel %vm1072, %v1757, 0
        %v1931 = vsel %vm1072, %v1758, 0
        %v1934 = vsel %vm1072, %v1759, 0
        %v1937 = vsel %vm1072, %v1760, 0
        %v1940 = vsel %vm1072, %v1761, 0
        %v1943 = vsel %vm1072, %v1762, 0
        %v1946 = vsel %vm1072, %v1763, 0
        %v1949 = vsel %vm1072, %v1764, 0
        %v1952 = vsel %vm1072, %v1765, 0
        %v1955 = vsel %vm1072, %v1766, 0
        %v1958 = vsel %vm1072, %v1767, 0
        %v1961 = vsel %vm1072, %v1768, 0
        %v1964 = vsel %vm1072, %v1769, 0
        %v1967 = vsel %vm1072, %v1770, 0
        %v1970 = vsel %vm1072, %v1771, 0
        %v1973 = vsel %vm1072, %v1772, 0
        %v1976 = vsel %vm1072, %v1773, 0
        %v1979 = vsel %vm1072, %v1774, 0
        %v1982 = vsel %vm1072, %v1775, 0
        %v1985 = vsel %vm1072, %v1776, 0
        %v1988 = vsel %vm1072, %v1777, 0
        %v1991 = vsel %vm1072, %v1778, 0
        %v1994 = vsel %vm1072, %v1779, 0
        %v1997 = vsel %vm1072, %v1780, 0
        %v2000 = vsel %vm1072, %v1781, 0
        %v2003 = vsel %vm1072, %v1782, 0
        %v2006 = vsel %vm1072, %v1783, 0
        %v2009 = vsel %vm1072, %v1784, 0
        %v2012 = vsel %vm1072, %v1785, 0
        %2014 = vmatpush.bf16.msra.mxu0 0
        %2015 = vmatpush.bf16.msra.mxu0 0
        %2016 = vmatpush.bf16.msra.mxu0 0
        %2017 = vmatpush.bf16.msra.mxu0 0
        %2018 = vmatpush.bf16.msra.mxu0 %v1817
        %2019 = vmatpush.bf16.msra.mxu0 %v1816
        %2020 = vmatpush.bf16.msra.mxu0 %v1815
        %2021 = vmatpush.bf16.msra.mxu0 %v1814
        %2022 = vmatmul.bf16.gmra.mxu0 %v1823
        %v2023 = vpop.f32.mrf.mxu0
        %v2024 = vadd.f32 %v1796, %v2023
        %v2025 = vpop.f32.mrf.mxu0
        %v2026 = vadd.f32 %v1796, %v2025
        %2027 = vmatmul.bf16.gmra.mxu0 %v1826
        %v2028 = vpop.f32.mrf.mxu0
        %v2029 = vadd.f32 %v1796, %v2028
        %v2030 = vpop.f32.mrf.mxu0
        %v2031 = vadd.f32 %v1796, %v2030
        %2032 = vmatmul.bf16.gmra.mxu0 %v1829
        %v2033 = vpop.f32.mrf.mxu0
        %v2034 = vadd.f32 %v1796, %v2033
        %v2035 = vpop.f32.mrf.mxu0
        %v2036 = vadd.f32 %v1796, %v2035
        %2037 = vmatmul.bf16.gmra.mxu0 %v1832
        %v2038 = vpop.f32.mrf.mxu0
        %v2039 = vadd.f32 %v1796, %v2038
        %v2040 = vpop.f32.mrf.mxu0
        %v2041 = vadd.f32 %v1796, %v2040
        %2042 = vmatmul.bf16.gmra.mxu0 %v1835
        %v2043 = vpop.f32.mrf.mxu0
        %v2044 = vadd.f32 %v1796, %v2043
        %v2045 = vpop.f32.mrf.mxu0
        %v2046 = vadd.f32 %v1796, %v2045
        %2047 = vmatmul.bf16.gmra.mxu0 %v1838
        %v2048 = vpop.f32.mrf.mxu0
        %v2049 = vadd.f32 %v1796, %v2048
        %v2050 = vpop.f32.mrf.mxu0
        %v2051 = vadd.f32 %v1796, %v2050
        %2052 = vmatmul.bf16.gmra.mxu0 %v1841
        %v2053 = vpop.f32.mrf.mxu0
        %v2054 = vadd.f32 %v1796, %v2053
        %v2055 = vpop.f32.mrf.mxu0
        %v2056 = vadd.f32 %v1796, %v2055
        %2057 = vmatmul.bf16.gmra.mxu0 %v1844
        %v2058 = vpop.f32.mrf.mxu0
        %v2059 = vadd.f32 %v1796, %v2058
        %v2060 = vpop.f32.mrf.mxu0
        %v2061 = vadd.f32 %v1796, %v2060
        %2062 = vmatmul.bf16.gmra.mxu0 %v1847
        %v2063 = vpop.f32.mrf.mxu0
        %v2064 = vadd.f32 %v1796, %v2063
        %v2065 = vpop.f32.mrf.mxu0
        %v2066 = vadd.f32 %v1796, %v2065
        %2067 = vmatmul.bf16.gmra.mxu0 %v1850
        %v2068 = vpop.f32.mrf.mxu0
        %v2069 = vadd.f32 %v1796, %v2068
        %v2070 = vpop.f32.mrf.mxu0
        %v2071 = vadd.f32 %v1796, %v2070
        %2072 = vmatmul.bf16.gmra.mxu0 %v1853
        %v2073 = vpop.f32.mrf.mxu0
        %v2074 = vadd.f32 %v1796, %v2073
        %v2075 = vpop.f32.mrf.mxu0
        %v2076 = vadd.f32 %v1796, %v2075
        %2077 = vmatmul.bf16.gmra.mxu0 %v1856
        %v2078 = vpop.f32.mrf.mxu0
        %v2079 = vadd.f32 %v1796, %v2078
        %v2080 = vpop.f32.mrf.mxu0
        %v2081 = vadd.f32 %v1796, %v2080
        %2082 = vmatmul.bf16.gmra.mxu0 %v1859
        %v2083 = vpop.f32.mrf.mxu0
        %v2084 = vadd.f32 %v1796, %v2083
        %v2085 = vpop.f32.mrf.mxu0
        %v2086 = vadd.f32 %v1796, %v2085
        %2087 = vmatmul.bf16.gmra.mxu0 %v1862
        %v2088 = vpop.f32.mrf.mxu0
        %v2089 = vadd.f32 %v1796, %v2088
        %v2090 = vpop.f32.mrf.mxu0
        %v2091 = vadd.f32 %v1796, %v2090
        %2092 = vmatmul.bf16.gmra.mxu0 %v1865
        %v2093 = vpop.f32.mrf.mxu0
        %v2094 = vadd.f32 %v1796, %v2093
        %v2095 = vpop.f32.mrf.mxu0
        %v2096 = vadd.f32 %v1796, %v2095
        %2097 = vmatmul.bf16.gmra.mxu0 %v1868
        %v2098 = vpop.f32.mrf.mxu0
        %v2099 = vadd.f32 %v1796, %v2098
        %v2100 = vpop.f32.mrf.mxu0
        %v2101 = vadd.f32 %v1796, %v2100
        %2102 = vmatmul.bf16.gmra.mxu0 %v1871
        %v2103 = vpop.f32.mrf.mxu0
        %v2104 = vadd.f32 %v1796, %v2103
        %v2105 = vpop.f32.mrf.mxu0
        %v2106 = vadd.f32 %v1796, %v2105
        %2107 = vmatmul.bf16.gmra.mxu0 %v1874
        %v2108 = vpop.f32.mrf.mxu0
        %v2109 = vadd.f32 %v1796, %v2108
        %v2110 = vpop.f32.mrf.mxu0
        %v2111 = vadd.f32 %v1796, %v2110
        %2112 = vmatmul.bf16.gmra.mxu0 %v1877
        %v2113 = vpop.f32.mrf.mxu0
        %v2114 = vadd.f32 %v1796, %v2113
        %v2115 = vpop.f32.mrf.mxu0
        %v2116 = vadd.f32 %v1796, %v2115
        %2117 = vmatmul.bf16.gmra.mxu0 %v1880
        %v2118 = vpop.f32.mrf.mxu0
        %v2119 = vadd.f32 %v1796, %v2118
        %v2120 = vpop.f32.mrf.mxu0
        %v2121 = vadd.f32 %v1796, %v2120
        %2122 = vmatmul.bf16.gmra.mxu0 %v1883
        %v2123 = vpop.f32.mrf.mxu0
        %v2124 = vadd.f32 %v1796, %v2123
        %v2125 = vpop.f32.mrf.mxu0
        %v2126 = vadd.f32 %v1796, %v2125
        %2127 = vmatmul.bf16.gmra.mxu0 %v1886
        %v2128 = vpop.f32.mrf.mxu0
        %v2129 = vadd.f32 %v1796, %v2128
        %v2130 = vpop.f32.mrf.mxu0
        %v2131 = vadd.f32 %v1796, %v2130
        %2132 = vmatmul.bf16.gmra.mxu0 %v1889
        %v2133 = vpop.f32.mrf.mxu0
        %v2134 = vadd.f32 %v1796, %v2133
        %v2135 = vpop.f32.mrf.mxu0
        %v2136 = vadd.f32 %v1796, %v2135
        %2137 = vmatmul.bf16.gmra.mxu0 %v1892
        %v2138 = vpop.f32.mrf.mxu0
        %v2139 = vadd.f32 %v1796, %v2138
        %v2140 = vpop.f32.mrf.mxu0
        %v2141 = vadd.f32 %v1796, %v2140
        %2142 = vmatmul.bf16.gmra.mxu0 %v1895
        %v2143 = vpop.f32.mrf.mxu0
        %v2144 = vadd.f32 %v1796, %v2143
        %v2145 = vpop.f32.mrf.mxu0
        %v2146 = vadd.f32 %v1796, %v2145
        %2147 = vmatmul.bf16.gmra.mxu0 %v1898
        %v2148 = vpop.f32.mrf.mxu0
        %v2149 = vadd.f32 %v1796, %v2148
        %v2150 = vpop.f32.mrf.mxu0
        %v2151 = vadd.f32 %v1796, %v2150
        %2152 = vmatmul.bf16.gmra.mxu0 %v1901
        %v2153 = vpop.f32.mrf.mxu0
        %v2154 = vadd.f32 %v1796, %v2153
        %v2155 = vpop.f32.mrf.mxu0
        %v2156 = vadd.f32 %v1796, %v2155
        %2157 = vmatmul.bf16.gmra.mxu0 %v1904
        %v2158 = vpop.f32.mrf.mxu0
        %v2159 = vadd.f32 %v1796, %v2158
        %v2160 = vpop.f32.mrf.mxu0
        %v2161 = vadd.f32 %v1796, %v2160
        %2162 = vmatmul.bf16.gmra.mxu0 %v1907
        %v2163 = vpop.f32.mrf.mxu0
        %v2164 = vadd.f32 %v1796, %v2163
        %v2165 = vpop.f32.mrf.mxu0
        %v2166 = vadd.f32 %v1796, %v2165
        %2167 = vmatmul.bf16.gmra.mxu0 %v1910
        %v2168 = vpop.f32.mrf.mxu0
        %v2169 = vadd.f32 %v1796, %v2168
        %v2170 = vpop.f32.mrf.mxu0
        %v2171 = vadd.f32 %v1796, %v2170
        %2172 = vmatmul.bf16.gmra.mxu0 %v1913
        %v2173 = vpop.f32.mrf.mxu0
        %v2174 = vadd.f32 %v1796, %v2173
        %v2175 = vpop.f32.mrf.mxu0
        %v2176 = vadd.f32 %v1796, %v2175
        %2177 = vmatmul.bf16.gmra.mxu0 %v1916
        %v2178 = vpop.f32.mrf.mxu0
        %v2179 = vadd.f32 %v1796, %v2178
        %v2180 = vpop.f32.mrf.mxu0
        %v2181 = vadd.f32 %v1796, %v2180
        %2182 = vmatmul.bf16.gmra.mxu0 %v1919
        %v2183 = vpop.f32.mrf.mxu0
        %v2184 = vadd.f32 %v1796, %v2183
        %v2185 = vpop.f32.mrf.mxu0
        %v2186 = vadd.f32 %v1796, %v2185
        %2187 = vmatmul.bf16.gmra.mxu0 %v1922
        %v2188 = vpop.f32.mrf.mxu0
        %v2189 = vadd.f32 %v1796, %v2188
        %v2190 = vpop.f32.mrf.mxu0
        %v2191 = vadd.f32 %v1796, %v2190
        %2192 = vmatmul.bf16.gmra.mxu0 %v1925
        %v2193 = vpop.f32.mrf.mxu0
        %v2194 = vadd.f32 %v1796, %v2193
        %v2195 = vpop.f32.mrf.mxu0
        %v2196 = vadd.f32 %v1796, %v2195
        %2197 = vmatmul.bf16.gmra.mxu0 %v1928
        %v2198 = vpop.f32.mrf.mxu0
        %v2199 = vadd.f32 %v1796, %v2198
        %v2200 = vpop.f32.mrf.mxu0
        %v2201 = vadd.f32 %v1796, %v2200
        %2202 = vmatmul.bf16.gmra.mxu0 %v1931
        %v2203 = vpop.f32.mrf.mxu0
        %v2204 = vadd.f32 %v1796, %v2203
        %v2205 = vpop.f32.mrf.mxu0
        %v2206 = vadd.f32 %v1796, %v2205
        %2207 = vmatmul.bf16.gmra.mxu0 %v1934
        %v2208 = vpop.f32.mrf.mxu0
        %v2209 = vadd.f32 %v1796, %v2208
        %v2210 = vpop.f32.mrf.mxu0
        %v2211 = vadd.f32 %v1796, %v2210
        %2212 = vmatmul.bf16.gmra.mxu0 %v1937
        %v2213 = vpop.f32.mrf.mxu0
        %v2214 = vadd.f32 %v1796, %v2213
        %v2215 = vpop.f32.mrf.mxu0
        %v2216 = vadd.f32 %v1796, %v2215
        %2217 = vmatmul.bf16.gmra.mxu0 %v1940
        %v2218 = vpop.f32.mrf.mxu0
        %v2219 = vadd.f32 %v1796, %v2218
        %v2220 = vpop.f32.mrf.mxu0
        %v2221 = vadd.f32 %v1796, %v2220
        %2222 = vmatmul.bf16.gmra.mxu0 %v1943
        %v2223 = vpop.f32.mrf.mxu0
        %v2224 = vadd.f32 %v1796, %v2223
        %v2225 = vpop.f32.mrf.mxu0
        %v2226 = vadd.f32 %v1796, %v2225
        %2227 = vmatmul.bf16.gmra.mxu0 %v1946
        %v2228 = vpop.f32.mrf.mxu0
        %v2229 = vadd.f32 %v1796, %v2228
        %v2230 = vpop.f32.mrf.mxu0
        %v2231 = vadd.f32 %v1796, %v2230
        %2232 = vmatmul.bf16.gmra.mxu0 %v1949
        %v2233 = vpop.f32.mrf.mxu0
        %v2234 = vadd.f32 %v1796, %v2233
        %v2235 = vpop.f32.mrf.mxu0
        %v2236 = vadd.f32 %v1796, %v2235
        %2237 = vmatmul.bf16.gmra.mxu0 %v1952
        %v2238 = vpop.f32.mrf.mxu0
        %v2239 = vadd.f32 %v1796, %v2238
        %v2240 = vpop.f32.mrf.mxu0
        %v2241 = vadd.f32 %v1796, %v2240
        %2242 = vmatmul.bf16.gmra.mxu0 %v1955
        %v2243 = vpop.f32.mrf.mxu0
        %v2244 = vadd.f32 %v1796, %v2243
        %v2245 = vpop.f32.mrf.mxu0
        %v2246 = vadd.f32 %v1796, %v2245
        %2247 = vmatmul.bf16.gmra.mxu0 %v1958
        %v2248 = vpop.f32.mrf.mxu0
        %v2249 = vadd.f32 %v1796, %v2248
        %v2250 = vpop.f32.mrf.mxu0
        %v2251 = vadd.f32 %v1796, %v2250
        %2252 = vmatmul.bf16.gmra.mxu0 %v1961
        %v2253 = vpop.f32.mrf.mxu0
        %v2254 = vadd.f32 %v1796, %v2253
        %v2255 = vpop.f32.mrf.mxu0
        %v2256 = vadd.f32 %v1796, %v2255
        %2257 = vmatmul.bf16.gmra.mxu0 %v1964
        %v2258 = vpop.f32.mrf.mxu0
        %v2259 = vadd.f32 %v1796, %v2258
        %v2260 = vpop.f32.mrf.mxu0
        %v2261 = vadd.f32 %v1796, %v2260
        %2262 = vmatmul.bf16.gmra.mxu0 %v1967
        %v2263 = vpop.f32.mrf.mxu0
        %v2264 = vadd.f32 %v1796, %v2263
        %v2265 = vpop.f32.mrf.mxu0
        %v2266 = vadd.f32 %v1796, %v2265
        %2267 = vmatmul.bf16.gmra.mxu0 %v1970
        %v2268 = vpop.f32.mrf.mxu0
        %v2269 = vadd.f32 %v1796, %v2268
        %v2270 = vpop.f32.mrf.mxu0
        %v2271 = vadd.f32 %v1796, %v2270
        %2272 = vmatmul.bf16.gmra.mxu0 %v1973
        %v2273 = vpop.f32.mrf.mxu0
        %v2274 = vadd.f32 %v1796, %v2273
        %v2275 = vpop.f32.mrf.mxu0
        %v2276 = vadd.f32 %v1796, %v2275
        %2277 = vmatmul.bf16.gmra.mxu0 %v1976
        %v2278 = vpop.f32.mrf.mxu0
        %v2279 = vadd.f32 %v1796, %v2278
        %v2280 = vpop.f32.mrf.mxu0
        %v2281 = vadd.f32 %v1796, %v2280
        %2282 = vmatmul.bf16.gmra.mxu0 %v1979
        %v2283 = vpop.f32.mrf.mxu0
        %v2284 = vadd.f32 %v1796, %v2283
        %v2285 = vpop.f32.mrf.mxu0
        %v2286 = vadd.f32 %v1796, %v2285
        %2287 = vmatmul.bf16.gmra.mxu0 %v1982
        %v2288 = vpop.f32.mrf.mxu0
        %v2289 = vadd.f32 %v1796, %v2288
        %v2290 = vpop.f32.mrf.mxu0
        %v2291 = vadd.f32 %v1796, %v2290
        %2292 = vmatmul.bf16.gmra.mxu0 %v1985
        %v2293 = vpop.f32.mrf.mxu0
        %v2294 = vadd.f32 %v1796, %v2293
        %v2295 = vpop.f32.mrf.mxu0
        %v2296 = vadd.f32 %v1796, %v2295
        %2297 = vmatmul.bf16.gmra.mxu0 %v1988
        %v2298 = vpop.f32.mrf.mxu0
        %v2299 = vadd.f32 %v1796, %v2298
        %v2300 = vpop.f32.mrf.mxu0
        %v2301 = vadd.f32 %v1796, %v2300
        %2302 = vmatmul.bf16.gmra.mxu0 %v1991
        %v2303 = vpop.f32.mrf.mxu0
        %v2304 = vadd.f32 %v1796, %v2303
        %v2305 = vpop.f32.mrf.mxu0
        %v2306 = vadd.f32 %v1796, %v2305
        %2307 = vmatmul.bf16.gmra.mxu0 %v1994
        %v2308 = vpop.f32.mrf.mxu0
        %v2309 = vadd.f32 %v1796, %v2308
        %v2310 = vpop.f32.mrf.mxu0
        %v2311 = vadd.f32 %v1796, %v2310
        %2312 = vmatmul.bf16.gmra.mxu0 %v1997
        %v2313 = vpop.f32.mrf.mxu0
        %v2314 = vadd.f32 %v1796, %v2313
        %v2315 = vpop.f32.mrf.mxu0
        %v2316 = vadd.f32 %v1796, %v2315
        %2317 = vmatmul.bf16.gmra.mxu0 %v2000
        %v2318 = vpop.f32.mrf.mxu0
        %v2319 = vadd.f32 %v1796, %v2318
        %v2320 = vpop.f32.mrf.mxu0
        %v2321 = vadd.f32 %v1796, %v2320
        %2322 = vmatmul.bf16.gmra.mxu0 %v2003
        %v2323 = vpop.f32.mrf.mxu0
        %v2324 = vadd.f32 %v1796, %v2323
        %v2325 = vpop.f32.mrf.mxu0
        %v2326 = vadd.f32 %v1796, %v2325
        %2327 = vmatmul.bf16.gmra.mxu0 %v2006
        %v2328 = vpop.f32.mrf.mxu0
        %v2329 = vadd.f32 %v1796, %v2328
        %v2330 = vpop.f32.mrf.mxu0
        %v2331 = vadd.f32 %v1796, %v2330
        %2332 = vmatmul.bf16.gmra.mxu0 %v2009
        %v2333 = vpop.f32.mrf.mxu0
        %v2334 = vadd.f32 %v1796, %v2333
        %v2335 = vpop.f32.mrf.mxu0
        %v2336 = vadd.f32 %v1796, %v2335
        %2337 = vmatmul.bf16.gmra.mxu0 %v2012
        %v2338 = vpop.f32.mrf.mxu0
        %v2339 = vadd.f32 %v1796, %v2338
        %v2340 = vpop.f32.mrf.mxu0
        %v2341 = vadd.f32 %v1796, %v2340
        %2342 = vdwg.mxu0
        %v2343 = vmax.f32 %v2024, 0.0
        %v2344 = vmax.f32 %v2026, 0.0
        %v2345 = vmax.f32 %v2029, 0.0
        %v2346 = vmax.f32 %v2031, 0.0
        %v2347 = vmax.f32 %v2034, 0.0
        %v2348 = vmax.f32 %v2036, 0.0
        %v2349 = vmax.f32 %v2039, 0.0
        %v2350 = vmax.f32 %v2041, 0.0
        %v2351 = vmax.f32 %v2044, 0.0
        %v2352 = vmax.f32 %v2046, 0.0
        %v2353 = vmax.f32 %v2049, 0.0
        %v2354 = vmax.f32 %v2051, 0.0
        %v2355 = vmax.f32 %v2054, 0.0
        %v2356 = vmax.f32 %v2056, 0.0
        %v2357 = vmax.f32 %v2059, 0.0
        %v2358 = vmax.f32 %v2061, 0.0
        %v2359 = vmax.f32 %v2064, 0.0
        %v2360 = vmax.f32 %v2066, 0.0
        %v2361 = vmax.f32 %v2069, 0.0
        %v2362 = vmax.f32 %v2071, 0.0
        %v2363 = vmax.f32 %v2074, 0.0
        %v2364 = vmax.f32 %v2076, 0.0
        %v2365 = vmax.f32 %v2079, 0.0
        %v2366 = vmax.f32 %v2081, 0.0
        %v2367 = vmax.f32 %v2084, 0.0
        %v2368 = vmax.f32 %v2086, 0.0
        %v2369 = vmax.f32 %v2089, 0.0
        %v2370 = vmax.f32 %v2091, 0.0
        %v2371 = vmax.f32 %v2094, 0.0
        %v2372 = vmax.f32 %v2096, 0.0
        %v2373 = vmax.f32 %v2099, 0.0
        %v2374 = vmax.f32 %v2101, 0.0
        %v2375 = vmax.f32 %v2104, 0.0
        %v2376 = vmax.f32 %v2106, 0.0
        %v2377 = vmax.f32 %v2109, 0.0
        %v2378 = vmax.f32 %v2111, 0.0
        %v2379 = vmax.f32 %v2114, 0.0
        %v2380 = vmax.f32 %v2116, 0.0
        %v2381 = vmax.f32 %v2119, 0.0
        %v2382 = vmax.f32 %v2121, 0.0
        %v2383 = vmax.f32 %v2124, 0.0
        %v2384 = vmax.f32 %v2126, 0.0
        %v2385 = vmax.f32 %v2129, 0.0
        %v2386 = vmax.f32 %v2131, 0.0
        %v2387 = vmax.f32 %v2134, 0.0
        %v2388 = vmax.f32 %v2136, 0.0
        %v2389 = vmax.f32 %v2139, 0.0
        %v2390 = vmax.f32 %v2141, 0.0
        %v2391 = vmax.f32 %v2144, 0.0
        %v2392 = vmax.f32 %v2146, 0.0
        %v2393 = vmax.f32 %v2149, 0.0
        %v2394 = vmax.f32 %v2151, 0.0
        %v2395 = vmax.f32 %v2154, 0.0
        %v2396 = vmax.f32 %v2156, 0.0
        %v2397 = vmax.f32 %v2159, 0.0
        %v2398 = vmax.f32 %v2161, 0.0
        %v2399 = vmax.f32 %v2164, 0.0
        %v2400 = vmax.f32 %v2166, 0.0
        %v2401 = vmax.f32 %v2169, 0.0
        %v2402 = vmax.f32 %v2171, 0.0
        %v2403 = vmax.f32 %v2174, 0.0
        %v2404 = vmax.f32 %v2176, 0.0
        %v2405 = vmax.f32 %v2179, 0.0
        %v2406 = vmax.f32 %v2181, 0.0
        %v2407 = vmax.f32 %v2184, 0.0
        %v2408 = vmax.f32 %v2186, 0.0
        %v2409 = vmax.f32 %v2189, 0.0
        %v2410 = vmax.f32 %v2191, 0.0
        %v2411 = vmax.f32 %v2194, 0.0
        %v2412 = vmax.f32 %v2196, 0.0
        %v2413 = vmax.f32 %v2199, 0.0
        %v2414 = vmax.f32 %v2201, 0.0
        %v2415 = vmax.f32 %v2204, 0.0
        %v2416 = vmax.f32 %v2206, 0.0
        %v2417 = vmax.f32 %v2209, 0.0
        %v2418 = vmax.f32 %v2211, 0.0
        %v2419 = vmax.f32 %v2214, 0.0
        %v2420 = vmax.f32 %v2216, 0.0
        %v2421 = vmax.f32 %v2219, 0.0
        %v2422 = vmax.f32 %v2221, 0.0
        %v2423 = vmax.f32 %v2224, 0.0
        %v2424 = vmax.f32 %v2226, 0.0
        %v2425 = vmax.f32 %v2229, 0.0
        %v2426 = vmax.f32 %v2231, 0.0
        %v2427 = vmax.f32 %v2234, 0.0
        %v2428 = vmax.f32 %v2236, 0.0
        %v2429 = vmax.f32 %v2239, 0.0
        %v2430 = vmax.f32 %v2241, 0.0
        %v2431 = vmax.f32 %v2244, 0.0
        %v2432 = vmax.f32 %v2246, 0.0
        %v2433 = vmax.f32 %v2249, 0.0
        %v2434 = vmax.f32 %v2251, 0.0
        %v2435 = vmax.f32 %v2254, 0.0
        %v2436 = vmax.f32 %v2256, 0.0
        %v2437 = vmax.f32 %v2259, 0.0
        %v2438 = vmax.f32 %v2261, 0.0
        %v2439 = vmax.f32 %v2264, 0.0
        %v2440 = vmax.f32 %v2266, 0.0
        %v2441 = vmax.f32 %v2269, 0.0
        %v2442 = vmax.f32 %v2271, 0.0
        %v2443 = vmax.f32 %v2274, 0.0
        %v2444 = vmax.f32 %v2276, 0.0
        %v2445 = vmax.f32 %v2279, 0.0
        %v2446 = vmax.f32 %v2281, 0.0
        %v2447 = vmax.f32 %v2284, 0.0
        %v2448 = vmax.f32 %v2286, 0.0
        %v2449 = vmax.f32 %v2289, 0.0
        %v2450 = vmax.f32 %v2291, 0.0
        %v2451 = vmax.f32 %v2294, 0.0
        %v2452 = vmax.f32 %v2296, 0.0
        %v2453 = vmax.f32 %v2299, 0.0
        %v2454 = vmax.f32 %v2301, 0.0
        %v2455 = vmax.f32 %v2304, 0.0
        %v2456 = vmax.f32 %v2306, 0.0
        %v2457 = vmax.f32 %v2309, 0.0
        %v2458 = vmax.f32 %v2311, 0.0
        %v2459 = vmax.f32 %v2314, 0.0
        %v2460 = vmax.f32 %v2316, 0.0
        %v2461 = vmax.f32 %v2319, 0.0
        %v2462 = vmax.f32 %v2321, 0.0
        %v2463 = vmax.f32 %v2324, 0.0
        %v2464 = vmax.f32 %v2326, 0.0
        %v2465 = vmax.f32 %v2329, 0.0
        %v2466 = vmax.f32 %v2331, 0.0
        %v2467 = vmax.f32 %v2334, 0.0
        %v2468 = vmax.f32 %v2336, 0.0
        %v2469 = vmax.f32 %v2339, 0.0
        %v2470 = vmax.f32 %v2341, 0.0
        %v2471 = vpack.c.bf16 %v2344, %v2343
        %v2472 = vpack.c.bf16 %v2346, %v2345
        %v2473 = vpack.c.bf16 %v2348, %v2347
        %v2474 = vpack.c.bf16 %v2350, %v2349
        %v2475 = vpack.c.bf16 %v2352, %v2351
        %v2476 = vpack.c.bf16 %v2354, %v2353
        %v2477 = vpack.c.bf16 %v2356, %v2355
        %v2478 = vpack.c.bf16 %v2358, %v2357
        %v2479 = vpack.c.bf16 %v2360, %v2359
        %v2480 = vpack.c.bf16 %v2362, %v2361
        %v2481 = vpack.c.bf16 %v2364, %v2363
        %v2482 = vpack.c.bf16 %v2366, %v2365
        %v2483 = vpack.c.bf16 %v2368, %v2367
        %v2484 = vpack.c.bf16 %v2370, %v2369
        %v2485 = vpack.c.bf16 %v2372, %v2371
        %v2486 = vpack.c.bf16 %v2374, %v2373
        %v2487 = vpack.c.bf16 %v2376, %v2375
        %v2488 = vpack.c.bf16 %v2378, %v2377
        %v2489 = vpack.c.bf16 %v2380, %v2379
        %v2490 = vpack.c.bf16 %v2382, %v2381
        %v2491 = vpack.c.bf16 %v2384, %v2383
        %v2492 = vpack.c.bf16 %v2386, %v2385
        %v2493 = vpack.c.bf16 %v2388, %v2387
        %v2494 = vpack.c.bf16 %v2390, %v2389
        %v2495 = vpack.c.bf16 %v2392, %v2391
        %v2496 = vpack.c.bf16 %v2394, %v2393
        %v2497 = vpack.c.bf16 %v2396, %v2395
        %v2498 = vpack.c.bf16 %v2398, %v2397
        %v2499 = vpack.c.bf16 %v2400, %v2399
        %v2500 = vpack.c.bf16 %v2402, %v2401
        %v2501 = vpack.c.bf16 %v2404, %v2403
        %v2502 = vpack.c.bf16 %v2406, %v2405
        %v2503 = vpack.c.bf16 %v2408, %v2407
        %v2504 = vpack.c.bf16 %v2410, %v2409
        %v2505 = vpack.c.bf16 %v2412, %v2411
        %v2506 = vpack.c.bf16 %v2414, %v2413
        %v2507 = vpack.c.bf16 %v2416, %v2415
        %v2508 = vpack.c.bf16 %v2418, %v2417
        %v2509 = vpack.c.bf16 %v2420, %v2419
        %v2510 = vpack.c.bf16 %v2422, %v2421
        %v2511 = vpack.c.bf16 %v2424, %v2423
        %v2512 = vpack.c.bf16 %v2426, %v2425
        %v2513 = vpack.c.bf16 %v2428, %v2427
        %v2514 = vpack.c.bf16 %v2430, %v2429
        %v2515 = vpack.c.bf16 %v2432, %v2431
        %v2516 = vpack.c.bf16 %v2434, %v2433
        %v2517 = vpack.c.bf16 %v2436, %v2435
        %v2518 = vpack.c.bf16 %v2438, %v2437
        %v2519 = vpack.c.bf16 %v2440, %v2439
        %v2520 = vpack.c.bf16 %v2442, %v2441
        %v2521 = vpack.c.bf16 %v2444, %v2443
        %v2522 = vpack.c.bf16 %v2446, %v2445
        %v2523 = vpack.c.bf16 %v2448, %v2447
        %v2524 = vpack.c.bf16 %v2450, %v2449
        %v2525 = vpack.c.bf16 %v2452, %v2451
        %v2526 = vpack.c.bf16 %v2454, %v2453
        %v2527 = vpack.c.bf16 %v2456, %v2455
        %v2528 = vpack.c.bf16 %v2458, %v2457
        %v2529 = vpack.c.bf16 %v2460, %v2459
        %v2530 = vpack.c.bf16 %v2462, %v2461
        %v2531 = vpack.c.bf16 %v2464, %v2463
        %v2532 = vpack.c.bf16 %v2466, %v2465
        %v2533 = vpack.c.bf16 %v2468, %v2467
        %v2534 = vpack.c.bf16 %v2470, %v2469
        %v2535 = vld [vmem:[%s6] sm:$0xf]
        %v2536 = vld [vmem:[%s6 + $0x4] sm:$0xf]
        %v2537 = vld [vmem:[%s6 + $0x8] sm:$0xf]
        %v2538 = vld [vmem:[%s6 + $0xc] sm:$0xf]
        %v2539 = vld [vmem:[%s6 + $0x10] sm:$0xf]
        %v2540 = vld [vmem:[%s6 + $0x14] sm:$0xf]
        %v2541 = vld [vmem:[%s6 + $0x18] sm:$0xf]
        %v2542 = vld [vmem:[%s6 + $0x1c] sm:$0xf]
        %v2543 = vld [vmem:[#allocation2] sm:$0x1]
        %v2545 = vperm.slane %v2543, 0
        %v2555 = vunpack.c.l.b16 %v2535
        %v2556 = vunpack.c.l.b16 %v2536
        %v2557 = vunpack.c.l.b16 %v2537
        %v2558 = vunpack.c.l.b16 %v2538
        %v2559 = vunpack.c.l.b16 %v2539
        %v2560 = vunpack.c.l.b16 %v2540
        %v2561 = vunpack.c.l.b16 %v2541
        %v2562 = vunpack.c.l.b16 %v2542
        %v2563 = vpack.c.b16 %v2556, %v2555
        %v2564 = vpack.c.b16 %v2558, %v2557
        %v2565 = vpack.c.b16 %v2560, %v2559
        %v2566 = vpack.c.b16 %v2562, %v2561
        %v2572 = vsel %vm1072, %v2471, 0
        %v2575 = vsel %vm1072, %v2472, 0
        %v2578 = vsel %vm1072, %v2473, 0
        %v2581 = vsel %vm1072, %v2474, 0
        %v2584 = vsel %vm1072, %v2475, 0
        %v2587 = vsel %vm1072, %v2476, 0
        %v2590 = vsel %vm1072, %v2477, 0
        %v2593 = vsel %vm1072, %v2478, 0
        %v2596 = vsel %vm1072, %v2479, 0
        %v2599 = vsel %vm1072, %v2480, 0
        %v2602 = vsel %vm1072, %v2481, 0
        %v2605 = vsel %vm1072, %v2482, 0
        %v2608 = vsel %vm1072, %v2483, 0
        %v2611 = vsel %vm1072, %v2484, 0
        %v2614 = vsel %vm1072, %v2485, 0
        %v2617 = vsel %vm1072, %v2486, 0
        %v2620 = vsel %vm1072, %v2487, 0
        %v2623 = vsel %vm1072, %v2488, 0
        %v2626 = vsel %vm1072, %v2489, 0
        %v2629 = vsel %vm1072, %v2490, 0
        %v2632 = vsel %vm1072, %v2491, 0
        %v2635 = vsel %vm1072, %v2492, 0
        %v2638 = vsel %vm1072, %v2493, 0
        %v2641 = vsel %vm1072, %v2494, 0
        %v2644 = vsel %vm1072, %v2495, 0
        %v2647 = vsel %vm1072, %v2496, 0
        %v2650 = vsel %vm1072, %v2497, 0
        %v2653 = vsel %vm1072, %v2498, 0
        %v2656 = vsel %vm1072, %v2499, 0
        %v2659 = vsel %vm1072, %v2500, 0
        %v2662 = vsel %vm1072, %v2501, 0
        %v2665 = vsel %vm1072, %v2502, 0
        %v2668 = vsel %vm1072, %v2503, 0
        %v2671 = vsel %vm1072, %v2504, 0
        %v2674 = vsel %vm1072, %v2505, 0
        %v2677 = vsel %vm1072, %v2506, 0
        %v2680 = vsel %vm1072, %v2507, 0
        %v2683 = vsel %vm1072, %v2508, 0
        %v2686 = vsel %vm1072, %v2509, 0
        %v2689 = vsel %vm1072, %v2510, 0
        %v2692 = vsel %vm1072, %v2511, 0
        %v2695 = vsel %vm1072, %v2512, 0
        %v2698 = vsel %vm1072, %v2513, 0
        %v2701 = vsel %vm1072, %v2514, 0
        %v2704 = vsel %vm1072, %v2515, 0
        %v2707 = vsel %vm1072, %v2516, 0
        %v2710 = vsel %vm1072, %v2517, 0
        %v2713 = vsel %vm1072, %v2518, 0
        %v2716 = vsel %vm1072, %v2519, 0
        %v2719 = vsel %vm1072, %v2520, 0
        %v2722 = vsel %vm1072, %v2521, 0
        %v2725 = vsel %vm1072, %v2522, 0
        %v2728 = vsel %vm1072, %v2523, 0
        %v2731 = vsel %vm1072, %v2524, 0
        %v2734 = vsel %vm1072, %v2525, 0
        %v2737 = vsel %vm1072, %v2526, 0
        %v2740 = vsel %vm1072, %v2527, 0
        %v2743 = vsel %vm1072, %v2528, 0
        %v2746 = vsel %vm1072, %v2529, 0
        %v2749 = vsel %vm1072, %v2530, 0
        %v2752 = vsel %vm1072, %v2531, 0
        %v2755 = vsel %vm1072, %v2532, 0
        %v2758 = vsel %vm1072, %v2533, 0
        %v2761 = vsel %vm1072, %v2534, 0
        %2763 = vmatpush.bf16.msra.mxu0 0
        %2764 = vmatpush.bf16.msra.mxu0 0
        %2765 = vmatpush.bf16.msra.mxu0 0
        %2766 = vmatpush.bf16.msra.mxu0 0
        %2767 = vmatpush.bf16.msra.mxu0 %v2566
        %2768 = vmatpush.bf16.msra.mxu0 %v2565
        %2769 = vmatpush.bf16.msra.mxu0 %v2564
        %2770 = vmatpush.bf16.msra.mxu0 %v2563
        %2771 = vmatmul.bf16.gmra.mxu0 %v2572
        %v2772 = vpop.f32.mrf.mxu0
        %v2773 = vadd.f32 %v2545, %v2772
        %v2774 = vpop.f32.mrf.mxu0
        %v2775 = vadd.f32 %v2545, %v2774
        %2776 = vmatmul.bf16.gmra.mxu0 %v2575
        %v2777 = vpop.f32.mrf.mxu0
        %v2778 = vadd.f32 %v2545, %v2777
        %v2779 = vpop.f32.mrf.mxu0
        %v2780 = vadd.f32 %v2545, %v2779
        %2781 = vmatmul.bf16.gmra.mxu0 %v2578
        %v2782 = vpop.f32.mrf.mxu0
        %v2783 = vadd.f32 %v2545, %v2782
        %v2784 = vpop.f32.mrf.mxu0
        %v2785 = vadd.f32 %v2545, %v2784
        %2786 = vmatmul.bf16.gmra.mxu0 %v2581
        %v2787 = vpop.f32.mrf.mxu0
        %v2788 = vadd.f32 %v2545, %v2787
        %v2789 = vpop.f32.mrf.mxu0
        %v2790 = vadd.f32 %v2545, %v2789
        %2791 = vmatmul.bf16.gmra.mxu0 %v2584
        %v2792 = vpop.f32.mrf.mxu0
        %v2793 = vadd.f32 %v2545, %v2792
        %v2794 = vpop.f32.mrf.mxu0
        %v2795 = vadd.f32 %v2545, %v2794
        %2796 = vmatmul.bf16.gmra.mxu0 %v2587
        %v2797 = vpop.f32.mrf.mxu0
        %v2798 = vadd.f32 %v2545, %v2797
        %v2799 = vpop.f32.mrf.mxu0
        %v2800 = vadd.f32 %v2545, %v2799
        %2801 = vmatmul.bf16.gmra.mxu0 %v2590
        %v2802 = vpop.f32.mrf.mxu0
        %v2803 = vadd.f32 %v2545, %v2802
        %v2804 = vpop.f32.mrf.mxu0
        %v2805 = vadd.f32 %v2545, %v2804
        %2806 = vmatmul.bf16.gmra.mxu0 %v2593
        %v2807 = vpop.f32.mrf.mxu0
        %v2808 = vadd.f32 %v2545, %v2807
        %v2809 = vpop.f32.mrf.mxu0
        %v2810 = vadd.f32 %v2545, %v2809
        %2811 = vmatmul.bf16.gmra.mxu0 %v2596
        %v2812 = vpop.f32.mrf.mxu0
        %v2813 = vadd.f32 %v2545, %v2812
        %v2814 = vpop.f32.mrf.mxu0
        %v2815 = vadd.f32 %v2545, %v2814
        %2816 = vmatmul.bf16.gmra.mxu0 %v2599
        %v2817 = vpop.f32.mrf.mxu0
        %v2818 = vadd.f32 %v2545, %v2817
        %v2819 = vpop.f32.mrf.mxu0
        %v2820 = vadd.f32 %v2545, %v2819
        %2821 = vmatmul.bf16.gmra.mxu0 %v2602
        %v2822 = vpop.f32.mrf.mxu0
        %v2823 = vadd.f32 %v2545, %v2822
        %v2824 = vpop.f32.mrf.mxu0
        %v2825 = vadd.f32 %v2545, %v2824
        %2826 = vmatmul.bf16.gmra.mxu0 %v2605
        %v2827 = vpop.f32.mrf.mxu0
        %v2828 = vadd.f32 %v2545, %v2827
        %v2829 = vpop.f32.mrf.mxu0
        %v2830 = vadd.f32 %v2545, %v2829
        %2831 = vmatmul.bf16.gmra.mxu0 %v2608
        %v2832 = vpop.f32.mrf.mxu0
        %v2833 = vadd.f32 %v2545, %v2832
        %v2834 = vpop.f32.mrf.mxu0
        %v2835 = vadd.f32 %v2545, %v2834
        %2836 = vmatmul.bf16.gmra.mxu0 %v2611
        %v2837 = vpop.f32.mrf.mxu0
        %v2838 = vadd.f32 %v2545, %v2837
        %v2839 = vpop.f32.mrf.mxu0
        %v2840 = vadd.f32 %v2545, %v2839
        %2841 = vmatmul.bf16.gmra.mxu0 %v2614
        %v2842 = vpop.f32.mrf.mxu0
        %v2843 = vadd.f32 %v2545, %v2842
        %v2844 = vpop.f32.mrf.mxu0
        %v2845 = vadd.f32 %v2545, %v2844
        %2846 = vmatmul.bf16.gmra.mxu0 %v2617
        %v2847 = vpop.f32.mrf.mxu0
        %v2848 = vadd.f32 %v2545, %v2847
        %v2849 = vpop.f32.mrf.mxu0
        %v2850 = vadd.f32 %v2545, %v2849
        %2851 = vmatmul.bf16.gmra.mxu0 %v2620
        %v2852 = vpop.f32.mrf.mxu0
        %v2853 = vadd.f32 %v2545, %v2852
        %v2854 = vpop.f32.mrf.mxu0
        %v2855 = vadd.f32 %v2545, %v2854
        %2856 = vmatmul.bf16.gmra.mxu0 %v2623
        %v2857 = vpop.f32.mrf.mxu0
        %v2858 = vadd.f32 %v2545, %v2857
        %v2859 = vpop.f32.mrf.mxu0
        %v2860 = vadd.f32 %v2545, %v2859
        %2861 = vmatmul.bf16.gmra.mxu0 %v2626
        %v2862 = vpop.f32.mrf.mxu0
        %v2863 = vadd.f32 %v2545, %v2862
        %v2864 = vpop.f32.mrf.mxu0
        %v2865 = vadd.f32 %v2545, %v2864
        %2866 = vmatmul.bf16.gmra.mxu0 %v2629
        %v2867 = vpop.f32.mrf.mxu0
        %v2868 = vadd.f32 %v2545, %v2867
        %v2869 = vpop.f32.mrf.mxu0
        %v2870 = vadd.f32 %v2545, %v2869
        %2871 = vmatmul.bf16.gmra.mxu0 %v2632
        %v2872 = vpop.f32.mrf.mxu0
        %v2873 = vadd.f32 %v2545, %v2872
        %v2874 = vpop.f32.mrf.mxu0
        %v2875 = vadd.f32 %v2545, %v2874
        %2876 = vmatmul.bf16.gmra.mxu0 %v2635
        %v2877 = vpop.f32.mrf.mxu0
        %v2878 = vadd.f32 %v2545, %v2877
        %v2879 = vpop.f32.mrf.mxu0
        %v2880 = vadd.f32 %v2545, %v2879
        %2881 = vmatmul.bf16.gmra.mxu0 %v2638
        %v2882 = vpop.f32.mrf.mxu0
        %v2883 = vadd.f32 %v2545, %v2882
        %v2884 = vpop.f32.mrf.mxu0
        %v2885 = vadd.f32 %v2545, %v2884
        %2886 = vmatmul.bf16.gmra.mxu0 %v2641
        %v2887 = vpop.f32.mrf.mxu0
        %v2888 = vadd.f32 %v2545, %v2887
        %v2889 = vpop.f32.mrf.mxu0
        %v2890 = vadd.f32 %v2545, %v2889
        %2891 = vmatmul.bf16.gmra.mxu0 %v2644
        %v2892 = vpop.f32.mrf.mxu0
        %v2893 = vadd.f32 %v2545, %v2892
        %v2894 = vpop.f32.mrf.mxu0
        %v2895 = vadd.f32 %v2545, %v2894
        %2896 = vmatmul.bf16.gmra.mxu0 %v2647
        %v2897 = vpop.f32.mrf.mxu0
        %v2898 = vadd.f32 %v2545, %v2897
        %v2899 = vpop.f32.mrf.mxu0
        %v2900 = vadd.f32 %v2545, %v2899
        %2901 = vmatmul.bf16.gmra.mxu0 %v2650
        %v2902 = vpop.f32.mrf.mxu0
        %v2903 = vadd.f32 %v2545, %v2902
        %v2904 = vpop.f32.mrf.mxu0
        %v2905 = vadd.f32 %v2545, %v2904
        %2906 = vmatmul.bf16.gmra.mxu0 %v2653
        %v2907 = vpop.f32.mrf.mxu0
        %v2908 = vadd.f32 %v2545, %v2907
        %v2909 = vpop.f32.mrf.mxu0
        %v2910 = vadd.f32 %v2545, %v2909
        %2911 = vmatmul.bf16.gmra.mxu0 %v2656
        %v2912 = vpop.f32.mrf.mxu0
        %v2913 = vadd.f32 %v2545, %v2912
        %v2914 = vpop.f32.mrf.mxu0
        %v2915 = vadd.f32 %v2545, %v2914
        %2916 = vmatmul.bf16.gmra.mxu0 %v2659
        %v2917 = vpop.f32.mrf.mxu0
        %v2918 = vadd.f32 %v2545, %v2917
        %v2919 = vpop.f32.mrf.mxu0
        %v2920 = vadd.f32 %v2545, %v2919
        %2921 = vmatmul.bf16.gmra.mxu0 %v2662
        %v2922 = vpop.f32.mrf.mxu0
        %v2923 = vadd.f32 %v2545, %v2922
        %v2924 = vpop.f32.mrf.mxu0
        %v2925 = vadd.f32 %v2545, %v2924
        %2926 = vmatmul.bf16.gmra.mxu0 %v2665
        %v2927 = vpop.f32.mrf.mxu0
        %v2928 = vadd.f32 %v2545, %v2927
        %v2929 = vpop.f32.mrf.mxu0
        %v2930 = vadd.f32 %v2545, %v2929
        %2931 = vmatmul.bf16.gmra.mxu0 %v2668
        %v2932 = vpop.f32.mrf.mxu0
        %v2933 = vadd.f32 %v2545, %v2932
        %v2934 = vpop.f32.mrf.mxu0
        %v2935 = vadd.f32 %v2545, %v2934
        %2936 = vmatmul.bf16.gmra.mxu0 %v2671
        %v2937 = vpop.f32.mrf.mxu0
        %v2938 = vadd.f32 %v2545, %v2937
        %v2939 = vpop.f32.mrf.mxu0
        %v2940 = vadd.f32 %v2545, %v2939
        %2941 = vmatmul.bf16.gmra.mxu0 %v2674
        %v2942 = vpop.f32.mrf.mxu0
        %v2943 = vadd.f32 %v2545, %v2942
        %v2944 = vpop.f32.mrf.mxu0
        %v2945 = vadd.f32 %v2545, %v2944
        %2946 = vmatmul.bf16.gmra.mxu0 %v2677
        %v2947 = vpop.f32.mrf.mxu0
        %v2948 = vadd.f32 %v2545, %v2947
        %v2949 = vpop.f32.mrf.mxu0
        %v2950 = vadd.f32 %v2545, %v2949
        %2951 = vmatmul.bf16.gmra.mxu0 %v2680
        %v2952 = vpop.f32.mrf.mxu0
        %v2953 = vadd.f32 %v2545, %v2952
        %v2954 = vpop.f32.mrf.mxu0
        %v2955 = vadd.f32 %v2545, %v2954
        %2956 = vmatmul.bf16.gmra.mxu0 %v2683
        %v2957 = vpop.f32.mrf.mxu0
        %v2958 = vadd.f32 %v2545, %v2957
        %v2959 = vpop.f32.mrf.mxu0
        %v2960 = vadd.f32 %v2545, %v2959
        %2961 = vmatmul.bf16.gmra.mxu0 %v2686
        %v2962 = vpop.f32.mrf.mxu0
        %v2963 = vadd.f32 %v2545, %v2962
        %v2964 = vpop.f32.mrf.mxu0
        %v2965 = vadd.f32 %v2545, %v2964
        %2966 = vmatmul.bf16.gmra.mxu0 %v2689
        %v2967 = vpop.f32.mrf.mxu0
        %v2968 = vadd.f32 %v2545, %v2967
        %v2969 = vpop.f32.mrf.mxu0
        %v2970 = vadd.f32 %v2545, %v2969
        %2971 = vmatmul.bf16.gmra.mxu0 %v2692
        %v2972 = vpop.f32.mrf.mxu0
        %v2973 = vadd.f32 %v2545, %v2972
        %v2974 = vpop.f32.mrf.mxu0
        %v2975 = vadd.f32 %v2545, %v2974
        %2976 = vmatmul.bf16.gmra.mxu0 %v2695
        %v2977 = vpop.f32.mrf.mxu0
        %v2978 = vadd.f32 %v2545, %v2977
        %v2979 = vpop.f32.mrf.mxu0
        %v2980 = vadd.f32 %v2545, %v2979
        %2981 = vmatmul.bf16.gmra.mxu0 %v2698
        %v2982 = vpop.f32.mrf.mxu0
        %v2983 = vadd.f32 %v2545, %v2982
        %v2984 = vpop.f32.mrf.mxu0
        %v2985 = vadd.f32 %v2545, %v2984
        %2986 = vmatmul.bf16.gmra.mxu0 %v2701
        %v2987 = vpop.f32.mrf.mxu0
        %v2988 = vadd.f32 %v2545, %v2987
        %v2989 = vpop.f32.mrf.mxu0
        %v2990 = vadd.f32 %v2545, %v2989
        %2991 = vmatmul.bf16.gmra.mxu0 %v2704
        %v2992 = vpop.f32.mrf.mxu0
        %v2993 = vadd.f32 %v2545, %v2992
        %v2994 = vpop.f32.mrf.mxu0
        %v2995 = vadd.f32 %v2545, %v2994
        %2996 = vmatmul.bf16.gmra.mxu0 %v2707
        %v2997 = vpop.f32.mrf.mxu0
        %v2998 = vadd.f32 %v2545, %v2997
        %v2999 = vpop.f32.mrf.mxu0
        %v3000 = vadd.f32 %v2545, %v2999
        %3001 = vmatmul.bf16.gmra.mxu0 %v2710
        %v3002 = vpop.f32.mrf.mxu0
        %v3003 = vadd.f32 %v2545, %v3002
        %v3004 = vpop.f32.mrf.mxu0
        %v3005 = vadd.f32 %v2545, %v3004
        %3006 = vmatmul.bf16.gmra.mxu0 %v2713
        %v3007 = vpop.f32.mrf.mxu0
        %v3008 = vadd.f32 %v2545, %v3007
        %v3009 = vpop.f32.mrf.mxu0
        %v3010 = vadd.f32 %v2545, %v3009
        %3011 = vmatmul.bf16.gmra.mxu0 %v2716
        %v3012 = vpop.f32.mrf.mxu0
        %v3013 = vadd.f32 %v2545, %v3012
        %v3014 = vpop.f32.mrf.mxu0
        %v3015 = vadd.f32 %v2545, %v3014
        %3016 = vmatmul.bf16.gmra.mxu0 %v2719
        %v3017 = vpop.f32.mrf.mxu0
        %v3018 = vadd.f32 %v2545, %v3017
        %v3019 = vpop.f32.mrf.mxu0
        %v3020 = vadd.f32 %v2545, %v3019
        %3021 = vmatmul.bf16.gmra.mxu0 %v2722
        %v3022 = vpop.f32.mrf.mxu0
        %v3023 = vadd.f32 %v2545, %v3022
        %v3024 = vpop.f32.mrf.mxu0
        %v3025 = vadd.f32 %v2545, %v3024
        %3026 = vmatmul.bf16.gmra.mxu0 %v2725
        %v3027 = vpop.f32.mrf.mxu0
        %v3028 = vadd.f32 %v2545, %v3027
        %v3029 = vpop.f32.mrf.mxu0
        %v3030 = vadd.f32 %v2545, %v3029
        %3031 = vmatmul.bf16.gmra.mxu0 %v2728
        %v3032 = vpop.f32.mrf.mxu0
        %v3033 = vadd.f32 %v2545, %v3032
        %v3034 = vpop.f32.mrf.mxu0
        %v3035 = vadd.f32 %v2545, %v3034
        %3036 = vmatmul.bf16.gmra.mxu0 %v2731
        %v3037 = vpop.f32.mrf.mxu0
        %v3038 = vadd.f32 %v2545, %v3037
        %v3039 = vpop.f32.mrf.mxu0
        %v3040 = vadd.f32 %v2545, %v3039
        %3041 = vmatmul.bf16.gmra.mxu0 %v2734
        %v3042 = vpop.f32.mrf.mxu0
        %v3043 = vadd.f32 %v2545, %v3042
        %v3044 = vpop.f32.mrf.mxu0
        %v3045 = vadd.f32 %v2545, %v3044
        %3046 = vmatmul.bf16.gmra.mxu0 %v2737
        %v3047 = vpop.f32.mrf.mxu0
        %v3048 = vadd.f32 %v2545, %v3047
        %v3049 = vpop.f32.mrf.mxu0
        %v3050 = vadd.f32 %v2545, %v3049
        %3051 = vmatmul.bf16.gmra.mxu0 %v2740
        %v3052 = vpop.f32.mrf.mxu0
        %v3053 = vadd.f32 %v2545, %v3052
        %v3054 = vpop.f32.mrf.mxu0
        %v3055 = vadd.f32 %v2545, %v3054
        %3056 = vmatmul.bf16.gmra.mxu0 %v2743
        %v3057 = vpop.f32.mrf.mxu0
        %v3058 = vadd.f32 %v2545, %v3057
        %v3059 = vpop.f32.mrf.mxu0
        %v3060 = vadd.f32 %v2545, %v3059
        %3061 = vmatmul.bf16.gmra.mxu0 %v2746
        %v3062 = vpop.f32.mrf.mxu0
        %v3063 = vadd.f32 %v2545, %v3062
        %v3064 = vpop.f32.mrf.mxu0
        %v3065 = vadd.f32 %v2545, %v3064
        %3066 = vmatmul.bf16.gmra.mxu0 %v2749
        %v3067 = vpop.f32.mrf.mxu0
        %v3068 = vadd.f32 %v2545, %v3067
        %v3069 = vpop.f32.mrf.mxu0
        %v3070 = vadd.f32 %v2545, %v3069
        %3071 = vmatmul.bf16.gmra.mxu0 %v2752
        %v3072 = vpop.f32.mrf.mxu0
        %v3073 = vadd.f32 %v2545, %v3072
        %v3074 = vpop.f32.mrf.mxu0
        %v3075 = vadd.f32 %v2545, %v3074
        %3076 = vmatmul.bf16.gmra.mxu0 %v2755
        %v3077 = vpop.f32.mrf.mxu0
        %v3078 = vadd.f32 %v2545, %v3077
        %v3079 = vpop.f32.mrf.mxu0
        %v3080 = vadd.f32 %v2545, %v3079
        %3081 = vmatmul.bf16.gmra.mxu0 %v2758
        %v3082 = vpop.f32.mrf.mxu0
        %v3083 = vadd.f32 %v2545, %v3082
        %v3084 = vpop.f32.mrf.mxu0
        %v3085 = vadd.f32 %v2545, %v3084
        %3086 = vmatmul.bf16.gmra.mxu0 %v2761
        %v3087 = vpop.f32.mrf.mxu0
        %v3088 = vadd.f32 %v2545, %v3087
        %v3089 = vpop.f32.mrf.mxu0
        %v3090 = vadd.f32 %v2545, %v3089
        %3091 = vdwg.mxu0
        %3092 = vxpose.xlu0.b32.start [1/16] %v2773, 128
        %3093 = vxpose.xlu0.b32.cont [2/16] %v2775, 128
        %3094 = vxpose.xlu0.b32.cont [3/16] %v2778, 128
        %3095 = vxpose.xlu0.b32.cont [4/16] %v2780, 128
        %3096 = vxpose.xlu0.b32.cont [5/16] %v2783, 128
        %3097 = vxpose.xlu0.b32.cont [6/16] %v2785, 128
        %3098 = vxpose.xlu0.b32.cont [7/16] %v2788, 128
        %3099 = vxpose.xlu0.b32.cont [8/16] %v2790, 128
        %3100 = vxpose.xlu0.b32.cont [9/16] %v2793, 128
        %3101 = vxpose.xlu0.b32.cont [10/16] %v2795, 128
        %3102 = vxpose.xlu0.b32.cont [11/16] %v2798, 128
        %3103 = vxpose.xlu0.b32.cont [12/16] %v2800, 128
        %3104 = vxpose.xlu0.b32.cont [13/16] %v2803, 128
        %3105 = vxpose.xlu0.b32.cont [14/16] %v2805, 128
        %3106 = vxpose.xlu0.b32.cont [15/16] %v2808, 128
        %3107 = vxpose.xlu0.b32.end [16/16] %v2810, 128
        %v3108 = vpop.trf.xlu0
        %v3109 = vpop.trf.xlu0
        %v3110 = vpop.trf.xlu0
        %v3111 = vpop.trf.xlu0
        %v3112 = vpop.trf.xlu0
        %v3113 = vpop.trf.xlu0
        %v3114 = vpop.trf.xlu0
        %v3115 = vpop.trf.xlu0
        %v3116 = vpop.trf.xlu0
        %v3117 = vpop.trf.xlu0
        %v3118 = vpop.trf.xlu0
        %v3119 = vpop.trf.xlu0
        %v3120 = vpop.trf.xlu0
        %v3121 = vpop.trf.xlu0
        %v3122 = vpop.trf.xlu0
        %v3123 = vpop.trf.xlu0
        %3124 = vxpose.xlu0.b32.start [1/16] %v2813, 128
        %3125 = vxpose.xlu0.b32.cont [2/16] %v2815, 128
        %3126 = vxpose.xlu0.b32.cont [3/16] %v2818, 128
        %3127 = vxpose.xlu0.b32.cont [4/16] %v2820, 128
        %3128 = vxpose.xlu0.b32.cont [5/16] %v2823, 128
        %3129 = vxpose.xlu0.b32.cont [6/16] %v2825, 128
        %3130 = vxpose.xlu0.b32.cont [7/16] %v2828, 128
        %3131 = vxpose.xlu0.b32.cont [8/16] %v2830, 128
        %3132 = vxpose.xlu0.b32.cont [9/16] %v2833, 128
        %3133 = vxpose.xlu0.b32.cont [10/16] %v2835, 128
        %3134 = vxpose.xlu0.b32.cont [11/16] %v2838, 128
        %3135 = vxpose.xlu0.b32.cont [12/16] %v2840, 128
        %3136 = vxpose.xlu0.b32.cont [13/16] %v2843, 128
        %3137 = vxpose.xlu0.b32.cont [14/16] %v2845, 128
        %3138 = vxpose.xlu0.b32.cont [15/16] %v2848, 128
        %3139 = vxpose.xlu0.b32.end [16/16] %v2850, 128
        %v3140 = vpop.trf.xlu0
        %v3141 = vpop.trf.xlu0
        %v3142 = vpop.trf.xlu0
        %v3143 = vpop.trf.xlu0
        %v3144 = vpop.trf.xlu0
        %v3145 = vpop.trf.xlu0
        %v3146 = vpop.trf.xlu0
        %v3147 = vpop.trf.xlu0
        %v3148 = vpop.trf.xlu0
        %v3149 = vpop.trf.xlu0
        %v3150 = vpop.trf.xlu0
        %v3151 = vpop.trf.xlu0
        %v3152 = vpop.trf.xlu0
        %v3153 = vpop.trf.xlu0
        %v3154 = vpop.trf.xlu0
        %v3155 = vpop.trf.xlu0
        %3156 = vxpose.xlu0.b32.start [1/16] %v2853, 128
        %3157 = vxpose.xlu0.b32.cont [2/16] %v2855, 128
        %3158 = vxpose.xlu0.b32.cont [3/16] %v2858, 128
        %3159 = vxpose.xlu0.b32.cont [4/16] %v2860, 128
        %3160 = vxpose.xlu0.b32.cont [5/16] %v2863, 128
        %3161 = vxpose.xlu0.b32.cont [6/16] %v2865, 128
        %3162 = vxpose.xlu0.b32.cont [7/16] %v2868, 128
        %3163 = vxpose.xlu0.b32.cont [8/16] %v2870, 128
        %3164 = vxpose.xlu0.b32.cont [9/16] %v2873, 128
        %3165 = vxpose.xlu0.b32.cont [10/16] %v2875, 128
        %3166 = vxpose.xlu0.b32.cont [11/16] %v2878, 128
        %3167 = vxpose.xlu0.b32.cont [12/16] %v2880, 128
        %3168 = vxpose.xlu0.b32.cont [13/16] %v2883, 128
        %3169 = vxpose.xlu0.b32.cont [14/16] %v2885, 128
        %3170 = vxpose.xlu0.b32.cont [15/16] %v2888, 128
        %3171 = vxpose.xlu0.b32.end [16/16] %v2890, 128
        %v3172 = vpop.trf.xlu0
        %v3173 = vpop.trf.xlu0
        %v3174 = vpop.trf.xlu0
        %v3175 = vpop.trf.xlu0
        %v3176 = vpop.trf.xlu0
        %v3177 = vpop.trf.xlu0
        %v3178 = vpop.trf.xlu0
        %v3179 = vpop.trf.xlu0
        %v3180 = vpop.trf.xlu0
        %v3181 = vpop.trf.xlu0
        %v3182 = vpop.trf.xlu0
        %v3183 = vpop.trf.xlu0
        %v3184 = vpop.trf.xlu0
        %v3185 = vpop.trf.xlu0
        %v3186 = vpop.trf.xlu0
        %v3187 = vpop.trf.xlu0
        %3188 = vxpose.xlu0.b32.start [1/16] %v2893, 128
        %3189 = vxpose.xlu0.b32.cont [2/16] %v2895, 128
        %3190 = vxpose.xlu0.b32.cont [3/16] %v2898, 128
        %3191 = vxpose.xlu0.b32.cont [4/16] %v2900, 128
        %3192 = vxpose.xlu0.b32.cont [5/16] %v2903, 128
        %3193 = vxpose.xlu0.b32.cont [6/16] %v2905, 128
        %3194 = vxpose.xlu0.b32.cont [7/16] %v2908, 128
        %3195 = vxpose.xlu0.b32.cont [8/16] %v2910, 128
        %3196 = vxpose.xlu0.b32.cont [9/16] %v2913, 128
        %3197 = vxpose.xlu0.b32.cont [10/16] %v2915, 128
        %3198 = vxpose.xlu0.b32.cont [11/16] %v2918, 128
        %3199 = vxpose.xlu0.b32.cont [12/16] %v2920, 128
        %3200 = vxpose.xlu0.b32.cont [13/16] %v2923, 128
        %3201 = vxpose.xlu0.b32.cont [14/16] %v2925, 128
        %3202 = vxpose.xlu0.b32.cont [15/16] %v2928, 128
        %3203 = vxpose.xlu0.b32.end [16/16] %v2930, 128
        %v3204 = vpop.trf.xlu0
        %v3205 = vpop.trf.xlu0
        %v3206 = vpop.trf.xlu0
        %v3207 = vpop.trf.xlu0
        %v3208 = vpop.trf.xlu0
        %v3209 = vpop.trf.xlu0
        %v3210 = vpop.trf.xlu0
        %v3211 = vpop.trf.xlu0
        %v3212 = vpop.trf.xlu0
        %v3213 = vpop.trf.xlu0
        %v3214 = vpop.trf.xlu0
        %v3215 = vpop.trf.xlu0
        %v3216 = vpop.trf.xlu0
        %v3217 = vpop.trf.xlu0
        %v3218 = vpop.trf.xlu0
        %v3219 = vpop.trf.xlu0
        %3220 = vxpose.xlu0.b32.start [1/16] %v2933, 128
        %3221 = vxpose.xlu0.b32.cont [2/16] %v2935, 128
        %3222 = vxpose.xlu0.b32.cont [3/16] %v2938, 128
        %3223 = vxpose.xlu0.b32.cont [4/16] %v2940, 128
        %3224 = vxpose.xlu0.b32.cont [5/16] %v2943, 128
        %3225 = vxpose.xlu0.b32.cont [6/16] %v2945, 128
        %3226 = vxpose.xlu0.b32.cont [7/16] %v2948, 128
        %3227 = vxpose.xlu0.b32.cont [8/16] %v2950, 128
        %3228 = vxpose.xlu0.b32.cont [9/16] %v2953, 128
        %3229 = vxpose.xlu0.b32.cont [10/16] %v2955, 128
        %3230 = vxpose.xlu0.b32.cont [11/16] %v2958, 128
        %3231 = vxpose.xlu0.b32.cont [12/16] %v2960, 128
        %3232 = vxpose.xlu0.b32.cont [13/16] %v2963, 128
        %3233 = vxpose.xlu0.b32.cont [14/16] %v2965, 128
        %3234 = vxpose.xlu0.b32.cont [15/16] %v2968, 128
        %3235 = vxpose.xlu0.b32.end [16/16] %v2970, 128
        %v3236 = vpop.trf.xlu0
        %v3237 = vpop.trf.xlu0
        %v3238 = vpop.trf.xlu0
        %v3239 = vpop.trf.xlu0
        %v3240 = vpop.trf.xlu0
        %v3241 = vpop.trf.xlu0
        %v3242 = vpop.trf.xlu0
        %v3243 = vpop.trf.xlu0
        %v3244 = vpop.trf.xlu0
        %v3245 = vpop.trf.xlu0
        %v3246 = vpop.trf.xlu0
        %v3247 = vpop.trf.xlu0
        %v3248 = vpop.trf.xlu0
        %v3249 = vpop.trf.xlu0
        %v3250 = vpop.trf.xlu0
        %v3251 = vpop.trf.xlu0
        %3252 = vxpose.xlu0.b32.start [1/16] %v2973, 128
        %3253 = vxpose.xlu0.b32.cont [2/16] %v2975, 128
        %3254 = vxpose.xlu0.b32.cont [3/16] %v2978, 128
        %3255 = vxpose.xlu0.b32.cont [4/16] %v2980, 128
        %3256 = vxpose.xlu0.b32.cont [5/16] %v2983, 128
        %3257 = vxpose.xlu0.b32.cont [6/16] %v2985, 128
        %3258 = vxpose.xlu0.b32.cont [7/16] %v2988, 128
        %3259 = vxpose.xlu0.b32.cont [8/16] %v2990, 128
        %3260 = vxpose.xlu0.b32.cont [9/16] %v2993, 128
        %3261 = vxpose.xlu0.b32.cont [10/16] %v2995, 128
        %3262 = vxpose.xlu0.b32.cont [11/16] %v2998, 128
        %3263 = vxpose.xlu0.b32.cont [12/16] %v3000, 128
        %3264 = vxpose.xlu0.b32.cont [13/16] %v3003, 128
        %3265 = vxpose.xlu0.b32.cont [14/16] %v3005, 128
        %3266 = vxpose.xlu0.b32.cont [15/16] %v3008, 128
        %3267 = vxpose.xlu0.b32.end [16/16] %v3010, 128
        %v3268 = vpop.trf.xlu0
        %v3269 = vpop.trf.xlu0
        %v3270 = vpop.trf.xlu0
        %v3271 = vpop.trf.xlu0
        %v3272 = vpop.trf.xlu0
        %v3273 = vpop.trf.xlu0
        %v3274 = vpop.trf.xlu0
        %v3275 = vpop.trf.xlu0
        %v3276 = vpop.trf.xlu0
        %v3277 = vpop.trf.xlu0
        %v3278 = vpop.trf.xlu0
        %v3279 = vpop.trf.xlu0
        %v3280 = vpop.trf.xlu0
        %v3281 = vpop.trf.xlu0
        %v3282 = vpop.trf.xlu0
        %v3283 = vpop.trf.xlu0
        %3284 = vxpose.xlu0.b32.start [1/16] %v3013, 128
        %3285 = vxpose.xlu0.b32.cont [2/16] %v3015, 128
        %3286 = vxpose.xlu0.b32.cont [3/16] %v3018, 128
        %3287 = vxpose.xlu0.b32.cont [4/16] %v3020, 128
        %3288 = vxpose.xlu0.b32.cont [5/16] %v3023, 128
        %3289 = vxpose.xlu0.b32.cont [6/16] %v3025, 128
        %3290 = vxpose.xlu0.b32.cont [7/16] %v3028, 128
        %3291 = vxpose.xlu0.b32.cont [8/16] %v3030, 128
        %3292 = vxpose.xlu0.b32.cont [9/16] %v3033, 128
        %3293 = vxpose.xlu0.b32.cont [10/16] %v3035, 128
        %3294 = vxpose.xlu0.b32.cont [11/16] %v3038, 128
        %3295 = vxpose.xlu0.b32.cont [12/16] %v3040, 128
        %3296 = vxpose.xlu0.b32.cont [13/16] %v3043, 128
        %3297 = vxpose.xlu0.b32.cont [14/16] %v3045, 128
        %3298 = vxpose.xlu0.b32.cont [15/16] %v3048, 128
        %3299 = vxpose.xlu0.b32.end [16/16] %v3050, 128
        %v3300 = vpop.trf.xlu0
        %v3301 = vpop.trf.xlu0
        %v3302 = vpop.trf.xlu0
        %v3303 = vpop.trf.xlu0
        %v3304 = vpop.trf.xlu0
        %v3305 = vpop.trf.xlu0
        %v3306 = vpop.trf.xlu0
        %v3307 = vpop.trf.xlu0
        %v3308 = vpop.trf.xlu0
        %v3309 = vpop.trf.xlu0
        %v3310 = vpop.trf.xlu0
        %v3311 = vpop.trf.xlu0
        %v3312 = vpop.trf.xlu0
        %v3313 = vpop.trf.xlu0
        %v3314 = vpop.trf.xlu0
        %v3315 = vpop.trf.xlu0
        %3316 = vxpose.xlu0.b32.start [1/16] %v3053, 128
        %3317 = vxpose.xlu0.b32.cont [2/16] %v3055, 128
        %3318 = vxpose.xlu0.b32.cont [3/16] %v3058, 128
        %3319 = vxpose.xlu0.b32.cont [4/16] %v3060, 128
        %3320 = vxpose.xlu0.b32.cont [5/16] %v3063, 128
        %3321 = vxpose.xlu0.b32.cont [6/16] %v3065, 128
        %3322 = vxpose.xlu0.b32.cont [7/16] %v3068, 128
        %3323 = vxpose.xlu0.b32.cont [8/16] %v3070, 128
        %3324 = vxpose.xlu0.b32.cont [9/16] %v3073, 128
        %3325 = vxpose.xlu0.b32.cont [10/16] %v3075, 128
        %3326 = vxpose.xlu0.b32.cont [11/16] %v3078, 128
        %3327 = vxpose.xlu0.b32.cont [12/16] %v3080, 128
        %3328 = vxpose.xlu0.b32.cont [13/16] %v3083, 128
        %3329 = vxpose.xlu0.b32.cont [14/16] %v3085, 128
        %3330 = vxpose.xlu0.b32.cont [15/16] %v3088, 128
        %3331 = vxpose.xlu0.b32.end [16/16] %v3090, 128
        %v3332 = vpop.trf.xlu0
        %v3333 = vpop.trf.xlu0
        %v3334 = vpop.trf.xlu0
        %v3335 = vpop.trf.xlu0
        %v3336 = vpop.trf.xlu0
        %v3337 = vpop.trf.xlu0
        %v3338 = vpop.trf.xlu0
        %v3339 = vpop.trf.xlu0
        %v3340 = vpop.trf.xlu0
        %v3341 = vpop.trf.xlu0
        %v3342 = vpop.trf.xlu0
        %v3343 = vpop.trf.xlu0
        %v3344 = vpop.trf.xlu0
        %v3345 = vpop.trf.xlu0
        %v3346 = vpop.trf.xlu0
        %v3347 = vpop.trf.xlu0
        %v3348 = vsub.f32 0.0, %v3108
        %v3349 = vsub.f32 0.0, %v3140
        %v3350 = vsub.f32 0.0, %v3172
        %v3351 = vsub.f32 0.0, %v3204
        %v3352 = vsub.f32 0.0, %v3236
        %v3353 = vsub.f32 0.0, %v3268
        %v3354 = vsub.f32 0.0, %v3300
        %v3355 = vsub.f32 0.0, %v3332
        %v3356 = vmul.f32 %v3348, 1.442695
        %v3357 = vpow.pop %v3356
        %v3358 = vmul.f32 %v3349, 1.442695
        %v3359 = vpow.pop %v3358
        %v3360 = vmul.f32 %v3350, 1.442695
        %v3361 = vpow.pop %v3360
        %v3362 = vmul.f32 %v3351, 1.442695
        %v3363 = vpow.pop %v3362
        %v3364 = vmul.f32 %v3352, 1.442695
        %v3365 = vpow.pop %v3364
        %v3366 = vmul.f32 %v3353, 1.442695
        %v3367 = vpow.pop %v3366
        %v3368 = vmul.f32 %v3354, 1.442695
        %v3369 = vpow.pop %v3368
        %v3370 = vmul.f32 %v3355, 1.442695
        %v3371 = vpow.pop %v3370
        %v3372 = vadd.f32 %v3357, 1.0
        %v3373 = vadd.f32 %v3359, 1.0
        %v3374 = vadd.f32 %v3361, 1.0
        %v3375 = vadd.f32 %v3363, 1.0
        %v3376 = vadd.f32 %v3365, 1.0
        %v3377 = vadd.f32 %v3367, 1.0
        %v3378 = vadd.f32 %v3369, 1.0
        %v3379 = vadd.f32 %v3371, 1.0
        %v3380 = vrcp.pop %v3372
        %v3381 = vmul.f32 %v3372, %v3380
        %v3382 = vsub.f32 1.0, %v3381
        %v3383 = vmul.f32 %v3380, %v3382
        %v3384 = vadd.f32 %v3380, %v3383
        %vm3385 = vweird.f32 %v3372
        %vm3386 = vweird.f32 %v3380
        %vm3387 = vmor %vm3385, %vm3386
        %v3388 = vsel %vm3387, %v3380, %v3384
        %v3389 = vand.u32 2147483647, %v3372
        %vm3390 = vcmp.eq.f32.partialorder %v3389, 8.507059e+37
        %v3391 = vand.u32 %v3372, 2147483648
        %v3392 = vor.u32 1.1754944e-38, %v3391
        %v3393 = vsel %vm3390, %v3392, %v3388
        %v3394 = vmul.f32 1.0, %v3393
        %v3395 = vrcp.pop %v3373
        %v3396 = vmul.f32 %v3373, %v3395
        %v3397 = vsub.f32 1.0, %v3396
        %v3398 = vmul.f32 %v3395, %v3397
        %v3399 = vadd.f32 %v3395, %v3398
        %vm3400 = vweird.f32 %v3373
        %vm3401 = vweird.f32 %v3395
        %vm3402 = vmor %vm3400, %vm3401
        %v3403 = vsel %vm3402, %v3395, %v3399
        %v3404 = vand.u32 2147483647, %v3373
        %vm3405 = vcmp.eq.f32.partialorder %v3404, 8.507059e+37
        %v3406 = vand.u32 %v3373, 2147483648
        %v3407 = vor.u32 1.1754944e-38, %v3406
        %v3408 = vsel %vm3405, %v3407, %v3403
        %v3409 = vmul.f32 1.0, %v3408
        %v3410 = vrcp.pop %v3374
        %v3411 = vmul.f32 %v3374, %v3410
        %v3412 = vsub.f32 1.0, %v3411
        %v3413 = vmul.f32 %v3410, %v3412
        %v3414 = vadd.f32 %v3410, %v3413
        %vm3415 = vweird.f32 %v3374
        %vm3416 = vweird.f32 %v3410
        %vm3417 = vmor %vm3415, %vm3416
        %v3418 = vsel %vm3417, %v3410, %v3414
        %v3419 = vand.u32 2147483647, %v3374
        %vm3420 = vcmp.eq.f32.partialorder %v3419, 8.507059e+37
        %v3421 = vand.u32 %v3374, 2147483648
        %v3422 = vor.u32 1.1754944e-38, %v3421
        %v3423 = vsel %vm3420, %v3422, %v3418
        %v3424 = vmul.f32 1.0, %v3423
        %v3425 = vrcp.pop %v3375
        %v3426 = vmul.f32 %v3375, %v3425
        %v3427 = vsub.f32 1.0, %v3426
        %v3428 = vmul.f32 %v3425, %v3427
        %v3429 = vadd.f32 %v3425, %v3428
        %vm3430 = vweird.f32 %v3375
        %vm3431 = vweird.f32 %v3425
        %vm3432 = vmor %vm3430, %vm3431
        %v3433 = vsel %vm3432, %v3425, %v3429
        %v3434 = vand.u32 2147483647, %v3375
        %vm3435 = vcmp.eq.f32.partialorder %v3434, 8.507059e+37
        %v3436 = vand.u32 %v3375, 2147483648
        %v3437 = vor.u32 1.1754944e-38, %v3436
        %v3438 = vsel %vm3435, %v3437, %v3433
        %v3439 = vmul.f32 1.0, %v3438
        %v3440 = vrcp.pop %v3376
        %v3441 = vmul.f32 %v3376, %v3440
        %v3442 = vsub.f32 1.0, %v3441
        %v3443 = vmul.f32 %v3440, %v3442
        %v3444 = vadd.f32 %v3440, %v3443
        %vm3445 = vweird.f32 %v3376
        %vm3446 = vweird.f32 %v3440
        %vm3447 = vmor %vm3445, %vm3446
        %v3448 = vsel %vm3447, %v3440, %v3444
        %v3449 = vand.u32 2147483647, %v3376
        %vm3450 = vcmp.eq.f32.partialorder %v3449, 8.507059e+37
        %v3451 = vand.u32 %v3376, 2147483648
        %v3452 = vor.u32 1.1754944e-38, %v3451
        %v3453 = vsel %vm3450, %v3452, %v3448
        %v3454 = vmul.f32 1.0, %v3453
        %v3455 = vrcp.pop %v3377
        %v3456 = vmul.f32 %v3377, %v3455
        %v3457 = vsub.f32 1.0, %v3456
        %v3458 = vmul.f32 %v3455, %v3457
        %v3459 = vadd.f32 %v3455, %v3458
        %vm3460 = vweird.f32 %v3377
        %vm3461 = vweird.f32 %v3455
        %vm3462 = vmor %vm3460, %vm3461
        %v3463 = vsel %vm3462, %v3455, %v3459
        %v3464 = vand.u32 2147483647, %v3377
        %vm3465 = vcmp.eq.f32.partialorder %v3464, 8.507059e+37
        %v3466 = vand.u32 %v3377, 2147483648
        %v3467 = vor.u32 1.1754944e-38, %v3466
        %v3468 = vsel %vm3465, %v3467, %v3463
        %v3469 = vmul.f32 1.0, %v3468
        %v3470 = vrcp.pop %v3378
        %v3471 = vmul.f32 %v3378, %v3470
        %v3472 = vsub.f32 1.0, %v3471
        %v3473 = vmul.f32 %v3470, %v3472
        %v3474 = vadd.f32 %v3470, %v3473
        %vm3475 = vweird.f32 %v3378
        %vm3476 = vweird.f32 %v3470
        %vm3477 = vmor %vm3475, %vm3476
        %v3478 = vsel %vm3477, %v3470, %v3474
        %v3479 = vand.u32 2147483647, %v3378
        %vm3480 = vcmp.eq.f32.partialorder %v3479, 8.507059e+37
        %v3481 = vand.u32 %v3378, 2147483648
        %v3482 = vor.u32 1.1754944e-38, %v3481
        %v3483 = vsel %vm3480, %v3482, %v3478
        %v3484 = vmul.f32 1.0, %v3483
        %v3485 = vrcp.pop %v3379
        %v3486 = vmul.f32 %v3379, %v3485
        %v3487 = vsub.f32 1.0, %v3486
        %v3488 = vmul.f32 %v3485, %v3487
        %v3489 = vadd.f32 %v3485, %v3488
        %vm3490 = vweird.f32 %v3379
        %vm3491 = vweird.f32 %v3485
        %vm3492 = vmor %vm3490, %vm3491
        %v3493 = vsel %vm3492, %v3485, %v3489
        %v3494 = vand.u32 2147483647, %v3379
        %vm3495 = vcmp.eq.f32.partialorder %v3494, 8.507059e+37
        %v3496 = vand.u32 %v3379, 2147483648
        %v3497 = vor.u32 1.1754944e-38, %v3496
        %v3498 = vsel %vm3495, %v3497, %v3493
        %v3499 = vmul.f32 1.0, %v3498
        %v3508 = vrot.slane %v3409, 7
        %v3509 = vrot.slane %v3424, 6
        %v3510 = vrot.slane %v3439, 5
        %v3511 = vrot.slane %v3454, 4
        %v3512 = vrot.slane %v3469, 3
        %v3513 = vrot.slane %v3484, 2
        %v3514 = vrot.slane %v3499, 1
        %vm3515 = vcmask 1040384
        %v3516 = vsel %vm3515, %v3394, %v3508
        %vm3517 = vcmask 1042434
        %v3518 = vsel %vm3517, %v3509, %v3510
        %vm3519 = vcmask 1041408
        %v3520 = vsel %vm3519, %v3516, %v3518
        %vm3521 = vcmask 1044484
        %v3522 = vsel %vm3521, %v3511, %v3512
        %vm3523 = vcmask 1046534
        %v3524 = vsel %vm3523, %v3513, %v3514
        %vm3525 = vcmask 1045508
        %v3526 = vsel %vm3525, %v3522, %v3524
        %vm3527 = vcmask 1043456
        %v3528 = vsel %vm3527, %v3520, %v3526
        %3530 = vst [vmem:[%s317] sm:$0xff] %v3528
        %s3531 = sand.u32 %s210, 1
        %s3532 = scalar_lea.sflag [#allocation4], %s3531
        %s3533 = sand.u32 %s210, 1
        %s3534 = smul.addr %s3533, 8
        %s3535 = scalar_lea.vmem [#allocation3], %s3534
        // Predicated region
        $region53: #{_lambda_.1} parent=51 // pred_check
          %p3536 = pneg %p220
        $region54: #{_lambda_.1} parent=51 // pred_check_branch
          %3538 = sbr.rel (%p3536) target = $region56
        $region55: #{_lambda_.1} parent=51 // pred_region
          %s3539 = smul.u32 8, %s24
          %3541 = vsyncadd %s3532, 0
          %s3542 = scalar_lea.hbm %s8, %s3539
          %s3544 = sshll.u32 %s3535, 4
          %s3545 = int_to_ptr.vmem [resolvable:$true] %s3544
          %s3546 = sshll.u32 %s3542, 4
          %s3547 = int_to_ptr.hbm [resolvable:$true] %s3546
          %3549 = dma.vmem_to_hbm [thread:$0]  %s3545, 128, %s3547, %s3532
        $region56: #{_lambda_.1} parent=51 // pred_fallthru
          _
      $region52: #{_lambda_.1} parent=5 // pred_fallthru
        _
      %p3550 = scmp.le.s32.totalorder 2, %s19
      // Predicated region
      $region57: #{_lambda_.1} parent=5 // pred_check
        %p3551 = pneg %p3550
      $region58: #{_lambda_.1} parent=5 // pred_check_branch
        %3553 = sbr.rel (%p3551) target = $region60
      $region59: #{_lambda_.1} parent=5 // pred_region
        %s3554 = ssub.s32 %s19, 2
        // Predicated region
        $region61: #{_lambda_.1} parent=59 // pred_check
          %p3555 = pneg %p226
        $region62: #{_lambda_.1} parent=59 // pred_check_branch
          %3557 = sbr.rel (%p3555) target = $region64
        $region63: #{_lambda_.1} parent=59 // pred_region
          %s3558 = sand.u32 %s211, 1
          %s3559 = scalar_lea.sflag [#allocation4], %s3558
          %s3560 = sand.u32 %s211, 1
          %s3561 = smul.addr %s3560, 8
          %s3562 = scalar_lea.vmem [#allocation3], %s3561
          %3564 = dma.done %s3559, 128
        $region64: #{_lambda_.1} parent=59 // pred_fallthru
          _
      $region60: #{_lambda_.1} parent=5 // pred_fallthru
        _
    $region6: #{_lambda_.1} parent=1 // loop_footer
      %s23 = sadd.s32 1, %s19
    $region7: #{_lambda_.1} parent=1 // loop_footer_branch
      %18 = sbr.rel target = $region3
    $region8: #{_lambda_.1} parent=1 // loop_exit
      _
    %3565 = vsyncpa [#allocation4], 1
    %s3566 = scalar_lea.sflag [#allocation4], 1
    %3567 = vsyncpa %s3566, 1

</llo_original>
